<compile_context>
chip_gen: v5e
topology: v5e:2x2
jax: 0.10.0
libtpu: 0.0.40
codegen_flags: <defaults>
</compile_context>

<pallas_src>
import math
import functools

import jax
import jax.numpy as jnp
from jax.experimental import pallas as pl
from jax.experimental.pallas import tpu as pltpu

EPS = 1e-5
LANE = 128                      # lane padding for contraction / stage-A columns
VMEM_LIMIT = 32 * 1024 * 1024   # explicit scoped-VMEM budget (safe on v5e/v6e/v7x)


# ----------------------------------------------------------------------------
# Pallas kernel: the whole ResCBA forward for one image, entirely in VMEM
# ----------------------------------------------------------------------------
def _rescba_kernel(x_ref, wa_ref, ba_ref, ma_ref, w2_ref, b2_ref,
                   wc_ref, wd_ref, o_ref, pad_ref, *, k, inc, outc):
    """ResCBA forward for one (H, W) image.

    x_ref   : (H, W, inc)          f32   input image (batch dim squeezed)
    wa_ref  : (KP, CAP)            bf16  stage A: [layer1 | layer2 | out_b.conv2 | PW hidden]
    ba_ref  : (1, CAP)             f32   stage-A folded bias
    ma_ref  : (1, CAP)             f32   stage-A per-column ReLU mask
    w2_ref  : (CAP, inc)           bf16  PW.conv2 second 1x1 (zero outside hidden cols)
    b2_ref  : (1, inc)             f32   its bias
    wc_ref  : (KP, inc)            bf16  PW.conv3 (3x3)
    wd_ref  : (KP, outc)           bf16  conv1 composed with out[:outc] (3x3)
    o_ref   : (H, W, outc)         f32   module output
    pad_ref : (H+k-1, W+k-1, inc)  f32   reused zero-padded activation scratch
    """
    H, W, _ = x_ref.shape
    p = k // 2
    kk_c = k * k * inc

    def conv3x3(w_ref):
        """'same' 3x3 conv of the activation currently held in pad_ref.

        Builds a lane-dense (H*W, KP) im2col tile (taps stacked along lanes,
        K zero-padded to KP), casts it to bf16 ONCE and issues ONE MXU dot.
        """
        kp = w_ref.shape[0]
        taps = [pad_ref[di:di + H, dj:dj + W, :]
                for di in range(k) for dj in range(k)]
        if kp > kk_c:
            taps.append(jnp.zeros((H, W, kp - kk_c), jnp.float32))
        pat = jnp.concatenate(taps, axis=-1)                 # (H, W, KP)
        pat = pat.astype(jnp.bfloat16).reshape(H * W, kp)    # one cast per conv
        return jnp.dot(pat, w_ref[...], preferred_element_type=jnp.float32)

    def set_interior(act_3d):
        pad_ref[p:p + H, p:p + W, :] = act_3d

    # ---- stage A: x -> [layer1 | layer2 | out_b.conv2 | PW.conv2 hidden] ----
    pad_ref[...] = jnp.zeros_like(pad_ref)
    set_interior(x_ref[...])
    a = conv3x3(wa_ref) + ba_ref[...]
    a = jnp.where(ma_ref[...] > 0.5, jnp.maximum(a, 0.0), a)   # (H*W, CAP) f32

    # sibling branches that feed the final sum (stay in registers / VMEM)
    l12r = a[:, :outc] + a[:, outc:2 * outc] + a[:, 2 * outc:3 * outc]

    # ---- stage B: PW.conv2 second 1x1 (lane-dense K = CAP = 128) ------------
    x2b = jnp.dot(a.astype(jnp.bfloat16), w2_ref[...],
                  preferred_element_type=jnp.float32) + b2_ref[...]   # (H*W, inc)

    # ---- stage C: PW.conv3 (3x3) + residual x (residual never leaves VMEM) --
    set_interior(x2b.reshape(H, W, inc))
    pw_out = conv3x3(wc_ref).reshape(H, W, inc) + x_ref[...]

    # ---- stage D: (out[:outc] ∘ conv1)(pw_out) + sibling sum -> output ------
    set_interior(pw_out)
    routd = conv3x3(wd_ref)                                     # (H*W, outc)
    o_ref[...] = (l12r + routd).reshape(H, W, outc)


# ----------------------------------------------------------------------------
# pallas_call wrapper
# ----------------------------------------------------------------------------
def rescba_forward(fp, x_nchw):
    inc, outc, k = fp['inc'], fp['outc'], fp['k']
    KP, CAP = fp['KP'], fp['CAP']
    x = jnp.transpose(x_nchw, (0, 2, 3, 1)).astype(jnp.float32)   # NHWC
    N, H, W, _ = x.shape
    Hp, Wp = H + k - 1, W + k - 1

    kern = functools.partial(_rescba_kernel, k=k, inc=inc, outc=outc)
    out = pl.pallas_call(
        kern,
        out_shape=jax.ShapeDtypeStruct((N, H, W, outc), jnp.float32),
        grid_spec=pltpu.PrefetchScalarGridSpec(
            num_scalar_prefetch=0,
            grid=(N,),
            in_specs=[
                pl.BlockSpec((None, H, W, inc), lambda n: (n, 0, 0, 0)),
                pl.BlockSpec((KP, CAP), lambda n: (0, 0)),
                pl.BlockSpec((1, CAP), lambda n: (0, 0)),
                pl.BlockSpec((1, CAP), lambda n: (0, 0)),
                pl.BlockSpec((CAP, inc), lambda n: (0, 0)),
                pl.BlockSpec((1, inc), lambda n: (0, 0)),
                pl.BlockSpec((KP, inc), lambda n: (0, 0)),
                pl.BlockSpec((KP, outc), lambda n: (0, 0)),
            ],
            out_specs=pl.BlockSpec((None, H, W, outc), lambda n: (n, 0, 0, 0)),
            scratch_shapes=[pltpu.VMEM((Hp, Wp, inc), jnp.float32)]),
        compiler_params=pltpu.CompilerParams(
            dimension_semantics=("parallel",),
            vmem_limit_bytes=VMEM_LIMIT),
    )(x, fp['wA'], fp['bA'], fp['mA'], fp['w2'], fp['b2'], fp['wC'], fp['wD'])
    return jnp.transpose(out, (0, 3, 1, 2))                       # NCHW


# ----------------------------------------------------------------------------
# deterministic parameter generation (synthetic weights, inference-mode BN)
# ----------------------------------------------------------------------------
class ParamGen:
    def __init__(self, key):
        self.key = key

    def take(self, shape, std=1.0):
        self.key, sub = jax.random.split(self.key)
        return jax.random.normal(sub, shape, jnp.float32) * std


def make_bn(pg, c):
    return dict(gamma=1.0 + 0.1 * pg.take((c,)),
                beta=0.1 * pg.take((c,)),
                mean=0.1 * pg.take((c,)),
                var=1.0 + jnp.abs(pg.take((c,))))


def bn_fold(bn, conv_bias=None):
    scale = bn['gamma'] / jnp.sqrt(bn['var'] + EPS)
    bias = bn['beta'] - bn['mean'] * scale
    if conv_bias is not None:
        bias = bias + conv_bias * scale
    return scale, bias


def conv_w(pg, kh, kw, cin, cout):
    return pg.take((kh, kw, cin, cout), std=math.sqrt(2.0 / (kh * kw * cin)))


def make_rescba(pg, inc, outc, ksize=3, stride=1):
    assert stride == 1  # TODO(synk): stride=2 path not wired into the fused kernel
    q = inc // 4
    mid = int(1.5 * inc)
    p = dict(inc=inc, outc=outc, k=ksize, stride=stride, q=q, mid=mid)
    p['l1_w'] = conv_w(pg, 1, 1, inc, outc)
    p['l1_bn'] = make_bn(pg, outc)
    p['l2_w'] = conv_w(pg, ksize, ksize, inc, outc)
    p['l2_bn'] = make_bn(pg, outc)
    # PW(in_planes=inc, div=4)
    p['pw_out_param'] = pg.take((inc,), std=1.0)          # torch.randn
    p['pw_conv1_w'] = conv_w(pg, ksize, ksize, q, q)
    p['pw_c2a_w'] = conv_w(pg, 1, 1, inc, mid)
    p['pw_c2a_b'] = 0.1 * pg.take((mid,))
    p['pw_c2_bn'] = make_bn(pg, mid)
    p['pw_c2b_w'] = conv_w(pg, 1, 1, mid, inc)
    p['pw_c2b_b'] = 0.1 * pg.take((inc,))
    p['pw_conv3_w'] = conv_w(pg, ksize, ksize, inc, inc)
    p['c1_w'] = conv_w(pg, ksize, ksize, inc, outc)
    p['c2_w'] = conv_w(pg, ksize, ksize, inc, outc)
    p['out_w'] = conv_w(pg, 1, 1, 2 * outc, outc)
    return p


# ----------------------------------------------------------------------------
# offline fusion: fold BN, compose 1x1∘3x3, fold PW's gather/first-1x1, pad
# ----------------------------------------------------------------------------
def _round_up(n, m):
    return ((n + m - 1) // m) * m


def _to_kmat(w_hwio, kp):
    """(kh,kw,ci,co) HWIO -> (kp, co) bf16, rows ordered tap-major then channel."""
    kh, kw, ci, co = w_hwio.shape
    w = w_hwio.reshape(kh * kw * ci, co)
    return jnp.pad(w, ((0, kp - kh * kw * ci), (0, 0))).astype(jnp.bfloat16)


def prepare_rescba(p):
    inc, outc, q, mid, k = p['inc'], p['outc'], p['q'], p['mid'], p['k']
    kk = k * k
    KP = _round_up(kk * inc, LANE)          # im2col contraction depth (72 -> 128)
    CA = 3 * outc + mid                     # live stage-A columns
    CAP = _round_up(CA, LANE)               # lane-padded stage-A width (128)
    c_l1, c_l2, c_c2, c_h = 0, outc, 2 * outc, 3 * outc

    wout = p['out_w'][0, 0]                 # (2*outc, outc)
    wout_a, wout_b = wout[:outc, :], wout[outc:, :]

    # PW channel split (tie ordering may differ from torch.argsort on ties)
    idx = jnp.argsort(-p['pw_out_param'])
    gt, um = idx[:q], idx[q:]

    s1, b1 = bn_fold(p['l1_bn'])
    s2, b2 = bn_fold(p['l2_bn'])
    sm, bm = bn_fold(p['pw_c2_bn'], conv_bias=p['pw_c2a_b'])
    W1 = p['pw_c2a_w'][0, 0]                # (inc, mid): rows 0:q act on conv1(x[gt])
    W1a, W1b = W1[:q, :], W1[q:, :]

    # --- stage A: ONE 3x3 conv over x producing all four sibling branches ----
    wA = jnp.zeros((k, k, inc, CAP), jnp.float32)
    # layer1 (1x1) rides the 3x3 patches as the center tap, BN scale folded
    wA = wA.at[k // 2, k // 2, :, c_l1:c_l1 + outc].set(p['l1_w'][0, 0] * s1[None, :])
    # layer2 (3x3), BN scale folded
    wA = wA.at[:, :, :, c_l2:c_l2 + outc].set(p['l2_w'] * s2[None, None, None, :])
    # conv2 composed with the second half of the 1x1 'out' conv
    wA = wA.at[:, :, :, c_c2:c_c2 + outc].set(
        jnp.einsum('yxio,oc->yxic', p['c2_w'], wout_b))
    # PW.conv2 first 1x1 (+BN) folded in:
    #   W1[:q] ∘ PW.conv1 is a 3x3 conv over the gathered channels,
    #   W1[q:] over the 'um' channels is a 1x1 center tap.
    wA = wA.at[:, :, gt, c_h:c_h + mid].add(
        jnp.einsum('yxjo,om->yxjm', p['pw_conv1_w'], W1a) * sm[None, None, None, :])
    wA = wA.at[k // 2, k // 2, um, c_h:c_h + mid].add(W1b * sm[None, :])

    biasA = jnp.zeros((CAP,), jnp.float32)
    biasA = biasA.at[c_l1:c_l1 + outc].set(b1)
    biasA = biasA.at[c_l2:c_l2 + outc].set(b2)
    biasA = biasA.at[c_h:c_h + mid].set(bm)
    maskA = jnp.zeros((CAP,), jnp.float32)
    maskA = maskA.at[c_l1:c_l2 + outc].set(1.0)      # layer1 / layer2 ReLU
    maskA = maskA.at[c_h:c_h + mid].set(1.0)         # PW.conv2 BN -> ReLU

    # --- stage B: PW.conv2 second 1x1, consumes the full lane-padded stage-A --
    w2 = jnp.zeros((CAP, inc), jnp.float32).at[c_h:c_h + mid, :].set(
        p['pw_c2b_w'][0, 0])

    # --- stage C / D: PW.conv3, and conv1 composed with out[:outc] ------------
    wD = jnp.einsum('yxio,oc->yxic', p['c1_w'], wout_a)

    # padded lanes must stay inert (zero weight / bias); checked once at prep
    assert kk * inc <= KP and CA <= CAP
    if CA < CAP:
        assert float(jnp.abs(biasA[CA:]).max()) == 0.0
        assert float(jnp.abs(wA[..., CA:]).max()) == 0.0

    return dict(inc=inc, outc=outc, k=k, KP=KP, CAP=CAP,
                wA=_to_kmat(wA, KP),
                bA=biasA.reshape(1, CAP),
                mA=maskA.reshape(1, CAP),
                w2=w2.astype(jnp.bfloat16),
                b2=p['pw_c2b_b'].reshape(1, inc),
                wC=_to_kmat(p['pw_conv3_w'], KP),
                wD=_to_kmat(wD, KP))


# ----------------------------------------------------------------------------
# pure-JAX (XLA) reference of the unfused ResCBA forward, for validation
# ----------------------------------------------------------------------------
def _conv_ref(x, w_hwio, pad=0):
    return jax.lax.conv_general_dilated(
        x, w_hwio, window_strides=(1, 1),
        padding=[(pad, pad), (pad, pad)],
        dimension_numbers=('NHWC', 'HWIO', 'NHWC'))


def rescba_reference(p, x_nchw):
    x = jnp.transpose(x_nchw, (0, 2, 3, 1)).astype(jnp.float32)
    k, q = p['k'], p['q']
    s1, b1 = bn_fold(p['l1_bn'])
    s2, b2 = bn_fold(p['l2_bn'])
    out = jax.nn.relu(_conv_ref(x, p['l1_w']) * s1 + b1)
    out = out + jax.nn.relu(_conv_ref(x, p['l2_w'], pad=k // 2) * s2 + b2)
    # PW
    idx = jnp.argsort(-p['pw_out_param'])
    gt, um = idx[:q], idx[q:]
    x1 = _conv_ref(jnp.take(x, gt, axis=-1), p['pw_conv1_w'], pad=k // 2)
    x2 = jnp.concatenate([x1, jnp.take(x, um, axis=-1)], axis=-1)
    sm, bm = bn_fold(p['pw_c2_bn'], conv_bias=p['pw_c2a_b'])
    x2 = jax.nn.relu(_conv_ref(x2, p['pw_c2a_w']) * sm + bm)
    x2 = _conv_ref(x2, p['pw_c2b_w']) + p['pw_c2b_b']
    pw_out = _conv_ref(x2, p['pw_conv3_w'], pad=k // 2) + x
    rout1 = _conv_ref(pw_out, p['c1_w'], pad=k // 2)
    rout2 = _conv_ref(x, p['c2_w'], pad=k // 2)
    rout = _conv_ref(jnp.concatenate([rout1, rout2], axis=-1), p['out_w'])
    return jnp.transpose(out + rout, (0, 3, 1, 2))


# ----------------------------------------------------------------------------
if __name__ == "__main__":
    root = jax.random.PRNGKey(0)
    k_params, k_data = jax.random.split(root)

    N, INC, OUTC, H, W = 2, 8, 16, 16, 16
    pg = ParamGen(k_params)
    params = make_rescba(pg, INC, OUTC, ksize=3, stride=1)
    fused_params = prepare_rescba(params)

    x = jax.random.normal(k_data, (N, INC, H, W), jnp.float32)    # NCHW input

    fwd = jax.jit(lambda inp: rescba_forward(fused_params, inp))
    y = jax.block_until_ready(fwd(x))

    assert y.shape == (N, OUTC, H, W), y.shape
    assert bool(jnp.isfinite(y).all())

    # validate against the unfused pure-JAX reference (bf16 MXU operands =>
    # small, tolerance-level deviation from the f32 reference)
    y_ref = jax.jit(lambda inp: rescba_reference(params, inp))(x)
    err = float(jnp.max(jnp.abs(y - y_ref)) / (jnp.max(jnp.abs(y_ref)) + 1e-6))
    assert err < 5e-2, f"mismatch vs reference: normalized max err {err}"

    print("KERNEL_OK")
</pallas_src>

<mosaic_0001>
module attributes {stable_mosaic.version = 11 : i64} {
  func.func @_rescba_kernel(%arg0: i32, %arg1: memref<1x16x16x8xf32, #tpu.memory_space<vmem>>, %arg2: memref<128x128xbf16, #tpu.memory_space<vmem>>, %arg3: memref<1x128xf32, #tpu.memory_space<vmem>>, %arg4: memref<1x128xf32, #tpu.memory_space<vmem>>, %arg5: memref<128x8xbf16, #tpu.memory_space<vmem>>, %arg6: memref<1x8xf32, #tpu.memory_space<vmem>>, %arg7: memref<128x8xbf16, #tpu.memory_space<vmem>>, %arg8: memref<128x16xbf16, #tpu.memory_space<vmem>>, %arg9: memref<1x16x16x16xf32, #tpu.memory_space<vmem>>, %arg10: memref<18x18x8xf32, #tpu.memory_space<vmem>>) attributes {dimension_semantics = [#tpu.dimension_semantics<parallel>], iteration_bounds = array<i64: 2>, scalar_prefetch = 0 : i64, scratch_operands = 1 : i64, tpu.core_type = #tpu.core_type<tc>, window_params = [{transform_indices = @transform_0, window_bounds = array<i64: 1, 16, 16, 8>}, {pipeline_mode = #tpu.pipeline_mode<synchronous>, transform_indices = @transform_1, window_bounds = array<i64: 128, 128>}, {pipeline_mode = #tpu.pipeline_mode<synchronous>, transform_indices = @transform_2, window_bounds = array<i64: 1, 128>}, {pipeline_mode = #tpu.pipeline_mode<synchronous>, transform_indices = @transform_3, window_bounds = array<i64: 1, 128>}, {pipeline_mode = #tpu.pipeline_mode<synchronous>, transform_indices = @transform_4, window_bounds = array<i64: 128, 8>}, {pipeline_mode = #tpu.pipeline_mode<synchronous>, transform_indices = @transform_5, window_bounds = array<i64: 1, 8>}, {pipeline_mode = #tpu.pipeline_mode<synchronous>, transform_indices = @transform_6, window_bounds = array<i64: 128, 8>}, {pipeline_mode = #tpu.pipeline_mode<synchronous>, transform_indices = @transform_7, window_bounds = array<i64: 128, 16>}, {transform_indices = @transform_8, window_bounds = array<i64: 1, 16, 16, 16>}]} {
    %cst = arith.constant 0.000000e+00 : f32
    %0 = vector.broadcast %cst : f32 to vector<18x18x8xf32>
    %c0 = arith.constant 0 : index
    %c0_0 = arith.constant 0 : index
    %c0_1 = arith.constant 0 : index
    %1 = vector.load %arg10[%c0, %c0_0, %c0_1] : memref<18x18x8xf32, #tpu.memory_space<vmem>>, vector<18x18x8xf32>
    tpu.vector_store %arg10[%c0, %c0_0, %c0_1], %0 {strides = array<i32>} : memref<18x18x8xf32, #tpu.memory_space<vmem>>, vector<18x18x8xf32>,
    %c0_2 = arith.constant 0 : index
    %c0_3 = arith.constant 0 : index
    %c0_4 = arith.constant 0 : index
    %c0_5 = arith.constant 0 : index
    %2 = vector.load %arg1[%c0_2, %c0_3, %c0_4, %c0_5] : memref<1x16x16x8xf32, #tpu.memory_space<vmem>>, vector<1x16x16x8xf32>
    %3 = vector.shape_cast %2 : vector<1x16x16x8xf32> to vector<16x16x8xf32>
    %c1 = arith.constant 1 : index
    %c1_6 = arith.constant 1 : index
    %c0_7 = arith.constant 0 : index
    %4 = vector.load %arg10[%c1, %c1_6, %c0_7] : memref<18x18x8xf32, #tpu.memory_space<vmem>>, vector<16x16x8xf32>
    tpu.vector_store %arg10[%c1, %c1_6, %c0_7], %3 {strides = array<i32>} : memref<18x18x8xf32, #tpu.memory_space<vmem>>, vector<16x16x8xf32>,
    %c0_8 = arith.constant 0 : index
    %c0_9 = arith.constant 0 : index
    %c0_10 = arith.constant 0 : index
    %5 = vector.load %arg10[%c0_8, %c0_9, %c0_10] : memref<18x18x8xf32, #tpu.memory_space<vmem>>, vector<16x16x8xf32>
    %c0_11 = arith.constant 0 : index
    %c1_12 = arith.constant 1 : index
    %c0_13 = arith.constant 0 : index
    %6 = vector.load %arg10[%c0_11, %c1_12, %c0_13] : memref<18x18x8xf32, #tpu.memory_space<vmem>>, vector<16x16x8xf32>
    %c0_14 = arith.constant 0 : index
    %c2 = arith.constant 2 : index
    %c0_15 = arith.constant 0 : index
    %7 = vector.load %arg10[%c0_14, %c2, %c0_15] : memref<18x18x8xf32, #tpu.memory_space<vmem>>, vector<16x16x8xf32>
    %c1_16 = arith.constant 1 : index
    %c0_17 = arith.constant 0 : index
    %c0_18 = arith.constant 0 : index
    %8 = vector.load %arg10[%c1_16, %c0_17, %c0_18] : memref<18x18x8xf32, #tpu.memory_space<vmem>>, vector<16x16x8xf32>
    %c1_19 = arith.constant 1 : index
    %c1_20 = arith.constant 1 : index
    %c0_21 = arith.constant 0 : index
    %9 = vector.load %arg10[%c1_19, %c1_20, %c0_21] : memref<18x18x8xf32, #tpu.memory_space<vmem>>, vector<16x16x8xf32>
    %c1_22 = arith.constant 1 : index
    %c2_23 = arith.constant 2 : index
    %c0_24 = arith.constant 0 : index
    %10 = vector.load %arg10[%c1_22, %c2_23, %c0_24] : memref<18x18x8xf32, #tpu.memory_space<vmem>>, vector<16x16x8xf32>
    %c2_25 = arith.constant 2 : index
    %c0_26 = arith.constant 0 : index
    %c0_27 = arith.constant 0 : index
    %11 = vector.load %arg10[%c2_25, %c0_26, %c0_27] : memref<18x18x8xf32, #tpu.memory_space<vmem>>, vector<16x16x8xf32>
    %c2_28 = arith.constant 2 : index
    %c1_29 = arith.constant 1 : index
    %c0_30 = arith.constant 0 : index
    %12 = vector.load %arg10[%c2_28, %c1_29, %c0_30] : memref<18x18x8xf32, #tpu.memory_space<vmem>>, vector<16x16x8xf32>
    %c2_31 = arith.constant 2 : index
    %c2_32 = arith.constant 2 : index
    %c0_33 = arith.constant 0 : index
    %13 = vector.load %arg10[%c2_31, %c2_32, %c0_33] : memref<18x18x8xf32, #tpu.memory_space<vmem>>, vector<16x16x8xf32>
    %cst_34 = arith.constant 0.000000e+00 : f32
    %14 = vector.broadcast %cst_34 : f32 to vector<16x16x56xf32>
    %15 = tpu.concatenate %5, %6, %7, %8, %9, %10, %11, %12, %13, %14 in 2 : vector<16x16x8xf32>, vector<16x16x8xf32>, vector<16x16x8xf32>, vector<16x16x8xf32>, vector<16x16x8xf32>, vector<16x16x8xf32>, vector<16x16x8xf32>, vector<16x16x8xf32>, vector<16x16x8xf32>, vector<16x16x56xf32> -> vector<16x16x128xf32>
    %16 = arith.truncf %15 : vector<16x16x128xf32> to vector<16x16x128xbf16>
    %17 = vector.shape_cast %16 : vector<16x16x128xbf16> to vector<256x128xbf16>
    %c0_35 = arith.constant 0 : index
    %c0_36 = arith.constant 0 : index
    %18 = vector.load %arg2[%c0_35, %c0_36] : memref<128x128xbf16, #tpu.memory_space<vmem>>, vector<128x128xbf16>
    %cst_37 = arith.constant dense<0.000000e+00> : vector<256x128xf32>
    %19 = tpu.matmul %17, %18, %cst_37 {dimension_numbers = #tpu.dot_dimension_numbers<[1], [0], [0], [1], [0, 0, 1, 1], [], []>} : vector<256x128xbf16>, vector<128x128xbf16>, vector<256x128xf32> -> vector<256x128xf32>
    %c0_38 = arith.constant 0 : index
    %c0_39 = arith.constant 0 : index
    %20 = vector.load %arg3[%c0_38, %c0_39] : memref<1x128xf32, #tpu.memory_space<vmem>>, vector<1x128xf32>
    %21 = vector.broadcast %20 : vector<1x128xf32> to vector<256x128xf32>
    %22 = arith.addf %19, %21 : vector<256x128xf32>
    %c0_40 = arith.constant 0 : index
    %c0_41 = arith.constant 0 : index
    %23 = vector.load %arg4[%c0_40, %c0_41] : memref<1x128xf32, #tpu.memory_space<vmem>>, vector<1x128xf32>
    %cst_42 = arith.constant 5.000000e-01 : f32
    %24 = vector.broadcast %cst_42 : f32 to vector<1x128xf32>
    %25 = arith.cmpf ogt, %23, %24 : vector<1x128xf32>
    %cst_43 = arith.constant 0.000000e+00 : f32
    %26 = vector.broadcast %cst_43 : f32 to vector<256x128xf32>
    %27 = arith.maximumf %22, %26 : vector<256x128xf32>
    %28 = vector.shape_cast %25 : vector<1x128xi1> to vector<1x128xi1>
    %29 = vector.broadcast %28 : vector<1x128xi1> to vector<256x128xi1>
    %30 = arith.select %29, %27, %22 : vector<256x128xi1>, vector<256x128xf32>
    %31 = vector.extract_strided_slice %30 {offsets = [0, 0], sizes = [256, 16], strides = [1, 1]} : vector<256x128xf32> to vector<256x16xf32>
    %32 = vector.extract_strided_slice %30 {offsets = [0, 16], sizes = [256, 16], strides = [1, 1]} : vector<256x128xf32> to vector<256x16xf32>
    %33 = arith.addf %31, %32 : vector<256x16xf32>
    %34 = vector.extract_strided_slice %30 {offsets = [0, 32], sizes = [256, 16], strides = [1, 1]} : vector<256x128xf32> to vector<256x16xf32>
    %35 = arith.addf %33, %34 : vector<256x16xf32>
    %36 = arith.truncf %30 : vector<256x128xf32> to vector<256x128xbf16>
    %c0_44 = arith.constant 0 : index
    %c0_45 = arith.constant 0 : index
    %37 = vector.load %arg5[%c0_44, %c0_45] : memref<128x8xbf16, #tpu.memory_space<vmem>>, vector<128x8xbf16>
    %cst_46 = arith.constant dense<0.000000e+00> : vector<256x8xf32>
    %38 = tpu.matmul %36, %37, %cst_46 {dimension_numbers = #tpu.dot_dimension_numbers<[1], [0], [0], [1], [0, 0, 1, 1], [], []>} : vector<256x128xbf16>, vector<128x8xbf16>, vector<256x8xf32> -> vector<256x8xf32>
    %c0_47 = arith.constant 0 : index
    %c0_48 = arith.constant 0 : index
    %39 = vector.load %arg6[%c0_47, %c0_48] : memref<1x8xf32, #tpu.memory_space<vmem>>, vector<1x8xf32>
    %40 = vector.broadcast %39 : vector<1x8xf32> to vector<256x8xf32>
    %41 = arith.addf %38, %40 : vector<256x8xf32>
    %42 = vector.shape_cast %41 : vector<256x8xf32> to vector<16x16x8xf32>
    %c1_49 = arith.constant 1 : index
    %c1_50 = arith.constant 1 : index
    %c0_51 = arith.constant 0 : index
    %43 = vector.load %arg10[%c1_49, %c1_50, %c0_51] : memref<18x18x8xf32, #tpu.memory_space<vmem>>, vector<16x16x8xf32>
    tpu.vector_store %arg10[%c1_49, %c1_50, %c0_51], %42 {strides = array<i32>} : memref<18x18x8xf32, #tpu.memory_space<vmem>>, vector<16x16x8xf32>,
    %c0_52 = arith.constant 0 : index
    %c0_53 = arith.constant 0 : index
    %c0_54 = arith.constant 0 : index
    %44 = vector.load %arg10[%c0_52, %c0_53, %c0_54] : memref<18x18x8xf32, #tpu.memory_space<vmem>>, vector<16x16x8xf32>
    %c0_55 = arith.constant 0 : index
    %c1_56 = arith.constant 1 : index
    %c0_57 = arith.constant 0 : index
    %45 = vector.load %arg10[%c0_55, %c1_56, %c0_57] : memref<18x18x8xf32, #tpu.memory_space<vmem>>, vector<16x16x8xf32>
    %c0_58 = arith.constant 0 : index
    %c2_59 = arith.constant 2 : index
    %c0_60 = arith.constant 0 : index
    %46 = vector.load %arg10[%c0_58, %c2_59, %c0_60] : memref<18x18x8xf32, #tpu.memory_space<vmem>>, vector<16x16x8xf32>
    %c1_61 = arith.constant 1 : index
    %c0_62 = arith.constant 0 : index
    %c0_63 = arith.constant 0 : index
    %47 = vector.load %arg10[%c1_61, %c0_62, %c0_63] : memref<18x18x8xf32, #tpu.memory_space<vmem>>, vector<16x16x8xf32>
    %c1_64 = arith.constant 1 : index
    %c1_65 = arith.constant 1 : index
    %c0_66 = arith.constant 0 : index
    %48 = vector.load %arg10[%c1_64, %c1_65, %c0_66] : memref<18x18x8xf32, #tpu.memory_space<vmem>>, vector<16x16x8xf32>
    %c1_67 = arith.constant 1 : index
    %c2_68 = arith.constant 2 : index
    %c0_69 = arith.constant 0 : index
    %49 = vector.load %arg10[%c1_67, %c2_68, %c0_69] : memref<18x18x8xf32, #tpu.memory_space<vmem>>, vector<16x16x8xf32>
    %c2_70 = arith.constant 2 : index
    %c0_71 = arith.constant 0 : index
    %c0_72 = arith.constant 0 : index
    %50 = vector.load %arg10[%c2_70, %c0_71, %c0_72] : memref<18x18x8xf32, #tpu.memory_space<vmem>>, vector<16x16x8xf32>
    %c2_73 = arith.constant 2 : index
    %c1_74 = arith.constant 1 : index
    %c0_75 = arith.constant 0 : index
    %51 = vector.load %arg10[%c2_73, %c1_74, %c0_75] : memref<18x18x8xf32, #tpu.memory_space<vmem>>, vector<16x16x8xf32>
    %c2_76 = arith.constant 2 : index
    %c2_77 = arith.constant 2 : index
    %c0_78 = arith.constant 0 : index
    %52 = vector.load %arg10[%c2_76, %c2_77, %c0_78] : memref<18x18x8xf32, #tpu.memory_space<vmem>>, vector<16x16x8xf32>
    %cst_79 = arith.constant 0.000000e+00 : f32
    %53 = vector.broadcast %cst_79 : f32 to vector<16x16x56xf32>
    %54 = tpu.concatenate %44, %45, %46, %47, %48, %49, %50, %51, %52, %53 in 2 : vector<16x16x8xf32>, vector<16x16x8xf32>, vector<16x16x8xf32>, vector<16x16x8xf32>, vector<16x16x8xf32>, vector<16x16x8xf32>, vector<16x16x8xf32>, vector<16x16x8xf32>, vector<16x16x8xf32>, vector<16x16x56xf32> -> vector<16x16x128xf32>
    %55 = arith.truncf %54 : vector<16x16x128xf32> to vector<16x16x128xbf16>
    %56 = vector.shape_cast %55 : vector<16x16x128xbf16> to vector<256x128xbf16>
    %c0_80 = arith.constant 0 : index
    %c0_81 = arith.constant 0 : index
    %57 = vector.load %arg7[%c0_80, %c0_81] : memref<128x8xbf16, #tpu.memory_space<vmem>>, vector<128x8xbf16>
    %cst_82 = arith.constant dense<0.000000e+00> : vector<256x8xf32>
    %58 = tpu.matmul %56, %57, %cst_82 {dimension_numbers = #tpu.dot_dimension_numbers<[1], [0], [0], [1], [0, 0, 1, 1], [], []>} : vector<256x128xbf16>, vector<128x8xbf16>, vector<256x8xf32> -> vector<256x8xf32>
    %59 = vector.shape_cast %58 : vector<256x8xf32> to vector<16x16x8xf32>
    %c0_83 = arith.constant 0 : index
    %c0_84 = arith.constant 0 : index
    %c0_85 = arith.constant 0 : index
    %c0_86 = arith.constant 0 : index
    %60 = vector.load %arg1[%c0_83, %c0_84, %c0_85, %c0_86] : memref<1x16x16x8xf32, #tpu.memory_space<vmem>>, vector<1x16x16x8xf32>
    %61 = vector.shape_cast %60 : vector<1x16x16x8xf32> to vector<16x16x8xf32>
    %62 = arith.addf %59, %61 : vector<16x16x8xf32>
    %c1_87 = arith.constant 1 : index
    %c1_88 = arith.constant 1 : index
    %c0_89 = arith.constant 0 : index
    %63 = vector.load %arg10[%c1_87, %c1_88, %c0_89] : memref<18x18x8xf32, #tpu.memory_space<vmem>>, vector<16x16x8xf32>
    tpu.vector_store %arg10[%c1_87, %c1_88, %c0_89], %62 {strides = array<i32>} : memref<18x18x8xf32, #tpu.memory_space<vmem>>, vector<16x16x8xf32>,
    %c0_90 = arith.constant 0 : index
    %c0_91 = arith.constant 0 : index
    %c0_92 = arith.constant 0 : index
    %64 = vector.load %arg10[%c0_90, %c0_91, %c0_92] : memref<18x18x8xf32, #tpu.memory_space<vmem>>, vector<16x16x8xf32>
    %c0_93 = arith.constant 0 : index
    %c1_94 = arith.constant 1 : index
    %c0_95 = arith.constant 0 : index
    %65 = vector.load %arg10[%c0_93, %c1_94, %c0_95] : memref<18x18x8xf32, #tpu.memory_space<vmem>>, vector<16x16x8xf32>
    %c0_96 = arith.constant 0 : index
    %c2_97 = arith.constant 2 : index
    %c0_98 = arith.constant 0 : index
    %66 = vector.load %arg10[%c0_96, %c2_97, %c0_98] : memref<18x18x8xf32, #tpu.memory_space<vmem>>, vector<16x16x8xf32>
    %c1_99 = arith.constant 1 : index
    %c0_100 = arith.constant 0 : index
    %c0_101 = arith.constant 0 : index
    %67 = vector.load %arg10[%c1_99, %c0_100, %c0_101] : memref<18x18x8xf32, #tpu.memory_space<vmem>>, vector<16x16x8xf32>
    %c1_102 = arith.constant 1 : index
    %c1_103 = arith.constant 1 : index
    %c0_104 = arith.constant 0 : index
    %68 = vector.load %arg10[%c1_102, %c1_103, %c0_104] : memref<18x18x8xf32, #tpu.memory_space<vmem>>, vector<16x16x8xf32>
    %c1_105 = arith.constant 1 : index
    %c2_106 = arith.constant 2 : index
    %c0_107 = arith.constant 0 : index
    %69 = vector.load %arg10[%c1_105, %c2_106, %c0_107] : memref<18x18x8xf32, #tpu.memory_space<vmem>>, vector<16x16x8xf32>
    %c2_108 = arith.constant 2 : index
    %c0_109 = arith.constant 0 : index
    %c0_110 = arith.constant 0 : index
    %70 = vector.load %arg10[%c2_108, %c0_109, %c0_110] : memref<18x18x8xf32, #tpu.memory_space<vmem>>, vector<16x16x8xf32>
    %c2_111 = arith.constant 2 : index
    %c1_112 = arith.constant 1 : index
    %c0_113 = arith.constant 0 : index
    %71 = vector.load %arg10[%c2_111, %c1_112, %c0_113] : memref<18x18x8xf32, #tpu.memory_space<vmem>>, vector<16x16x8xf32>
    %c2_114 = arith.constant 2 : index
    %c2_115 = arith.constant 2 : index
    %c0_116 = arith.constant 0 : index
    %72 = vector.load %arg10[%c2_114, %c2_115, %c0_116] : memref<18x18x8xf32, #tpu.memory_space<vmem>>, vector<16x16x8xf32>
    %cst_117 = arith.constant 0.000000e+00 : f32
    %73 = vector.broadcast %cst_117 : f32 to vector<16x16x56xf32>
    %74 = tpu.concatenate %64, %65, %66, %67, %68, %69, %70, %71, %72, %73 in 2 : vector<16x16x8xf32>, vector<16x16x8xf32>, vector<16x16x8xf32>, vector<16x16x8xf32>, vector<16x16x8xf32>, vector<16x16x8xf32>, vector<16x16x8xf32>, vector<16x16x8xf32>, vector<16x16x8xf32>, vector<16x16x56xf32> -> vector<16x16x128xf32>
    %75 = arith.truncf %74 : vector<16x16x128xf32> to vector<16x16x128xbf16>
    %76 = vector.shape_cast %75 : vector<16x16x128xbf16> to vector<256x128xbf16>
    %c0_118 = arith.constant 0 : index
    %c0_119 = arith.constant 0 : index
    %77 = vector.load %arg8[%c0_118, %c0_119] : memref<128x16xbf16, #tpu.memory_space<vmem>>, vector<128x16xbf16>
    %cst_120 = arith.constant dense<0.000000e+00> : vector<256x16xf32>
    %78 = tpu.matmul %76, %77, %cst_120 {dimension_numbers = #tpu.dot_dimension_numbers<[1], [0], [0], [1], [0, 0, 1, 1], [], []>} : vector<256x128xbf16>, vector<128x16xbf16>, vector<256x16xf32> -> vector<256x16xf32>
    %79 = arith.addf %35, %78 : vector<256x16xf32>
    %80 = vector.shape_cast %79 : vector<256x16xf32> to vector<16x16x16xf32>
    %c0_121 = arith.constant 0 : index
    %c0_122 = arith.constant 0 : index
    %c0_123 = arith.constant 0 : index
    %c0_124 = arith.constant 0 : index
    %81 = vector.load %arg9[%c0_121, %c0_122, %c0_123, %c0_124] : memref<1x16x16x16xf32, #tpu.memory_space<vmem>>, vector<1x16x16x16xf32>
    %82 = vector.shape_cast %81 : vector<1x16x16x16xf32> to vector<16x16x16xf32>
    %83 = vector.shape_cast %80 : vector<16x16x16xf32> to vector<1x16x16x16xf32>
    tpu.vector_store %arg9[%c0_121, %c0_122, %c0_123, %c0_124], %83 {strides = array<i32>} : memref<1x16x16x16xf32, #tpu.memory_space<vmem>>, vector<1x16x16x16xf32>,
    return
  }
  func.func @transform_0(%arg0: i32) -> (i32, i32, i32, i32) {
    %c0_i32 = arith.constant 0 : i32
    %c0_i32_0 = arith.constant 0 : i32
    %c0_i32_1 = arith.constant 0 : i32
    %c0_i32_2 = arith.constant 0 : i32
    return %arg0, %c0_i32, %c0_i32_0, %c0_i32_1 : i32, i32, i32, i32
  }
  func.func @transform_1(%arg0: i32) -> (i32, i32) {
    %c0_i32 = arith.constant 0 : i32
    %c0_i32_0 = arith.constant 0 : i32
    %c0_i32_1 = arith.constant 0 : i32
    return %c0_i32, %c0_i32_0 : i32, i32
  }
  func.func @transform_2(%arg0: i32) -> (i32, i32) {
    %c0_i32 = arith.constant 0 : i32
    %c0_i32_0 = arith.constant 0 : i32
    %c0_i32_1 = arith.constant 0 : i32
    return %c0_i32, %c0_i32_0 : i32, i32
  }
  func.func @transform_3(%arg0: i32) -> (i32, i32) {
    %c0_i32 = arith.constant 0 : i32
    %c0_i32_0 = arith.constant 0 : i32
    %c0_i32_1 = arith.constant 0 : i32
    return %c0_i32, %c0_i32_0 : i32, i32
  }
  func.func @transform_4(%arg0: i32) -> (i32, i32) {
    %c0_i32 = arith.constant 0 : i32
    %c0_i32_0 = arith.constant 0 : i32
    %c0_i32_1 = arith.constant 0 : i32
    return %c0_i32, %c0_i32_0 : i32, i32
  }
  func.func @transform_5(%arg0: i32) -> (i32, i32) {
    %c0_i32 = arith.constant 0 : i32
    %c0_i32_0 = arith.constant 0 : i32
    %c0_i32_1 = arith.constant 0 : i32
    return %c0_i32, %c0_i32_0 : i32, i32
  }
  func.func @transform_6(%arg0: i32) -> (i32, i32) {
    %c0_i32 = arith.constant 0 : i32
    %c0_i32_0 = arith.constant 0 : i32
    %c0_i32_1 = arith.constant 0 : i32
    return %c0_i32, %c0_i32_0 : i32, i32
  }
  func.func @transform_7(%arg0: i32) -> (i32, i32) {
    %c0_i32 = arith.constant 0 : i32
    %c0_i32_0 = arith.constant 0 : i32
    %c0_i32_1 = arith.constant 0 : i32
    return %c0_i32, %c0_i32_0 : i32, i32
  }
  func.func @transform_8(%arg0: i32) -> (i32, i32, i32, i32) {
    %c0_i32 = arith.constant 0 : i32
    %c0_i32_0 = arith.constant 0 : i32
    %c0_i32_1 = arith.constant 0 : i32
    %c0_i32_2 = arith.constant 0 : i32
    return %arg0, %c0_i32, %c0_i32_0, %c0_i32_1 : i32, i32, i32, i32
  }
}

</mosaic_0001>

<llo_original>
// kernel: _lambda_.1
$region0: #{_lambda_.1}
  #allocation0 [shape = 'u32[]', space=smem, size = 0x4, offset = 0x4, fixed_abs, tag = 'smem constant byte address 0x4 - core index']
  #allocation1 [shape = 'u32[72,128]{1,0:T(1,128)}', space=vmem, size = 0x9000, scoped, tag = 'internal scratch']
  #allocation2 [shape = 'f32[18,18,8]{2,1,0:T(8,128)}', space=vmem, size = 0x36000, scoped, tag = 'scratch operand']
  %s0 = inlined_call_operand.vmem [shape: f32[2,16,16,8], index: 0, kind: input, shape index: {}]
  %s1 = inlined_call_operand.vmem [shape: bf16[128,128], index: 1, kind: input, shape index: {}]
  %s2 = inlined_call_operand.vmem [shape: f32[1,128], index: 2, kind: input, shape index: {}]
  %s3 = inlined_call_operand.vmem [shape: f32[1,128], index: 3, kind: input, shape index: {}]
  %s4 = inlined_call_operand.vmem [shape: bf16[128,8], index: 4, kind: input, shape index: {}]
  %s5 = inlined_call_operand.vmem [shape: f32[1,8], index: 5, kind: input, shape index: {}]
  %s6 = inlined_call_operand.vmem [shape: bf16[128,8], index: 6, kind: input, shape index: {}]
  %s7 = inlined_call_operand.vmem [shape: bf16[128,16], index: 7, kind: input, shape index: {}]
  %s8 = inlined_call_operand.vmem [shape: f32[2,16,16,16], index: 8, kind: output, shape index: {}]
  %s9 = sld [smem:[#allocation0]]
  $region65: #{_lambda_.1} parent=0
    _
  %s11 = ssub.s32 1, %s9
  %s12 = scalar_select 0, %s11, %s9
  loop: start=0, step=1, limit=4
  $region2: #{_lambda_.1} parent=0 // loop_pre_header
    _
  $region3: #{_lambda_.1} parent=0 // loop_header
    %s14 = sphi 0, %s18
    %p15 = scmp.ge.s32.totalorder %s14, 4
    %s24 = sphi 0, %s26
    %s27 = sphi 0, %s24
    %s28 = sphi 0, %s27
    %s44 = sphi 0, %s28
    %s48 = sphi 0, %s48
    %s50 = sphi 0, %s48
    %s51 = sphi 0, %s50
    %s65 = sphi 0, %s51
    %s69 = sphi 0, %s69
    %s71 = sphi 0, %s69
    %s72 = sphi 0, %s71
    %s86 = sphi 0, %s72
    %s90 = sphi 0, %s90
    %s92 = sphi 0, %s90
    %s93 = sphi 0, %s92
    %s107 = sphi 0, %s93
    %s111 = sphi 0, %s111
    %s113 = sphi 0, %s111
    %s114 = sphi 0, %s113
    %s128 = sphi 0, %s114
    %s132 = sphi 0, %s132
    %s134 = sphi 0, %s132
    %s135 = sphi 0, %s134
    %s149 = sphi 0, %s135
    %s153 = sphi 0, %s153
    %s155 = sphi 0, %s153
    %s156 = sphi 0, %s155
    %s170 = sphi 0, %s156
    %s174 = sphi 0, %s174
    %s176 = sphi 0, %s174
    %s177 = sphi 0, %s176
    %s191 = sphi 0, %s177
    %s197 = sphi 0, %s199
    %s200 = sphi 0, %s197
    %s201 = sphi 0, %s200
    %s217 = sphi 0, %s201
  $region4: #{_lambda_.1} parent=0 // loop_header_branch
    %17 = sbr.rel (%p15) target = $region8
  $region5: #{_lambda_.1} parent=0 // loop_body
    %s19 = ssub.s32 %s14, 1
    %s20 = ssub.s32 %s14, 2
    %s21 = sadd.s32 %s14, 1
    %s22 = ssub.s32 %s14, %s21
    %p23 = scmp.eq.s32.totalorder %s22, 0
    %s25 = sadd.s32 %s24, 1
    %s26 = scalar_select %p23, %s24, %s25
    %p29 = pneg %p23
    %p30 = scmp.eq.s32.totalorder %s14, 1
    %p31 = por %p29, %p30
    %p32 = scmp.ne.s32.totalorder %s24, %s27
    %p33 = scmp.eq.s32.totalorder %s14, 0
    %p34 = por %p32, %p33
    %p35 = scmp.ne.s32.totalorder %s24, %s27
    %p36 = scmp.eq.s32.totalorder %s19, 1
    %p37 = por %p35, %p36
    %p38 = scmp.ne.s32.totalorder %s27, %s28
    %p39 = scmp.eq.s32.totalorder %s19, 0
    %p40 = por %p38, %p39
    %p41 = scmp.ne.s32.totalorder %s27, %s28
    %p42 = scmp.eq.s32.totalorder %s20, 1
    %p43 = por %p41, %p42
    %p45 = scmp.ne.s32.totalorder %s28, %s44
    %p46 = scmp.eq.s32.totalorder %s20, 0
    %p47 = por %p45, %p46
    %s49 = sadd.s32 %s48, 1
    %p52 = scmp.eq.s32.totalorder %s14, 1
    %p53 = scmp.ne.s32.totalorder %s48, %s50
    %p54 = scmp.eq.s32.totalorder %s14, 0
    %p55 = por %p53, %p54
    %p56 = scmp.ne.s32.totalorder %s48, %s50
    %p57 = scmp.eq.s32.totalorder %s19, 1
    %p58 = por %p56, %p57
    %p59 = scmp.ne.s32.totalorder %s50, %s51
    %p60 = scmp.eq.s32.totalorder %s19, 0
    %p61 = por %p59, %p60
    %p62 = scmp.ne.s32.totalorder %s50, %s51
    %p63 = scmp.eq.s32.totalorder %s20, 1
    %p64 = por %p62, %p63
    %p66 = scmp.ne.s32.totalorder %s51, %s65
    %p67 = scmp.eq.s32.totalorder %s20, 0
    %p68 = por %p66, %p67
    %s70 = sadd.s32 %s69, 1
    %p73 = scmp.eq.s32.totalorder %s14, 1
    %p74 = scmp.ne.s32.totalorder %s69, %s71
    %p75 = scmp.eq.s32.totalorder %s14, 0
    %p76 = por %p74, %p75
    %p77 = scmp.ne.s32.totalorder %s69, %s71
    %p78 = scmp.eq.s32.totalorder %s19, 1
    %p79 = por %p77, %p78
    %p80 = scmp.ne.s32.totalorder %s71, %s72
    %p81 = scmp.eq.s32.totalorder %s19, 0
    %p82 = por %p80, %p81
    %p83 = scmp.ne.s32.totalorder %s71, %s72
    %p84 = scmp.eq.s32.totalorder %s20, 1
    %p85 = por %p83, %p84
    %p87 = scmp.ne.s32.totalorder %s72, %s86
    %p88 = scmp.eq.s32.totalorder %s20, 0
    %p89 = por %p87, %p88
    %s91 = sadd.s32 %s90, 1
    %p94 = scmp.eq.s32.totalorder %s14, 1
    %p95 = scmp.ne.s32.totalorder %s90, %s92
    %p96 = scmp.eq.s32.totalorder %s14, 0
    %p97 = por %p95, %p96
    %p98 = scmp.ne.s32.totalorder %s90, %s92
    %p99 = scmp.eq.s32.totalorder %s19, 1
    %p100 = por %p98, %p99
    %p101 = scmp.ne.s32.totalorder %s92, %s93
    %p102 = scmp.eq.s32.totalorder %s19, 0
    %p103 = por %p101, %p102
    %p104 = scmp.ne.s32.totalorder %s92, %s93
    %p105 = scmp.eq.s32.totalorder %s20, 1
    %p106 = por %p104, %p105
    %p108 = scmp.ne.s32.totalorder %s93, %s107
    %p109 = scmp.eq.s32.totalorder %s20, 0
    %p110 = por %p108, %p109
    %s112 = sadd.s32 %s111, 1
    %p115 = scmp.eq.s32.totalorder %s14, 1
    %p116 = scmp.ne.s32.totalorder %s111, %s113
    %p117 = scmp.eq.s32.totalorder %s14, 0
    %p118 = por %p116, %p117
    %p119 = scmp.ne.s32.totalorder %s111, %s113
    %p120 = scmp.eq.s32.totalorder %s19, 1
    %p121 = por %p119, %p120
    %p122 = scmp.ne.s32.totalorder %s113, %s114
    %p123 = scmp.eq.s32.totalorder %s19, 0
    %p124 = por %p122, %p123
    %p125 = scmp.ne.s32.totalorder %s113, %s114
    %p126 = scmp.eq.s32.totalorder %s20, 1
    %p127 = por %p125, %p126
    %p129 = scmp.ne.s32.totalorder %s114, %s128
    %p130 = scmp.eq.s32.totalorder %s20, 0
    %p131 = por %p129, %p130
    %s133 = sadd.s32 %s132, 1
    %p136 = scmp.eq.s32.totalorder %s14, 1
    %p137 = scmp.ne.s32.totalorder %s132, %s134
    %p138 = scmp.eq.s32.totalorder %s14, 0
    %p139 = por %p137, %p138
    %p140 = scmp.ne.s32.totalorder %s132, %s134
    %p141 = scmp.eq.s32.totalorder %s19, 1
    %p142 = por %p140, %p141
    %p143 = scmp.ne.s32.totalorder %s134, %s135
    %p144 = scmp.eq.s32.totalorder %s19, 0
    %p145 = por %p143, %p144
    %p146 = scmp.ne.s32.totalorder %s134, %s135
    %p147 = scmp.eq.s32.totalorder %s20, 1
    %p148 = por %p146, %p147
    %p150 = scmp.ne.s32.totalorder %s135, %s149
    %p151 = scmp.eq.s32.totalorder %s20, 0
    %p152 = por %p150, %p151
    %s154 = sadd.s32 %s153, 1
    %p157 = scmp.eq.s32.totalorder %s14, 1
    %p158 = scmp.ne.s32.totalorder %s153, %s155
    %p159 = scmp.eq.s32.totalorder %s14, 0
    %p160 = por %p158, %p159
    %p161 = scmp.ne.s32.totalorder %s153, %s155
    %p162 = scmp.eq.s32.totalorder %s19, 1
    %p163 = por %p161, %p162
    %p164 = scmp.ne.s32.totalorder %s155, %s156
    %p165 = scmp.eq.s32.totalorder %s19, 0
    %p166 = por %p164, %p165
    %p167 = scmp.ne.s32.totalorder %s155, %s156
    %p168 = scmp.eq.s32.totalorder %s20, 1
    %p169 = por %p167, %p168
    %p171 = scmp.ne.s32.totalorder %s156, %s170
    %p172 = scmp.eq.s32.totalorder %s20, 0
    %p173 = por %p171, %p172
    %s175 = sadd.s32 %s174, 1
    %p178 = scmp.eq.s32.totalorder %s14, 1
    %p179 = scmp.ne.s32.totalorder %s174, %s176
    %p180 = scmp.eq.s32.totalorder %s14, 0
    %p181 = por %p179, %p180
    %p182 = scmp.ne.s32.totalorder %s174, %s176
    %p183 = scmp.eq.s32.totalorder %s19, 1
    %p184 = por %p182, %p183
    %p185 = scmp.ne.s32.totalorder %s176, %s177
    %p186 = scmp.eq.s32.totalorder %s19, 0
    %p187 = por %p185, %p186
    %p188 = scmp.ne.s32.totalorder %s176, %s177
    %p189 = scmp.eq.s32.totalorder %s20, 1
    %p190 = por %p188, %p189
    %p192 = scmp.ne.s32.totalorder %s177, %s191
    %p193 = scmp.eq.s32.totalorder %s20, 0
    %p194 = por %p192, %p193
    %s195 = ssub.s32 %s14, %s21
    %p196 = scmp.eq.s32.totalorder %s195, 0
    %s198 = sadd.s32 %s197, 1
    %s199 = scalar_select %p196, %s197, %s198
    %p202 = pneg %p196
    %p203 = scmp.eq.s32.totalorder %s14, 1
    %p204 = por %p202, %p203
    %p205 = scmp.ne.s32.totalorder %s197, %s200
    %p206 = scmp.eq.s32.totalorder %s14, 0
    %p207 = por %p205, %p206
    %p208 = scmp.ne.s32.totalorder %s197, %s200
    %p209 = scmp.eq.s32.totalorder %s19, 1
    %p210 = por %p208, %p209
    %p211 = scmp.ne.s32.totalorder %s200, %s201
    %p212 = scmp.eq.s32.totalorder %s19, 0
    %p213 = por %p211, %p212
    %p214 = scmp.ne.s32.totalorder %s200, %s201
    %p215 = scmp.eq.s32.totalorder %s20, 1
    %p216 = por %p214, %p215
    %p218 = scmp.ne.s32.totalorder %s201, %s217
    %p219 = scmp.eq.s32.totalorder %s20, 0
    %p220 = por %p218, %p219
    %p221 = scmp.le.s32.totalorder 1, %s14
    %p222 = scmp.lt.s32.totalorder %s14, 3
    %p223 = pnand %p221, %p222
    %p224 = pneg %p223
    // Predicated region
    $region9: #{_lambda_.1} parent=5 // pred_check
      _
    $region10: #{_lambda_.1} parent=5 // pred_check_branch
      %226 = sbr.rel (%p223) target = $region12
    $region11: #{_lambda_.1} parent=5 // pred_region
      %s227 = ssub.s32 %s14, 1
      // Predicated region
      $region13: #{_lambda_.1} parent=11 // pred_check
        %p228 = pneg %p61
      $region14: #{_lambda_.1} parent=11 // pred_check_branch
        %230 = sbr.rel (%p228) target = $region16
      $region15: #{_lambda_.1} parent=11 // pred_region
        _
      $region16: #{_lambda_.1} parent=11 // pred_fallthru
        _
      // Predicated region
      $region17: #{_lambda_.1} parent=11 // pred_check
        %p231 = pneg %p82
      $region18: #{_lambda_.1} parent=11 // pred_check_branch
        %233 = sbr.rel (%p231) target = $region20
      $region19: #{_lambda_.1} parent=11 // pred_region
        _
      $region20: #{_lambda_.1} parent=11 // pred_fallthru
        _
      // Predicated region
      $region21: #{_lambda_.1} parent=11 // pred_check
        %p234 = pneg %p103
      $region22: #{_lambda_.1} parent=11 // pred_check_branch
        %236 = sbr.rel (%p234) target = $region24
      $region23: #{_lambda_.1} parent=11 // pred_region
        _
      $region24: #{_lambda_.1} parent=11 // pred_fallthru
        _
      // Predicated region
      $region25: #{_lambda_.1} parent=11 // pred_check
        %p237 = pneg %p124
      $region26: #{_lambda_.1} parent=11 // pred_check_branch
        %239 = sbr.rel (%p237) target = $region28
      $region27: #{_lambda_.1} parent=11 // pred_region
        _
      $region28: #{_lambda_.1} parent=11 // pred_fallthru
        _
      // Predicated region
      $region29: #{_lambda_.1} parent=11 // pred_check
        %p240 = pneg %p145
      $region30: #{_lambda_.1} parent=11 // pred_check_branch
        %242 = sbr.rel (%p240) target = $region32
      $region31: #{_lambda_.1} parent=11 // pred_region
        _
      $region32: #{_lambda_.1} parent=11 // pred_fallthru
        _
      // Predicated region
      $region33: #{_lambda_.1} parent=11 // pred_check
        %p243 = pneg %p166
      $region34: #{_lambda_.1} parent=11 // pred_check_branch
        %245 = sbr.rel (%p243) target = $region36
      $region35: #{_lambda_.1} parent=11 // pred_region
        _
      $region36: #{_lambda_.1} parent=11 // pred_fallthru
        _
      // Predicated region
      $region37: #{_lambda_.1} parent=11 // pred_check
        %p246 = pneg %p187
      $region38: #{_lambda_.1} parent=11 // pred_check_branch
        %248 = sbr.rel (%p246) target = $region40
      $region39: #{_lambda_.1} parent=11 // pred_region
        _
      $region40: #{_lambda_.1} parent=11 // pred_fallthru
        _
    $region12: #{_lambda_.1} parent=5 // pred_fallthru
      _
    %p249 = scmp.lt.s32.totalorder %s14, 2
    // Predicated region
    $region41: #{_lambda_.1} parent=5 // pred_check
      %p250 = pneg %p249
    $region42: #{_lambda_.1} parent=5 // pred_check_branch
      %252 = sbr.rel (%p250) target = $region44
    $region43: #{_lambda_.1} parent=5 // pred_region
      // Predicated region
      $region45: #{_lambda_.1} parent=43 // pred_check
        %p253 = pneg %p34
      $region46: #{_lambda_.1} parent=43 // pred_check_branch
        %255 = sbr.rel (%p253) target = $region48
      $region47: #{_lambda_.1} parent=43 // pred_region
        %p256 = scmp.lt.s32.totalorder %s14, 1
        %s257 = scalar_select %p256, %s14, 1
        %s258 = smul.addr %s257, 32
        %s259 = smul.addr %s258, 8
        %s260 = scalar_lea.vmem %s0, %s259
      $region48: #{_lambda_.1} parent=43 // pred_fallthru
        _
    $region44: #{_lambda_.1} parent=5 // pred_fallthru
      _
    %p261 = scmp.le.s32.totalorder 1, %s14
    %p262 = scmp.lt.s32.totalorder %s14, 3
    %p263 = pnand %p261, %p262
    %p264 = pneg %p263
    // Predicated region
    $region49: #{_lambda_.1} parent=5 // pred_check
      _
    $region50: #{_lambda_.1} parent=5 // pred_check_branch
      %266 = sbr.rel (%p263) target = $region52
    $region51: #{_lambda_.1} parent=5 // pred_region
      %s267 = ssub.s32 %s14, 1
      %p268 = scmp.lt.s32.totalorder %s19, 1
      %s269 = scalar_select %p268, %s19, 1
      %s270 = smul.addr %s269, 32
      %s271 = smul.addr %s270, 8
      %s272 = scalar_lea.vmem %s0, %s271
      %p273 = pneg %p40
      %p274 = pneg %p37
      %p275 = pneg %p61
      %p276 = pneg %p58
      %p277 = pneg %p82
      %p278 = pneg %p79
      %p279 = pneg %p103
      %p280 = pneg %p100
      %p281 = pneg %p124
      %p282 = pneg %p121
      %p283 = pneg %p145
      %p284 = pneg %p142
      %p285 = pneg %p166
      %p286 = pneg %p163
      %p287 = pneg %p187
      %p288 = pneg %p184
      %p289 = pneg %p213
      %p290 = pneg %p210
      %p291 = scmp.lt.s32.totalorder %s19, 1
      %s292 = scalar_select %p291, %s19, 1
      %s293 = smul.addr %s292, 32
      %s294 = smul.addr %s293, 8
      %s295 = scalar_lea.vmem %s8, %s294
      %p296 = scmp.lt.s32.totalorder %s19, 1
      %s297 = scalar_select %p296, %s19, 1
      %s298 = smul.addr %s297, 32
      %s299 = smul.addr %s298, 8
      %s300 = scalar_lea.vmem %s0, %s299
      %p301 = scmp.lt.s32.totalorder %s19, 1
      %s302 = scalar_select %p301, %s19, 1
      %s303 = smul.addr %s302, 32
      %s304 = smul.addr %s303, 8
      %s305 = scalar_lea.vmem %s8, %s304
      %vm306 = vcmask 64512
      %307 = vst.msk [vmem:[#allocation2] sm:$0xff] %vm306, 0.0
      %308 = vst.msk [vmem:[#allocation2 + $0x8] sm:$0xff] %vm306, 0.0
      %vm309 = vcmask 58368
      %310 = vst.msk [vmem:[#allocation2 + $0x10] sm:$0x3] %vm309, 0.0
      %311 = vst.msk [vmem:[#allocation2 + $0x18] sm:$0xff] %vm306, 0.0
      %312 = vst.msk [vmem:[#allocation2 + $0x20] sm:$0xff] %vm306, 0.0
      %313 = vst.msk [vmem:[#allocation2 + $0x28] sm:$0x3] %vm309, 0.0
      %314 = vst.msk [vmem:[#allocation2 + $0x30] sm:$0xff] %vm306, 0.0
      %315 = vst.msk [vmem:[#allocation2 + $0x38] sm:$0xff] %vm306, 0.0
      %316 = vst.msk [vmem:[#allocation2 + $0x40] sm:$0x3] %vm309, 0.0
      %317 = vst.msk [vmem:[#allocation2 + $0x48] sm:$0xff] %vm306, 0.0
      %318 = vst.msk [vmem:[#allocation2 + $0x50] sm:$0xff] %vm306, 0.0
      %319 = vst.msk [vmem:[#allocation2 + $0x58] sm:$0x3] %vm309, 0.0
      %320 = vst.msk [vmem:[#allocation2 + $0x60] sm:$0xff] %vm306, 0.0
      %321 = vst.msk [vmem:[#allocation2 + $0x68] sm:$0xff] %vm306, 0.0
      %322 = vst.msk [vmem:[#allocation2 + $0x70] sm:$0x3] %vm309, 0.0
      %323 = vst.msk [vmem:[#allocation2 + $0x78] sm:$0xff] %vm306, 0.0
      %324 = vst.msk [vmem:[#allocation2 + $0x80] sm:$0xff] %vm306, 0.0
      %325 = vst.msk [vmem:[#allocation2 + $0x88] sm:$0x3] %vm309, 0.0
      %326 = vst.msk [vmem:[#allocation2 + $0x90] sm:$0xff] %vm306, 0.0
      %327 = vst.msk [vmem:[#allocation2 + $0x98] sm:$0xff] %vm306, 0.0
      %328 = vst.msk [vmem:[#allocation2 + $0xa0] sm:$0x3] %vm309, 0.0
      %329 = vst.msk [vmem:[#allocation2 + $0xa8] sm:$0xff] %vm306, 0.0
      %330 = vst.msk [vmem:[#allocation2 + $0xb0] sm:$0xff] %vm306, 0.0
      %331 = vst.msk [vmem:[#allocation2 + $0xb8] sm:$0x3] %vm309, 0.0
      %332 = vst.msk [vmem:[#allocation2 + $0xc0] sm:$0xff] %vm306, 0.0
      %333 = vst.msk [vmem:[#allocation2 + $0xc8] sm:$0xff] %vm306, 0.0
      %334 = vst.msk [vmem:[#allocation2 + $0xd0] sm:$0x3] %vm309, 0.0
      %335 = vst.msk [vmem:[#allocation2 + $0xd8] sm:$0xff] %vm306, 0.0
      %336 = vst.msk [vmem:[#allocation2 + $0xe0] sm:$0xff] %vm306, 0.0
      %337 = vst.msk [vmem:[#allocation2 + $0xe8] sm:$0x3] %vm309, 0.0
      %338 = vst.msk [vmem:[#allocation2 + $0xf0] sm:$0xff] %vm306, 0.0
      %339 = vst.msk [vmem:[#allocation2 + $0xf8] sm:$0xff] %vm306, 0.0
      %340 = vst.msk [vmem:[#allocation2 + $0x100] sm:$0x3] %vm309, 0.0
      %341 = vst.msk [vmem:[#allocation2 + $0x108] sm:$0xff] %vm306, 0.0
      %342 = vst.msk [vmem:[#allocation2 + $0x110] sm:$0xff] %vm306, 0.0
      %343 = vst.msk [vmem:[#allocation2 + $0x118] sm:$0x3] %vm309, 0.0
      %344 = vst.msk [vmem:[#allocation2 + $0x120] sm:$0xff] %vm306, 0.0
      %345 = vst.msk [vmem:[#allocation2 + $0x128] sm:$0xff] %vm306, 0.0
      %346 = vst.msk [vmem:[#allocation2 + $0x130] sm:$0x3] %vm309, 0.0
      %347 = vst.msk [vmem:[#allocation2 + $0x138] sm:$0xff] %vm306, 0.0
      %348 = vst.msk [vmem:[#allocation2 + $0x140] sm:$0xff] %vm306, 0.0
      %349 = vst.msk [vmem:[#allocation2 + $0x148] sm:$0x3] %vm309, 0.0
      %350 = vst.msk [vmem:[#allocation2 + $0x150] sm:$0xff] %vm306, 0.0
      %351 = vst.msk [vmem:[#allocation2 + $0x158] sm:$0xff] %vm306, 0.0
      %352 = vst.msk [vmem:[#allocation2 + $0x160] sm:$0x3] %vm309, 0.0
      %353 = vst.msk [vmem:[#allocation2 + $0x168] sm:$0xff] %vm306, 0.0
      %354 = vst.msk [vmem:[#allocation2 + $0x170] sm:$0xff] %vm306, 0.0
      %355 = vst.msk [vmem:[#allocation2 + $0x178] sm:$0x3] %vm309, 0.0
      %356 = vst.msk [vmem:[#allocation2 + $0x180] sm:$0xff] %vm306, 0.0
      %357 = vst.msk [vmem:[#allocation2 + $0x188] sm:$0xff] %vm306, 0.0
      %358 = vst.msk [vmem:[#allocation2 + $0x190] sm:$0x3] %vm309, 0.0
      %359 = vst.msk [vmem:[#allocation2 + $0x198] sm:$0xff] %vm306, 0.0
      %360 = vst.msk [vmem:[#allocation2 + $0x1a0] sm:$0xff] %vm306, 0.0
      %361 = vst.msk [vmem:[#allocation2 + $0x1a8] sm:$0x3] %vm309, 0.0
      %v362 = vld [vmem:[%s300] sm:$0xff]
      %v363 = vld [vmem:[%s300 + $0x8] sm:$0xff]
      %v364 = vld [vmem:[%s300 + $0x10] sm:$0xff]
      %v365 = vld [vmem:[%s300 + $0x18] sm:$0xff]
      %v366 = vld [vmem:[%s300 + $0x20] sm:$0xff]
      %v367 = vld [vmem:[%s300 + $0x28] sm:$0xff]
      %v368 = vld [vmem:[%s300 + $0x30] sm:$0xff]
      %v369 = vld [vmem:[%s300 + $0x38] sm:$0xff]
      %v370 = vld [vmem:[%s300 + $0x40] sm:$0xff]
      %v371 = vld [vmem:[%s300 + $0x48] sm:$0xff]
      %v372 = vld [vmem:[%s300 + $0x50] sm:$0xff]
      %v373 = vld [vmem:[%s300 + $0x58] sm:$0xff]
      %v374 = vld [vmem:[%s300 + $0x60] sm:$0xff]
      %v375 = vld [vmem:[%s300 + $0x68] sm:$0xff]
      %v376 = vld [vmem:[%s300 + $0x70] sm:$0xff]
      %v377 = vld [vmem:[%s300 + $0x78] sm:$0xff]
      %v378 = vld [vmem:[%s300 + $0x80] sm:$0xff]
      %v379 = vld [vmem:[%s300 + $0x88] sm:$0xff]
      %v380 = vld [vmem:[%s300 + $0x90] sm:$0xff]
      %v381 = vld [vmem:[%s300 + $0x98] sm:$0xff]
      %v382 = vld [vmem:[%s300 + $0xa0] sm:$0xff]
      %v383 = vld [vmem:[%s300 + $0xa8] sm:$0xff]
      %v384 = vld [vmem:[%s300 + $0xb0] sm:$0xff]
      %v385 = vld [vmem:[%s300 + $0xb8] sm:$0xff]
      %v386 = vld [vmem:[%s300 + $0xc0] sm:$0xff]
      %v387 = vld [vmem:[%s300 + $0xc8] sm:$0xff]
      %v388 = vld [vmem:[%s300 + $0xd0] sm:$0xff]
      %v389 = vld [vmem:[%s300 + $0xd8] sm:$0xff]
      %v390 = vld [vmem:[%s300 + $0xe0] sm:$0xff]
      %v391 = vld [vmem:[%s300 + $0xe8] sm:$0xff]
      %v392 = vld [vmem:[%s300 + $0xf0] sm:$0xff]
      %v393 = vld [vmem:[%s300 + $0xf8] sm:$0xff]
      %s394 = scalar_lea.vmem [#allocation2], 24
      %395 = vst.msk [vmem:[%s394 + $0x1] sm:$0xff] %vm306, %v362
      %396 = vst.msk [vmem:[%s394 + $0x9] sm:$0xff] %vm306, %v363
      %397 = vst.msk [vmem:[%s394 + $0x19] sm:$0xff] %vm306, %v364
      %398 = vst.msk [vmem:[%s394 + $0x21] sm:$0xff] %vm306, %v365
      %399 = vst.msk [vmem:[%s394 + $0x31] sm:$0xff] %vm306, %v366
      %400 = vst.msk [vmem:[%s394 + $0x39] sm:$0xff] %vm306, %v367
      %401 = vst.msk [vmem:[%s394 + $0x49] sm:$0xff] %vm306, %v368
      %402 = vst.msk [vmem:[%s394 + $0x51] sm:$0xff] %vm306, %v369
      %403 = vst.msk [vmem:[%s394 + $0x61] sm:$0xff] %vm306, %v370
      %404 = vst.msk [vmem:[%s394 + $0x69] sm:$0xff] %vm306, %v371
      %405 = vst.msk [vmem:[%s394 + $0x79] sm:$0xff] %vm306, %v372
      %406 = vst.msk [vmem:[%s394 + $0x81] sm:$0xff] %vm306, %v373
      %407 = vst.msk [vmem:[%s394 + $0x91] sm:$0xff] %vm306, %v374
      %408 = vst.msk [vmem:[%s394 + $0x99] sm:$0xff] %vm306, %v375
      %409 = vst.msk [vmem:[%s394 + $0xa9] sm:$0xff] %vm306, %v376
      %410 = vst.msk [vmem:[%s394 + $0xb1] sm:$0xff] %vm306, %v377
      %411 = vst.msk [vmem:[%s394 + $0xc1] sm:$0xff] %vm306, %v378
      %412 = vst.msk [vmem:[%s394 + $0xc9] sm:$0xff] %vm306, %v379
      %413 = vst.msk [vmem:[%s394 + $0xd9] sm:$0xff] %vm306, %v380
      %414 = vst.msk [vmem:[%s394 + $0xe1] sm:$0xff] %vm306, %v381
      %415 = vst.msk [vmem:[%s394 + $0xf1] sm:$0xff] %vm306, %v382
      %416 = vst.msk [vmem:[%s394 + $0xf9] sm:$0xff] %vm306, %v383
      %417 = vst.msk [vmem:[%s394 + $0x109] sm:$0xff] %vm306, %v384
      %418 = vst.msk [vmem:[%s394 + $0x111] sm:$0xff] %vm306, %v385
      %419 = vst.msk [vmem:[%s394 + $0x121] sm:$0xff] %vm306, %v386
      %420 = vst.msk [vmem:[%s394 + $0x129] sm:$0xff] %vm306, %v387
      %421 = vst.msk [vmem:[%s394 + $0x139] sm:$0xff] %vm306, %v388
      %422 = vst.msk [vmem:[%s394 + $0x141] sm:$0xff] %vm306, %v389
      %423 = vst.msk [vmem:[%s394 + $0x151] sm:$0xff] %vm306, %v390
      %424 = vst.msk [vmem:[%s394 + $0x159] sm:$0xff] %vm306, %v391
      %425 = vst.msk [vmem:[%s394 + $0x169] sm:$0xff] %vm306, %v392
      %426 = vst.msk [vmem:[%s394 + $0x171] sm:$0xff] %vm306, %v393
      %v427 = vld [vmem:[#allocation2] sm:$0xff]
      %v428 = vld [vmem:[#allocation2 + $0x8] sm:$0xff]
      %v429 = vld [vmem:[#allocation2 + $0x18] sm:$0xff]
      %v430 = vld [vmem:[#allocation2 + $0x20] sm:$0xff]
      %v431 = vld [vmem:[#allocation2 + $0x30] sm:$0xff]
      %v432 = vld [vmem:[#allocation2 + $0x38] sm:$0xff]
      %v433 = vld [vmem:[#allocation2 + $0x48] sm:$0xff]
      %v434 = vld [vmem:[#allocation2 + $0x50] sm:$0xff]
      %v435 = vld [vmem:[#allocation2 + $0x60] sm:$0xff]
      %v436 = vld [vmem:[#allocation2 + $0x68] sm:$0xff]
      %v437 = vld [vmem:[#allocation2 + $0x78] sm:$0xff]
      %v438 = vld [vmem:[#allocation2 + $0x80] sm:$0xff]
      %v439 = vld [vmem:[#allocation2 + $0x90] sm:$0xff]
      %v440 = vld [vmem:[#allocation2 + $0x98] sm:$0xff]
      %v441 = vld [vmem:[#allocation2 + $0xa8] sm:$0xff]
      %v442 = vld [vmem:[#allocation2 + $0xb0] sm:$0xff]
      %v443 = vld [vmem:[#allocation2 + $0xc0] sm:$0xff]
      %v444 = vld [vmem:[#allocation2 + $0xc8] sm:$0xff]
      %v445 = vld [vmem:[#allocation2 + $0xd8] sm:$0xff]
      %v446 = vld [vmem:[#allocation2 + $0xe0] sm:$0xff]
      %v447 = vld [vmem:[#allocation2 + $0xf0] sm:$0xff]
      %v448 = vld [vmem:[#allocation2 + $0xf8] sm:$0xff]
      %v449 = vld [vmem:[#allocation2 + $0x108] sm:$0xff]
      %v450 = vld [vmem:[#allocation2 + $0x110] sm:$0xff]
      %v451 = vld [vmem:[#allocation2 + $0x120] sm:$0xff]
      %v452 = vld [vmem:[#allocation2 + $0x128] sm:$0xff]
      %v453 = vld [vmem:[#allocation2 + $0x138] sm:$0xff]
      %v454 = vld [vmem:[#allocation2 + $0x140] sm:$0xff]
      %v455 = vld [vmem:[#allocation2 + $0x150] sm:$0xff]
      %v456 = vld [vmem:[#allocation2 + $0x158] sm:$0xff]
      %v457 = vld [vmem:[#allocation2 + $0x168] sm:$0xff]
      %v458 = vld [vmem:[#allocation2 + $0x170] sm:$0xff]
      %v459 = vld [vmem:[#allocation2 + $0x1] sm:$0xff]
      %v460 = vld [vmem:[#allocation2 + $0x9] sm:$0xff]
      %v461 = vld [vmem:[#allocation2 + $0x19] sm:$0xff]
      %v462 = vld [vmem:[#allocation2 + $0x21] sm:$0xff]
      %v463 = vld [vmem:[#allocation2 + $0x31] sm:$0xff]
      %v464 = vld [vmem:[#allocation2 + $0x39] sm:$0xff]
      %v465 = vld [vmem:[#allocation2 + $0x49] sm:$0xff]
      %v466 = vld [vmem:[#allocation2 + $0x51] sm:$0xff]
      %v467 = vld [vmem:[#allocation2 + $0x61] sm:$0xff]
      %v468 = vld [vmem:[#allocation2 + $0x69] sm:$0xff]
      %v469 = vld [vmem:[#allocation2 + $0x79] sm:$0xff]
      %v470 = vld [vmem:[#allocation2 + $0x81] sm:$0xff]
      %v471 = vld [vmem:[#allocation2 + $0x91] sm:$0xff]
      %v472 = vld [vmem:[#allocation2 + $0x99] sm:$0xff]
      %v473 = vld [vmem:[#allocation2 + $0xa9] sm:$0xff]
      %v474 = vld [vmem:[#allocation2 + $0xb1] sm:$0xff]
      %v475 = vld [vmem:[#allocation2 + $0xc1] sm:$0xff]
      %v476 = vld [vmem:[#allocation2 + $0xc9] sm:$0xff]
      %v477 = vld [vmem:[#allocation2 + $0xd9] sm:$0xff]
      %v478 = vld [vmem:[#allocation2 + $0xe1] sm:$0xff]
      %v479 = vld [vmem:[#allocation2 + $0xf1] sm:$0xff]
      %v480 = vld [vmem:[#allocation2 + $0xf9] sm:$0xff]
      %v481 = vld [vmem:[#allocation2 + $0x109] sm:$0xff]
      %v482 = vld [vmem:[#allocation2 + $0x111] sm:$0xff]
      %v483 = vld [vmem:[#allocation2 + $0x121] sm:$0xff]
      %v484 = vld [vmem:[#allocation2 + $0x129] sm:$0xff]
      %v485 = vld [vmem:[#allocation2 + $0x139] sm:$0xff]
      %v486 = vld [vmem:[#allocation2 + $0x141] sm:$0xff]
      %v487 = vld [vmem:[#allocation2 + $0x151] sm:$0xff]
      %v488 = vld [vmem:[#allocation2 + $0x159] sm:$0xff]
      %v489 = vld [vmem:[#allocation2 + $0x169] sm:$0xff]
      %v490 = vld [vmem:[#allocation2 + $0x171] sm:$0xff]
      %v491 = vld [vmem:[#allocation2 + $0x2] sm:$0xff]
      %v492 = vld [vmem:[#allocation2 + $0xa] sm:$0xff]
      %v493 = vld [vmem:[#allocation2 + $0x1a] sm:$0xff]
      %v494 = vld [vmem:[#allocation2 + $0x22] sm:$0xff]
      %v495 = vld [vmem:[#allocation2 + $0x32] sm:$0xff]
      %v496 = vld [vmem:[#allocation2 + $0x3a] sm:$0xff]
      %v497 = vld [vmem:[#allocation2 + $0x4a] sm:$0xff]
      %v498 = vld [vmem:[#allocation2 + $0x52] sm:$0xff]
      %v499 = vld [vmem:[#allocation2 + $0x62] sm:$0xff]
      %v500 = vld [vmem:[#allocation2 + $0x6a] sm:$0xff]
      %v501 = vld [vmem:[#allocation2 + $0x7a] sm:$0xff]
      %v502 = vld [vmem:[#allocation2 + $0x82] sm:$0xff]
      %v503 = vld [vmem:[#allocation2 + $0x92] sm:$0xff]
      %v504 = vld [vmem:[#allocation2 + $0x9a] sm:$0xff]
      %v505 = vld [vmem:[#allocation2 + $0xaa] sm:$0xff]
      %v506 = vld [vmem:[#allocation2 + $0xb2] sm:$0xff]
      %v507 = vld [vmem:[#allocation2 + $0xc2] sm:$0xff]
      %v508 = vld [vmem:[#allocation2 + $0xca] sm:$0xff]
      %v509 = vld [vmem:[#allocation2 + $0xda] sm:$0xff]
      %v510 = vld [vmem:[#allocation2 + $0xe2] sm:$0xff]
      %v511 = vld [vmem:[#allocation2 + $0xf2] sm:$0xff]
      %v512 = vld [vmem:[#allocation2 + $0xfa] sm:$0xff]
      %v513 = vld [vmem:[#allocation2 + $0x10a] sm:$0xff]
      %v514 = vld [vmem:[#allocation2 + $0x112] sm:$0xff]
      %v515 = vld [vmem:[#allocation2 + $0x122] sm:$0xff]
      %v516 = vld [vmem:[#allocation2 + $0x12a] sm:$0xff]
      %v517 = vld [vmem:[#allocation2 + $0x13a] sm:$0xff]
      %v518 = vld [vmem:[#allocation2 + $0x142] sm:$0xff]
      %v519 = vld [vmem:[#allocation2 + $0x152] sm:$0xff]
      %v520 = vld [vmem:[#allocation2 + $0x15a] sm:$0xff]
      %v521 = vld [vmem:[#allocation2 + $0x16a] sm:$0xff]
      %v522 = vld [vmem:[#allocation2 + $0x172] sm:$0xff]
      %v523 = vld [vmem:[%s394] sm:$0xff]
      %v524 = vld [vmem:[%s394 + $0x8] sm:$0xff]
      %v525 = vld [vmem:[%s394 + $0x18] sm:$0xff]
      %v526 = vld [vmem:[%s394 + $0x20] sm:$0xff]
      %v527 = vld [vmem:[%s394 + $0x30] sm:$0xff]
      %v528 = vld [vmem:[%s394 + $0x38] sm:$0xff]
      %v529 = vld [vmem:[%s394 + $0x48] sm:$0xff]
      %v530 = vld [vmem:[%s394 + $0x50] sm:$0xff]
      %v531 = vld [vmem:[%s394 + $0x60] sm:$0xff]
      %v532 = vld [vmem:[%s394 + $0x68] sm:$0xff]
      %v533 = vld [vmem:[%s394 + $0x78] sm:$0xff]
      %v534 = vld [vmem:[%s394 + $0x80] sm:$0xff]
      %v535 = vld [vmem:[%s394 + $0x90] sm:$0xff]
      %v536 = vld [vmem:[%s394 + $0x98] sm:$0xff]
      %v537 = vld [vmem:[%s394 + $0xa8] sm:$0xff]
      %v538 = vld [vmem:[%s394 + $0xb0] sm:$0xff]
      %v539 = vld [vmem:[%s394 + $0xc0] sm:$0xff]
      %v540 = vld [vmem:[%s394 + $0xc8] sm:$0xff]
      %v541 = vld [vmem:[%s394 + $0xd8] sm:$0xff]
      %v542 = vld [vmem:[%s394 + $0xe0] sm:$0xff]
      %v543 = vld [vmem:[%s394 + $0xf0] sm:$0xff]
      %v544 = vld [vmem:[%s394 + $0xf8] sm:$0xff]
      %v545 = vld [vmem:[%s394 + $0x108] sm:$0xff]
      %v546 = vld [vmem:[%s394 + $0x110] sm:$0xff]
      %v547 = vld [vmem:[%s394 + $0x120] sm:$0xff]
      %v548 = vld [vmem:[%s394 + $0x128] sm:$0xff]
      %v549 = vld [vmem:[%s394 + $0x138] sm:$0xff]
      %v550 = vld [vmem:[%s394 + $0x140] sm:$0xff]
      %v551 = vld [vmem:[%s394 + $0x150] sm:$0xff]
      %v552 = vld [vmem:[%s394 + $0x158] sm:$0xff]
      %v553 = vld [vmem:[%s394 + $0x168] sm:$0xff]
      %v554 = vld [vmem:[%s394 + $0x170] sm:$0xff]
      %v555 = vld [vmem:[%s394 + $0x1] sm:$0xff]
      %v556 = vld [vmem:[%s394 + $0x9] sm:$0xff]
      %v557 = vld [vmem:[%s394 + $0x19] sm:$0xff]
      %v558 = vld [vmem:[%s394 + $0x21] sm:$0xff]
      %v559 = vld [vmem:[%s394 + $0x31] sm:$0xff]
      %v560 = vld [vmem:[%s394 + $0x39] sm:$0xff]
      %v561 = vld [vmem:[%s394 + $0x49] sm:$0xff]
      %v562 = vld [vmem:[%s394 + $0x51] sm:$0xff]
      %v563 = vld [vmem:[%s394 + $0x61] sm:$0xff]
      %v564 = vld [vmem:[%s394 + $0x69] sm:$0xff]
      %v565 = vld [vmem:[%s394 + $0x79] sm:$0xff]
      %v566 = vld [vmem:[%s394 + $0x81] sm:$0xff]
      %v567 = vld [vmem:[%s394 + $0x91] sm:$0xff]
      %v568 = vld [vmem:[%s394 + $0x99] sm:$0xff]
      %v569 = vld [vmem:[%s394 + $0xa9] sm:$0xff]
      %v570 = vld [vmem:[%s394 + $0xb1] sm:$0xff]
      %v571 = vld [vmem:[%s394 + $0xc1] sm:$0xff]
      %v572 = vld [vmem:[%s394 + $0xc9] sm:$0xff]
      %v573 = vld [vmem:[%s394 + $0xd9] sm:$0xff]
      %v574 = vld [vmem:[%s394 + $0xe1] sm:$0xff]
      %v575 = vld [vmem:[%s394 + $0xf1] sm:$0xff]
      %v576 = vld [vmem:[%s394 + $0xf9] sm:$0xff]
      %v577 = vld [vmem:[%s394 + $0x109] sm:$0xff]
      %v578 = vld [vmem:[%s394 + $0x111] sm:$0xff]
      %v579 = vld [vmem:[%s394 + $0x121] sm:$0xff]
      %v580 = vld [vmem:[%s394 + $0x129] sm:$0xff]
      %v581 = vld [vmem:[%s394 + $0x139] sm:$0xff]
      %v582 = vld [vmem:[%s394 + $0x141] sm:$0xff]
      %v583 = vld [vmem:[%s394 + $0x151] sm:$0xff]
      %v584 = vld [vmem:[%s394 + $0x159] sm:$0xff]
      %v585 = vld [vmem:[%s394 + $0x169] sm:$0xff]
      %v586 = vld [vmem:[%s394 + $0x171] sm:$0xff]
      %v587 = vld [vmem:[%s394 + $0x2] sm:$0xff]
      %v588 = vld [vmem:[%s394 + $0xa] sm:$0xff]
      %v589 = vld [vmem:[%s394 + $0x1a] sm:$0xff]
      %v590 = vld [vmem:[%s394 + $0x22] sm:$0xff]
      %v591 = vld [vmem:[%s394 + $0x32] sm:$0xff]
      %v592 = vld [vmem:[%s394 + $0x3a] sm:$0xff]
      %v593 = vld [vmem:[%s394 + $0x4a] sm:$0xff]
      %v594 = vld [vmem:[%s394 + $0x52] sm:$0xff]
      %v595 = vld [vmem:[%s394 + $0x62] sm:$0xff]
      %v596 = vld [vmem:[%s394 + $0x6a] sm:$0xff]
      %v597 = vld [vmem:[%s394 + $0x7a] sm:$0xff]
      %v598 = vld [vmem:[%s394 + $0x82] sm:$0xff]
      %v599 = vld [vmem:[%s394 + $0x92] sm:$0xff]
      %v600 = vld [vmem:[%s394 + $0x9a] sm:$0xff]
      %v601 = vld [vmem:[%s394 + $0xaa] sm:$0xff]
      %v602 = vld [vmem:[%s394 + $0xb2] sm:$0xff]
      %v603 = vld [vmem:[%s394 + $0xc2] sm:$0xff]
      %v604 = vld [vmem:[%s394 + $0xca] sm:$0xff]
      %v605 = vld [vmem:[%s394 + $0xda] sm:$0xff]
      %v606 = vld [vmem:[%s394 + $0xe2] sm:$0xff]
      %v607 = vld [vmem:[%s394 + $0xf2] sm:$0xff]
      %v608 = vld [vmem:[%s394 + $0xfa] sm:$0xff]
      %v609 = vld [vmem:[%s394 + $0x10a] sm:$0xff]
      %v610 = vld [vmem:[%s394 + $0x112] sm:$0xff]
      %v611 = vld [vmem:[%s394 + $0x122] sm:$0xff]
      %v612 = vld [vmem:[%s394 + $0x12a] sm:$0xff]
      %v613 = vld [vmem:[%s394 + $0x13a] sm:$0xff]
      %v614 = vld [vmem:[%s394 + $0x142] sm:$0xff]
      %v615 = vld [vmem:[%s394 + $0x152] sm:$0xff]
      %v616 = vld [vmem:[%s394 + $0x15a] sm:$0xff]
      %v617 = vld [vmem:[%s394 + $0x16a] sm:$0xff]
      %v618 = vld [vmem:[%s394 + $0x172] sm:$0xff]
      %s619 = scalar_lea.vmem [#allocation2], 48
      %v620 = vld [vmem:[%s619] sm:$0xff]
      %v621 = vld [vmem:[%s619 + $0x8] sm:$0xff]
      %v622 = vld [vmem:[%s619 + $0x18] sm:$0xff]
      %v623 = vld [vmem:[%s619 + $0x20] sm:$0xff]
      %v624 = vld [vmem:[%s619 + $0x30] sm:$0xff]
      %v625 = vld [vmem:[%s619 + $0x38] sm:$0xff]
      %v626 = vld [vmem:[%s619 + $0x48] sm:$0xff]
      %v627 = vld [vmem:[%s619 + $0x50] sm:$0xff]
      %v628 = vld [vmem:[%s619 + $0x60] sm:$0xff]
      %v629 = vld [vmem:[%s619 + $0x68] sm:$0xff]
      %v630 = vld [vmem:[%s619 + $0x78] sm:$0xff]
      %v631 = vld [vmem:[%s619 + $0x80] sm:$0xff]
      %v632 = vld [vmem:[%s619 + $0x90] sm:$0xff]
      %v633 = vld [vmem:[%s619 + $0x98] sm:$0xff]
      %v634 = vld [vmem:[%s619 + $0xa8] sm:$0xff]
      %v635 = vld [vmem:[%s619 + $0xb0] sm:$0xff]
      %v636 = vld [vmem:[%s619 + $0xc0] sm:$0xff]
      %v637 = vld [vmem:[%s619 + $0xc8] sm:$0xff]
      %v638 = vld [vmem:[%s619 + $0xd8] sm:$0xff]
      %v639 = vld [vmem:[%s619 + $0xe0] sm:$0xff]
      %v640 = vld [vmem:[%s619 + $0xf0] sm:$0xff]
      %v641 = vld [vmem:[%s619 + $0xf8] sm:$0xff]
      %v642 = vld [vmem:[%s619 + $0x108] sm:$0xff]
      %v643 = vld [vmem:[%s619 + $0x110] sm:$0xff]
      %v644 = vld [vmem:[%s619 + $0x120] sm:$0xff]
      %v645 = vld [vmem:[%s619 + $0x128] sm:$0xff]
      %v646 = vld [vmem:[%s619 + $0x138] sm:$0xff]
      %v647 = vld [vmem:[%s619 + $0x140] sm:$0xff]
      %v648 = vld [vmem:[%s619 + $0x150] sm:$0xff]
      %v649 = vld [vmem:[%s619 + $0x158] sm:$0xff]
      %v650 = vld [vmem:[%s619 + $0x168] sm:$0xff]
      %v651 = vld [vmem:[%s619 + $0x170] sm:$0xff]
      %v652 = vld [vmem:[%s619 + $0x1] sm:$0xff]
      %v653 = vld [vmem:[%s619 + $0x9] sm:$0xff]
      %v654 = vld [vmem:[%s619 + $0x19] sm:$0xff]
      %v655 = vld [vmem:[%s619 + $0x21] sm:$0xff]
      %v656 = vld [vmem:[%s619 + $0x31] sm:$0xff]
      %v657 = vld [vmem:[%s619 + $0x39] sm:$0xff]
      %v658 = vld [vmem:[%s619 + $0x49] sm:$0xff]
      %v659 = vld [vmem:[%s619 + $0x51] sm:$0xff]
      %v660 = vld [vmem:[%s619 + $0x61] sm:$0xff]
      %v661 = vld [vmem:[%s619 + $0x69] sm:$0xff]
      %v662 = vld [vmem:[%s619 + $0x79] sm:$0xff]
      %v663 = vld [vmem:[%s619 + $0x81] sm:$0xff]
      %v664 = vld [vmem:[%s619 + $0x91] sm:$0xff]
      %v665 = vld [vmem:[%s619 + $0x99] sm:$0xff]
      %v666 = vld [vmem:[%s619 + $0xa9] sm:$0xff]
      %v667 = vld [vmem:[%s619 + $0xb1] sm:$0xff]
      %v668 = vld [vmem:[%s619 + $0xc1] sm:$0xff]
      %v669 = vld [vmem:[%s619 + $0xc9] sm:$0xff]
      %v670 = vld [vmem:[%s619 + $0xd9] sm:$0xff]
      %v671 = vld [vmem:[%s619 + $0xe1] sm:$0xff]
      %v672 = vld [vmem:[%s619 + $0xf1] sm:$0xff]
      %v673 = vld [vmem:[%s619 + $0xf9] sm:$0xff]
      %v674 = vld [vmem:[%s619 + $0x109] sm:$0xff]
      %v675 = vld [vmem:[%s619 + $0x111] sm:$0xff]
      %v676 = vld [vmem:[%s619 + $0x121] sm:$0xff]
      %v677 = vld [vmem:[%s619 + $0x129] sm:$0xff]
      %v678 = vld [vmem:[%s619 + $0x139] sm:$0xff]
      %v679 = vld [vmem:[%s619 + $0x141] sm:$0xff]
      %v680 = vld [vmem:[%s619 + $0x151] sm:$0xff]
      %v681 = vld [vmem:[%s619 + $0x159] sm:$0xff]
      %v682 = vld [vmem:[%s619 + $0x169] sm:$0xff]
      %v683 = vld [vmem:[%s619 + $0x171] sm:$0xff]
      %v684 = vld [vmem:[%s619 + $0x2] sm:$0xff]
      %v685 = vld [vmem:[%s619 + $0xa] sm:$0xff]
      %v686 = vld [vmem:[%s619 + $0x1a] sm:$0xff]
      %v687 = vld [vmem:[%s619 + $0x22] sm:$0xff]
      %v688 = vld [vmem:[%s619 + $0x32] sm:$0xff]
      %v689 = vld [vmem:[%s619 + $0x3a] sm:$0xff]
      %v690 = vld [vmem:[%s619 + $0x4a] sm:$0xff]
      %v691 = vld [vmem:[%s619 + $0x52] sm:$0xff]
      %v692 = vld [vmem:[%s619 + $0x62] sm:$0xff]
      %v693 = vld [vmem:[%s619 + $0x6a] sm:$0xff]
      %v694 = vld [vmem:[%s619 + $0x7a] sm:$0xff]
      %v695 = vld [vmem:[%s619 + $0x82] sm:$0xff]
      %v696 = vld [vmem:[%s619 + $0x92] sm:$0xff]
      %v697 = vld [vmem:[%s619 + $0x9a] sm:$0xff]
      %v698 = vld [vmem:[%s619 + $0xaa] sm:$0xff]
      %v699 = vld [vmem:[%s619 + $0xb2] sm:$0xff]
      %v700 = vld [vmem:[%s619 + $0xc2] sm:$0xff]
      %v701 = vld [vmem:[%s619 + $0xca] sm:$0xff]
      %v702 = vld [vmem:[%s619 + $0xda] sm:$0xff]
      %v703 = vld [vmem:[%s619 + $0xe2] sm:$0xff]
      %v704 = vld [vmem:[%s619 + $0xf2] sm:$0xff]
      %v705 = vld [vmem:[%s619 + $0xfa] sm:$0xff]
      %v706 = vld [vmem:[%s619 + $0x10a] sm:$0xff]
      %v707 = vld [vmem:[%s619 + $0x112] sm:$0xff]
      %v708 = vld [vmem:[%s619 + $0x122] sm:$0xff]
      %v709 = vld [vmem:[%s619 + $0x12a] sm:$0xff]
      %v710 = vld [vmem:[%s619 + $0x13a] sm:$0xff]
      %v711 = vld [vmem:[%s619 + $0x142] sm:$0xff]
      %v712 = vld [vmem:[%s619 + $0x152] sm:$0xff]
      %v713 = vld [vmem:[%s619 + $0x15a] sm:$0xff]
      %v714 = vld [vmem:[%s619 + $0x16a] sm:$0xff]
      %v715 = vld [vmem:[%s619 + $0x172] sm:$0xff]
      %748 = vrot.lane.b32.xlu0 %v459, 8
      %v749 = vpop.permute.xlu0 %748
      %750 = vrot.lane.b32.xlu0 %v460, 8
      %v751 = vpop.permute.xlu0 %750
      %752 = vrot.lane.b32.xlu0 %v461, 8
      %v753 = vpop.permute.xlu0 %752
      %754 = vrot.lane.b32.xlu0 %v462, 8
      %v755 = vpop.permute.xlu0 %754
      %756 = vrot.lane.b32.xlu0 %v463, 8
      %v757 = vpop.permute.xlu0 %756
      %758 = vrot.lane.b32.xlu0 %v464, 8
      %v759 = vpop.permute.xlu0 %758
      %760 = vrot.lane.b32.xlu0 %v465, 8
      %v761 = vpop.permute.xlu0 %760
      %762 = vrot.lane.b32.xlu0 %v466, 8
      %v763 = vpop.permute.xlu0 %762
      %764 = vrot.lane.b32.xlu0 %v467, 8
      %v765 = vpop.permute.xlu0 %764
      %766 = vrot.lane.b32.xlu0 %v468, 8
      %v767 = vpop.permute.xlu0 %766
      %768 = vrot.lane.b32.xlu0 %v469, 8
      %v769 = vpop.permute.xlu0 %768
      %770 = vrot.lane.b32.xlu0 %v470, 8
      %v771 = vpop.permute.xlu0 %770
      %772 = vrot.lane.b32.xlu0 %v471, 8
      %v773 = vpop.permute.xlu0 %772
      %774 = vrot.lane.b32.xlu0 %v472, 8
      %v775 = vpop.permute.xlu0 %774
      %776 = vrot.lane.b32.xlu0 %v473, 8
      %v777 = vpop.permute.xlu0 %776
      %778 = vrot.lane.b32.xlu0 %v474, 8
      %v779 = vpop.permute.xlu0 %778
      %780 = vrot.lane.b32.xlu0 %v475, 8
      %v781 = vpop.permute.xlu0 %780
      %782 = vrot.lane.b32.xlu0 %v476, 8
      %v783 = vpop.permute.xlu0 %782
      %784 = vrot.lane.b32.xlu0 %v477, 8
      %v785 = vpop.permute.xlu0 %784
      %786 = vrot.lane.b32.xlu0 %v478, 8
      %v787 = vpop.permute.xlu0 %786
      %788 = vrot.lane.b32.xlu0 %v479, 8
      %v789 = vpop.permute.xlu0 %788
      %790 = vrot.lane.b32.xlu0 %v480, 8
      %v791 = vpop.permute.xlu0 %790
      %792 = vrot.lane.b32.xlu0 %v481, 8
      %v793 = vpop.permute.xlu0 %792
      %794 = vrot.lane.b32.xlu0 %v482, 8
      %v795 = vpop.permute.xlu0 %794
      %796 = vrot.lane.b32.xlu0 %v483, 8
      %v797 = vpop.permute.xlu0 %796
      %798 = vrot.lane.b32.xlu0 %v484, 8
      %v799 = vpop.permute.xlu0 %798
      %800 = vrot.lane.b32.xlu0 %v485, 8
      %v801 = vpop.permute.xlu0 %800
      %802 = vrot.lane.b32.xlu0 %v486, 8
      %v803 = vpop.permute.xlu0 %802
      %804 = vrot.lane.b32.xlu0 %v487, 8
      %v805 = vpop.permute.xlu0 %804
      %806 = vrot.lane.b32.xlu0 %v488, 8
      %v807 = vpop.permute.xlu0 %806
      %808 = vrot.lane.b32.xlu0 %v489, 8
      %v809 = vpop.permute.xlu0 %808
      %810 = vrot.lane.b32.xlu0 %v490, 8
      %v811 = vpop.permute.xlu0 %810
      %876 = vrot.lane.b32.xlu0 %v491, 16
      %v877 = vpop.permute.xlu0 %876
      %878 = vrot.lane.b32.xlu0 %v492, 16
      %v879 = vpop.permute.xlu0 %878
      %880 = vrot.lane.b32.xlu0 %v493, 16
      %v881 = vpop.permute.xlu0 %880
      %882 = vrot.lane.b32.xlu0 %v494, 16
      %v883 = vpop.permute.xlu0 %882
      %884 = vrot.lane.b32.xlu0 %v495, 16
      %v885 = vpop.permute.xlu0 %884
      %886 = vrot.lane.b32.xlu0 %v496, 16
      %v887 = vpop.permute.xlu0 %886
      %888 = vrot.lane.b32.xlu0 %v497, 16
      %v889 = vpop.permute.xlu0 %888
      %890 = vrot.lane.b32.xlu0 %v498, 16
      %v891 = vpop.permute.xlu0 %890
      %892 = vrot.lane.b32.xlu0 %v499, 16
      %v893 = vpop.permute.xlu0 %892
      %894 = vrot.lane.b32.xlu0 %v500, 16
      %v895 = vpop.permute.xlu0 %894
      %896 = vrot.lane.b32.xlu0 %v501, 16
      %v897 = vpop.permute.xlu0 %896
      %898 = vrot.lane.b32.xlu0 %v502, 16
      %v899 = vpop.permute.xlu0 %898
      %900 = vrot.lane.b32.xlu0 %v503, 16
      %v901 = vpop.permute.xlu0 %900
      %902 = vrot.lane.b32.xlu0 %v504, 16
      %v903 = vpop.permute.xlu0 %902
      %904 = vrot.lane.b32.xlu0 %v505, 16
      %v905 = vpop.permute.xlu0 %904
      %906 = vrot.lane.b32.xlu0 %v506, 16
      %v907 = vpop.permute.xlu0 %906
      %908 = vrot.lane.b32.xlu0 %v507, 16
      %v909 = vpop.permute.xlu0 %908
      %910 = vrot.lane.b32.xlu0 %v508, 16
      %v911 = vpop.permute.xlu0 %910
      %912 = vrot.lane.b32.xlu0 %v509, 16
      %v913 = vpop.permute.xlu0 %912
      %914 = vrot.lane.b32.xlu0 %v510, 16
      %v915 = vpop.permute.xlu0 %914
      %916 = vrot.lane.b32.xlu0 %v511, 16
      %v917 = vpop.permute.xlu0 %916
      %918 = vrot.lane.b32.xlu0 %v512, 16
      %v919 = vpop.permute.xlu0 %918
      %920 = vrot.lane.b32.xlu0 %v513, 16
      %v921 = vpop.permute.xlu0 %920
      %922 = vrot.lane.b32.xlu0 %v514, 16
      %v923 = vpop.permute.xlu0 %922
      %924 = vrot.lane.b32.xlu0 %v515, 16
      %v925 = vpop.permute.xlu0 %924
      %926 = vrot.lane.b32.xlu0 %v516, 16
      %v927 = vpop.permute.xlu0 %926
      %928 = vrot.lane.b32.xlu0 %v517, 16
      %v929 = vpop.permute.xlu0 %928
      %930 = vrot.lane.b32.xlu0 %v518, 16
      %v931 = vpop.permute.xlu0 %930
      %932 = vrot.lane.b32.xlu0 %v519, 16
      %v933 = vpop.permute.xlu0 %932
      %934 = vrot.lane.b32.xlu0 %v520, 16
      %v935 = vpop.permute.xlu0 %934
      %936 = vrot.lane.b32.xlu0 %v521, 16
      %v937 = vpop.permute.xlu0 %936
      %938 = vrot.lane.b32.xlu0 %v522, 16
      %v939 = vpop.permute.xlu0 %938
      %1004 = vrot.lane.b32.xlu0 %v523, 24
      %v1005 = vpop.permute.xlu0 %1004
      %1006 = vrot.lane.b32.xlu0 %v524, 24
      %v1007 = vpop.permute.xlu0 %1006
      %1008 = vrot.lane.b32.xlu0 %v525, 24
      %v1009 = vpop.permute.xlu0 %1008
      %1010 = vrot.lane.b32.xlu0 %v526, 24
      %v1011 = vpop.permute.xlu0 %1010
      %1012 = vrot.lane.b32.xlu0 %v527, 24
      %v1013 = vpop.permute.xlu0 %1012
      %1014 = vrot.lane.b32.xlu0 %v528, 24
      %v1015 = vpop.permute.xlu0 %1014
      %1016 = vrot.lane.b32.xlu0 %v529, 24
      %v1017 = vpop.permute.xlu0 %1016
      %1018 = vrot.lane.b32.xlu0 %v530, 24
      %v1019 = vpop.permute.xlu0 %1018
      %1020 = vrot.lane.b32.xlu0 %v531, 24
      %v1021 = vpop.permute.xlu0 %1020
      %1022 = vrot.lane.b32.xlu0 %v532, 24
      %v1023 = vpop.permute.xlu0 %1022
      %1024 = vrot.lane.b32.xlu0 %v533, 24
      %v1025 = vpop.permute.xlu0 %1024
      %1026 = vrot.lane.b32.xlu0 %v534, 24
      %v1027 = vpop.permute.xlu0 %1026
      %1028 = vrot.lane.b32.xlu0 %v535, 24
      %v1029 = vpop.permute.xlu0 %1028
      %1030 = vrot.lane.b32.xlu0 %v536, 24
      %v1031 = vpop.permute.xlu0 %1030
      %1032 = vrot.lane.b32.xlu0 %v537, 24
      %v1033 = vpop.permute.xlu0 %1032
      %1034 = vrot.lane.b32.xlu0 %v538, 24
      %v1035 = vpop.permute.xlu0 %1034
      %1036 = vrot.lane.b32.xlu0 %v539, 24
      %v1037 = vpop.permute.xlu0 %1036
      %1038 = vrot.lane.b32.xlu0 %v540, 24
      %v1039 = vpop.permute.xlu0 %1038
      %1040 = vrot.lane.b32.xlu0 %v541, 24
      %v1041 = vpop.permute.xlu0 %1040
      %1042 = vrot.lane.b32.xlu0 %v542, 24
      %v1043 = vpop.permute.xlu0 %1042
      %1044 = vrot.lane.b32.xlu0 %v543, 24
      %v1045 = vpop.permute.xlu0 %1044
      %1046 = vrot.lane.b32.xlu0 %v544, 24
      %v1047 = vpop.permute.xlu0 %1046
      %1048 = vrot.lane.b32.xlu0 %v545, 24
      %v1049 = vpop.permute.xlu0 %1048
      %1050 = vrot.lane.b32.xlu0 %v546, 24
      %v1051 = vpop.permute.xlu0 %1050
      %1052 = vrot.lane.b32.xlu0 %v547, 24
      %v1053 = vpop.permute.xlu0 %1052
      %1054 = vrot.lane.b32.xlu0 %v548, 24
      %v1055 = vpop.permute.xlu0 %1054
      %1056 = vrot.lane.b32.xlu0 %v549, 24
      %v1057 = vpop.permute.xlu0 %1056
      %1058 = vrot.lane.b32.xlu0 %v550, 24
      %v1059 = vpop.permute.xlu0 %1058
      %1060 = vrot.lane.b32.xlu0 %v551, 24
      %v1061 = vpop.permute.xlu0 %1060
      %1062 = vrot.lane.b32.xlu0 %v552, 24
      %v1063 = vpop.permute.xlu0 %1062
      %1064 = vrot.lane.b32.xlu0 %v553, 24
      %v1065 = vpop.permute.xlu0 %1064
      %1066 = vrot.lane.b32.xlu0 %v554, 24
      %v1067 = vpop.permute.xlu0 %1066
      %1132 = vrot.lane.b32.xlu0 %v555, 32
      %v1133 = vpop.permute.xlu0 %1132
      %1134 = vrot.lane.b32.xlu0 %v556, 32
      %v1135 = vpop.permute.xlu0 %1134
      %1136 = vrot.lane.b32.xlu0 %v557, 32
      %v1137 = vpop.permute.xlu0 %1136
      %1138 = vrot.lane.b32.xlu0 %v558, 32
      %v1139 = vpop.permute.xlu0 %1138
      %1140 = vrot.lane.b32.xlu0 %v559, 32
      %v1141 = vpop.permute.xlu0 %1140
      %1142 = vrot.lane.b32.xlu0 %v560, 32
      %v1143 = vpop.permute.xlu0 %1142
      %1144 = vrot.lane.b32.xlu0 %v561, 32
      %v1145 = vpop.permute.xlu0 %1144
      %1146 = vrot.lane.b32.xlu0 %v562, 32
      %v1147 = vpop.permute.xlu0 %1146
      %1148 = vrot.lane.b32.xlu0 %v563, 32
      %v1149 = vpop.permute.xlu0 %1148
      %1150 = vrot.lane.b32.xlu0 %v564, 32
      %v1151 = vpop.permute.xlu0 %1150
      %1152 = vrot.lane.b32.xlu0 %v565, 32
      %v1153 = vpop.permute.xlu0 %1152
      %1154 = vrot.lane.b32.xlu0 %v566, 32
      %v1155 = vpop.permute.xlu0 %1154
      %1156 = vrot.lane.b32.xlu0 %v567, 32
      %v1157 = vpop.permute.xlu0 %1156
      %1158 = vrot.lane.b32.xlu0 %v568, 32
      %v1159 = vpop.permute.xlu0 %1158
      %1160 = vrot.lane.b32.xlu0 %v569, 32
      %v1161 = vpop.permute.xlu0 %1160
      %1162 = vrot.lane.b32.xlu0 %v570, 32
      %v1163 = vpop.permute.xlu0 %1162
      %1164 = vrot.lane.b32.xlu0 %v571, 32
      %v1165 = vpop.permute.xlu0 %1164
      %1166 = vrot.lane.b32.xlu0 %v572, 32
      %v1167 = vpop.permute.xlu0 %1166
      %1168 = vrot.lane.b32.xlu0 %v573, 32
      %v1169 = vpop.permute.xlu0 %1168
      %1170 = vrot.lane.b32.xlu0 %v574, 32
      %v1171 = vpop.permute.xlu0 %1170
      %1172 = vrot.lane.b32.xlu0 %v575, 32
      %v1173 = vpop.permute.xlu0 %1172
      %1174 = vrot.lane.b32.xlu0 %v576, 32
      %v1175 = vpop.permute.xlu0 %1174
      %1176 = vrot.lane.b32.xlu0 %v577, 32
      %v1177 = vpop.permute.xlu0 %1176
      %1178 = vrot.lane.b32.xlu0 %v578, 32
      %v1179 = vpop.permute.xlu0 %1178
      %1180 = vrot.lane.b32.xlu0 %v579, 32
      %v1181 = vpop.permute.xlu0 %1180
      %1182 = vrot.lane.b32.xlu0 %v580, 32
      %v1183 = vpop.permute.xlu0 %1182
      %1184 = vrot.lane.b32.xlu0 %v581, 32
      %v1185 = vpop.permute.xlu0 %1184
      %1186 = vrot.lane.b32.xlu0 %v582, 32
      %v1187 = vpop.permute.xlu0 %1186
      %1188 = vrot.lane.b32.xlu0 %v583, 32
      %v1189 = vpop.permute.xlu0 %1188
      %1190 = vrot.lane.b32.xlu0 %v584, 32
      %v1191 = vpop.permute.xlu0 %1190
      %1192 = vrot.lane.b32.xlu0 %v585, 32
      %v1193 = vpop.permute.xlu0 %1192
      %1194 = vrot.lane.b32.xlu0 %v586, 32
      %v1195 = vpop.permute.xlu0 %1194
      %1260 = vrot.lane.b32.xlu0 %v587, 40
      %v1261 = vpop.permute.xlu0 %1260
      %1262 = vrot.lane.b32.xlu0 %v588, 40
      %v1263 = vpop.permute.xlu0 %1262
      %1264 = vrot.lane.b32.xlu0 %v589, 40
      %v1265 = vpop.permute.xlu0 %1264
      %1266 = vrot.lane.b32.xlu0 %v590, 40
      %v1267 = vpop.permute.xlu0 %1266
      %1268 = vrot.lane.b32.xlu0 %v591, 40
      %v1269 = vpop.permute.xlu0 %1268
      %1270 = vrot.lane.b32.xlu0 %v592, 40
      %v1271 = vpop.permute.xlu0 %1270
      %1272 = vrot.lane.b32.xlu0 %v593, 40
      %v1273 = vpop.permute.xlu0 %1272
      %1274 = vrot.lane.b32.xlu0 %v594, 40
      %v1275 = vpop.permute.xlu0 %1274
      %1276 = vrot.lane.b32.xlu0 %v595, 40
      %v1277 = vpop.permute.xlu0 %1276
      %1278 = vrot.lane.b32.xlu0 %v596, 40
      %v1279 = vpop.permute.xlu0 %1278
      %1280 = vrot.lane.b32.xlu0 %v597, 40
      %v1281 = vpop.permute.xlu0 %1280
      %1282 = vrot.lane.b32.xlu0 %v598, 40
      %v1283 = vpop.permute.xlu0 %1282
      %1284 = vrot.lane.b32.xlu0 %v599, 40
      %v1285 = vpop.permute.xlu0 %1284
      %1286 = vrot.lane.b32.xlu0 %v600, 40
      %v1287 = vpop.permute.xlu0 %1286
      %1288 = vrot.lane.b32.xlu0 %v601, 40
      %v1289 = vpop.permute.xlu0 %1288
      %1290 = vrot.lane.b32.xlu0 %v602, 40
      %v1291 = vpop.permute.xlu0 %1290
      %1292 = vrot.lane.b32.xlu0 %v603, 40
      %v1293 = vpop.permute.xlu0 %1292
      %1294 = vrot.lane.b32.xlu0 %v604, 40
      %v1295 = vpop.permute.xlu0 %1294
      %1296 = vrot.lane.b32.xlu0 %v605, 40
      %v1297 = vpop.permute.xlu0 %1296
      %1298 = vrot.lane.b32.xlu0 %v606, 40
      %v1299 = vpop.permute.xlu0 %1298
      %1300 = vrot.lane.b32.xlu0 %v607, 40
      %v1301 = vpop.permute.xlu0 %1300
      %1302 = vrot.lane.b32.xlu0 %v608, 40
      %v1303 = vpop.permute.xlu0 %1302
      %1304 = vrot.lane.b32.xlu0 %v609, 40
      %v1305 = vpop.permute.xlu0 %1304
      %1306 = vrot.lane.b32.xlu0 %v610, 40
      %v1307 = vpop.permute.xlu0 %1306
      %1308 = vrot.lane.b32.xlu0 %v611, 40
      %v1309 = vpop.permute.xlu0 %1308
      %1310 = vrot.lane.b32.xlu0 %v612, 40
      %v1311 = vpop.permute.xlu0 %1310
      %1312 = vrot.lane.b32.xlu0 %v613, 40
      %v1313 = vpop.permute.xlu0 %1312
      %1314 = vrot.lane.b32.xlu0 %v614, 40
      %v1315 = vpop.permute.xlu0 %1314
      %1316 = vrot.lane.b32.xlu0 %v615, 40
      %v1317 = vpop.permute.xlu0 %1316
      %1318 = vrot.lane.b32.xlu0 %v616, 40
      %v1319 = vpop.permute.xlu0 %1318
      %1320 = vrot.lane.b32.xlu0 %v617, 40
      %v1321 = vpop.permute.xlu0 %1320
      %1322 = vrot.lane.b32.xlu0 %v618, 40
      %v1323 = vpop.permute.xlu0 %1322
      %1388 = vrot.lane.b32.xlu0 %v620, 48
      %v1389 = vpop.permute.xlu0 %1388
      %1390 = vrot.lane.b32.xlu0 %v621, 48
      %v1391 = vpop.permute.xlu0 %1390
      %1392 = vrot.lane.b32.xlu0 %v622, 48
      %v1393 = vpop.permute.xlu0 %1392
      %1394 = vrot.lane.b32.xlu0 %v623, 48
      %v1395 = vpop.permute.xlu0 %1394
      %1396 = vrot.lane.b32.xlu0 %v624, 48
      %v1397 = vpop.permute.xlu0 %1396
      %1398 = vrot.lane.b32.xlu0 %v625, 48
      %v1399 = vpop.permute.xlu0 %1398
      %1400 = vrot.lane.b32.xlu0 %v626, 48
      %v1401 = vpop.permute.xlu0 %1400
      %1402 = vrot.lane.b32.xlu0 %v627, 48
      %v1403 = vpop.permute.xlu0 %1402
      %1404 = vrot.lane.b32.xlu0 %v628, 48
      %v1405 = vpop.permute.xlu0 %1404
      %1406 = vrot.lane.b32.xlu0 %v629, 48
      %v1407 = vpop.permute.xlu0 %1406
      %1408 = vrot.lane.b32.xlu0 %v630, 48
      %v1409 = vpop.permute.xlu0 %1408
      %1410 = vrot.lane.b32.xlu0 %v631, 48
      %v1411 = vpop.permute.xlu0 %1410
      %1412 = vrot.lane.b32.xlu0 %v632, 48
      %v1413 = vpop.permute.xlu0 %1412
      %1414 = vrot.lane.b32.xlu0 %v633, 48
      %v1415 = vpop.permute.xlu0 %1414
      %1416 = vrot.lane.b32.xlu0 %v634, 48
      %v1417 = vpop.permute.xlu0 %1416
      %1418 = vrot.lane.b32.xlu0 %v635, 48
      %v1419 = vpop.permute.xlu0 %1418
      %1420 = vrot.lane.b32.xlu0 %v636, 48
      %v1421 = vpop.permute.xlu0 %1420
      %1422 = vrot.lane.b32.xlu0 %v637, 48
      %v1423 = vpop.permute.xlu0 %1422
      %1424 = vrot.lane.b32.xlu0 %v638, 48
      %v1425 = vpop.permute.xlu0 %1424
      %1426 = vrot.lane.b32.xlu0 %v639, 48
      %v1427 = vpop.permute.xlu0 %1426
      %1428 = vrot.lane.b32.xlu0 %v640, 48
      %v1429 = vpop.permute.xlu0 %1428
      %1430 = vrot.lane.b32.xlu0 %v641, 48
      %v1431 = vpop.permute.xlu0 %1430
      %1432 = vrot.lane.b32.xlu0 %v642, 48
      %v1433 = vpop.permute.xlu0 %1432
      %1434 = vrot.lane.b32.xlu0 %v643, 48
      %v1435 = vpop.permute.xlu0 %1434
      %1436 = vrot.lane.b32.xlu0 %v644, 48
      %v1437 = vpop.permute.xlu0 %1436
      %1438 = vrot.lane.b32.xlu0 %v645, 48
      %v1439 = vpop.permute.xlu0 %1438
      %1440 = vrot.lane.b32.xlu0 %v646, 48
      %v1441 = vpop.permute.xlu0 %1440
      %1442 = vrot.lane.b32.xlu0 %v647, 48
      %v1443 = vpop.permute.xlu0 %1442
      %1444 = vrot.lane.b32.xlu0 %v648, 48
      %v1445 = vpop.permute.xlu0 %1444
      %1446 = vrot.lane.b32.xlu0 %v649, 48
      %v1447 = vpop.permute.xlu0 %1446
      %1448 = vrot.lane.b32.xlu0 %v650, 48
      %v1449 = vpop.permute.xlu0 %1448
      %1450 = vrot.lane.b32.xlu0 %v651, 48
      %v1451 = vpop.permute.xlu0 %1450
      %1516 = vrot.lane.b32.xlu0 %v652, 56
      %v1517 = vpop.permute.xlu0 %1516
      %1518 = vrot.lane.b32.xlu0 %v653, 56
      %v1519 = vpop.permute.xlu0 %1518
      %1520 = vrot.lane.b32.xlu0 %v654, 56
      %v1521 = vpop.permute.xlu0 %1520
      %1522 = vrot.lane.b32.xlu0 %v655, 56
      %v1523 = vpop.permute.xlu0 %1522
      %1524 = vrot.lane.b32.xlu0 %v656, 56
      %v1525 = vpop.permute.xlu0 %1524
      %1526 = vrot.lane.b32.xlu0 %v657, 56
      %v1527 = vpop.permute.xlu0 %1526
      %1528 = vrot.lane.b32.xlu0 %v658, 56
      %v1529 = vpop.permute.xlu0 %1528
      %1530 = vrot.lane.b32.xlu0 %v659, 56
      %v1531 = vpop.permute.xlu0 %1530
      %1532 = vrot.lane.b32.xlu0 %v660, 56
      %v1533 = vpop.permute.xlu0 %1532
      %1534 = vrot.lane.b32.xlu0 %v661, 56
      %v1535 = vpop.permute.xlu0 %1534
      %1536 = vrot.lane.b32.xlu0 %v662, 56
      %v1537 = vpop.permute.xlu0 %1536
      %1538 = vrot.lane.b32.xlu0 %v663, 56
      %v1539 = vpop.permute.xlu0 %1538
      %1540 = vrot.lane.b32.xlu0 %v664, 56
      %v1541 = vpop.permute.xlu0 %1540
      %1542 = vrot.lane.b32.xlu0 %v665, 56
      %v1543 = vpop.permute.xlu0 %1542
      %1544 = vrot.lane.b32.xlu0 %v666, 56
      %v1545 = vpop.permute.xlu0 %1544
      %1546 = vrot.lane.b32.xlu0 %v667, 56
      %v1547 = vpop.permute.xlu0 %1546
      %1548 = vrot.lane.b32.xlu0 %v668, 56
      %v1549 = vpop.permute.xlu0 %1548
      %1550 = vrot.lane.b32.xlu0 %v669, 56
      %v1551 = vpop.permute.xlu0 %1550
      %1552 = vrot.lane.b32.xlu0 %v670, 56
      %v1553 = vpop.permute.xlu0 %1552
      %1554 = vrot.lane.b32.xlu0 %v671, 56
      %v1555 = vpop.permute.xlu0 %1554
      %1556 = vrot.lane.b32.xlu0 %v672, 56
      %v1557 = vpop.permute.xlu0 %1556
      %1558 = vrot.lane.b32.xlu0 %v673, 56
      %v1559 = vpop.permute.xlu0 %1558
      %1560 = vrot.lane.b32.xlu0 %v674, 56
      %v1561 = vpop.permute.xlu0 %1560
      %1562 = vrot.lane.b32.xlu0 %v675, 56
      %v1563 = vpop.permute.xlu0 %1562
      %1564 = vrot.lane.b32.xlu0 %v676, 56
      %v1565 = vpop.permute.xlu0 %1564
      %1566 = vrot.lane.b32.xlu0 %v677, 56
      %v1567 = vpop.permute.xlu0 %1566
      %1568 = vrot.lane.b32.xlu0 %v678, 56
      %v1569 = vpop.permute.xlu0 %1568
      %1570 = vrot.lane.b32.xlu0 %v679, 56
      %v1571 = vpop.permute.xlu0 %1570
      %1572 = vrot.lane.b32.xlu0 %v680, 56
      %v1573 = vpop.permute.xlu0 %1572
      %1574 = vrot.lane.b32.xlu0 %v681, 56
      %v1575 = vpop.permute.xlu0 %1574
      %1576 = vrot.lane.b32.xlu0 %v682, 56
      %v1577 = vpop.permute.xlu0 %1576
      %1578 = vrot.lane.b32.xlu0 %v683, 56
      %v1579 = vpop.permute.xlu0 %1578
      %1644 = vrot.lane.b32.xlu0 %v684, 64
      %v1645 = vpop.permute.xlu0 %1644
      %1646 = vrot.lane.b32.xlu0 %v685, 64
      %v1647 = vpop.permute.xlu0 %1646
      %1648 = vrot.lane.b32.xlu0 %v686, 64
      %v1649 = vpop.permute.xlu0 %1648
      %1650 = vrot.lane.b32.xlu0 %v687, 64
      %v1651 = vpop.permute.xlu0 %1650
      %1652 = vrot.lane.b32.xlu0 %v688, 64
      %v1653 = vpop.permute.xlu0 %1652
      %1654 = vrot.lane.b32.xlu0 %v689, 64
      %v1655 = vpop.permute.xlu0 %1654
      %1656 = vrot.lane.b32.xlu0 %v690, 64
      %v1657 = vpop.permute.xlu0 %1656
      %1658 = vrot.lane.b32.xlu0 %v691, 64
      %v1659 = vpop.permute.xlu0 %1658
      %1660 = vrot.lane.b32.xlu0 %v692, 64
      %v1661 = vpop.permute.xlu0 %1660
      %1662 = vrot.lane.b32.xlu0 %v693, 64
      %v1663 = vpop.permute.xlu0 %1662
      %1664 = vrot.lane.b32.xlu0 %v694, 64
      %v1665 = vpop.permute.xlu0 %1664
      %1666 = vrot.lane.b32.xlu0 %v695, 64
      %v1667 = vpop.permute.xlu0 %1666
      %1668 = vrot.lane.b32.xlu0 %v696, 64
      %v1669 = vpop.permute.xlu0 %1668
      %1670 = vrot.lane.b32.xlu0 %v697, 64
      %v1671 = vpop.permute.xlu0 %1670
      %1672 = vrot.lane.b32.xlu0 %v698, 64
      %v1673 = vpop.permute.xlu0 %1672
      %1674 = vrot.lane.b32.xlu0 %v699, 64
      %v1675 = vpop.permute.xlu0 %1674
      %1676 = vrot.lane.b32.xlu0 %v700, 64
      %v1677 = vpop.permute.xlu0 %1676
      %1678 = vrot.lane.b32.xlu0 %v701, 64
      %v1679 = vpop.permute.xlu0 %1678
      %1680 = vrot.lane.b32.xlu0 %v702, 64
      %v1681 = vpop.permute.xlu0 %1680
      %1682 = vrot.lane.b32.xlu0 %v703, 64
      %v1683 = vpop.permute.xlu0 %1682
      %1684 = vrot.lane.b32.xlu0 %v704, 64
      %v1685 = vpop.permute.xlu0 %1684
      %1686 = vrot.lane.b32.xlu0 %v705, 64
      %v1687 = vpop.permute.xlu0 %1686
      %1688 = vrot.lane.b32.xlu0 %v706, 64
      %v1689 = vpop.permute.xlu0 %1688
      %1690 = vrot.lane.b32.xlu0 %v707, 64
      %v1691 = vpop.permute.xlu0 %1690
      %1692 = vrot.lane.b32.xlu0 %v708, 64
      %v1693 = vpop.permute.xlu0 %1692
      %1694 = vrot.lane.b32.xlu0 %v709, 64
      %v1695 = vpop.permute.xlu0 %1694
      %1696 = vrot.lane.b32.xlu0 %v710, 64
      %v1697 = vpop.permute.xlu0 %1696
      %1698 = vrot.lane.b32.xlu0 %v711, 64
      %v1699 = vpop.permute.xlu0 %1698
      %1700 = vrot.lane.b32.xlu0 %v712, 64
      %v1701 = vpop.permute.xlu0 %1700
      %1702 = vrot.lane.b32.xlu0 %v713, 64
      %v1703 = vpop.permute.xlu0 %1702
      %1704 = vrot.lane.b32.xlu0 %v714, 64
      %v1705 = vpop.permute.xlu0 %1704
      %1706 = vrot.lane.b32.xlu0 %v715, 64
      %v1707 = vpop.permute.xlu0 %1706
      %v1740 = vsel %vm306, %v427, %v749
      %v1741 = vsel %vm306, %v428, %v751
      %v1742 = vsel %vm306, %v429, %v753
      %v1743 = vsel %vm306, %v430, %v755
      %v1744 = vsel %vm306, %v431, %v757
      %v1745 = vsel %vm306, %v432, %v759
      %v1746 = vsel %vm306, %v433, %v761
      %v1747 = vsel %vm306, %v434, %v763
      %v1748 = vsel %vm306, %v435, %v765
      %v1749 = vsel %vm306, %v436, %v767
      %v1750 = vsel %vm306, %v437, %v769
      %v1751 = vsel %vm306, %v438, %v771
      %v1752 = vsel %vm306, %v439, %v773
      %v1753 = vsel %vm306, %v440, %v775
      %v1754 = vsel %vm306, %v441, %v777
      %v1755 = vsel %vm306, %v442, %v779
      %v1756 = vsel %vm306, %v443, %v781
      %v1757 = vsel %vm306, %v444, %v783
      %v1758 = vsel %vm306, %v445, %v785
      %v1759 = vsel %vm306, %v446, %v787
      %v1760 = vsel %vm306, %v447, %v789
      %v1761 = vsel %vm306, %v448, %v791
      %v1762 = vsel %vm306, %v449, %v793
      %v1763 = vsel %vm306, %v450, %v795
      %v1764 = vsel %vm306, %v451, %v797
      %v1765 = vsel %vm306, %v452, %v799
      %v1766 = vsel %vm306, %v453, %v801
      %v1767 = vsel %vm306, %v454, %v803
      %v1768 = vsel %vm306, %v455, %v805
      %v1769 = vsel %vm306, %v456, %v807
      %v1770 = vsel %vm306, %v457, %v809
      %v1771 = vsel %vm306, %v458, %v811
      %vm1772 = vcmask 130048
      %v1773 = vsel %vm1772, %v1740, %v877
      %v1774 = vsel %vm1772, %v1741, %v879
      %v1775 = vsel %vm1772, %v1742, %v881
      %v1776 = vsel %vm1772, %v1743, %v883
      %v1777 = vsel %vm1772, %v1744, %v885
      %v1778 = vsel %vm1772, %v1745, %v887
      %v1779 = vsel %vm1772, %v1746, %v889
      %v1780 = vsel %vm1772, %v1747, %v891
      %v1781 = vsel %vm1772, %v1748, %v893
      %v1782 = vsel %vm1772, %v1749, %v895
      %v1783 = vsel %vm1772, %v1750, %v897
      %v1784 = vsel %vm1772, %v1751, %v899
      %v1785 = vsel %vm1772, %v1752, %v901
      %v1786 = vsel %vm1772, %v1753, %v903
      %v1787 = vsel %vm1772, %v1754, %v905
      %v1788 = vsel %vm1772, %v1755, %v907
      %v1789 = vsel %vm1772, %v1756, %v909
      %v1790 = vsel %vm1772, %v1757, %v911
      %v1791 = vsel %vm1772, %v1758, %v913
      %v1792 = vsel %vm1772, %v1759, %v915
      %v1793 = vsel %vm1772, %v1760, %v917
      %v1794 = vsel %vm1772, %v1761, %v919
      %v1795 = vsel %vm1772, %v1762, %v921
      %v1796 = vsel %vm1772, %v1763, %v923
      %v1797 = vsel %vm1772, %v1764, %v925
      %v1798 = vsel %vm1772, %v1765, %v927
      %v1799 = vsel %vm1772, %v1766, %v929
      %v1800 = vsel %vm1772, %v1767, %v931
      %v1801 = vsel %vm1772, %v1768, %v933
      %v1802 = vsel %vm1772, %v1769, %v935
      %v1803 = vsel %vm1772, %v1770, %v937
      %v1804 = vsel %vm1772, %v1771, %v939
      %vm1805 = vcmask 195584
      %v1806 = vsel %vm1805, %v1773, %v1005
      %v1807 = vsel %vm1805, %v1774, %v1007
      %v1808 = vsel %vm1805, %v1775, %v1009
      %v1809 = vsel %vm1805, %v1776, %v1011
      %v1810 = vsel %vm1805, %v1777, %v1013
      %v1811 = vsel %vm1805, %v1778, %v1015
      %v1812 = vsel %vm1805, %v1779, %v1017
      %v1813 = vsel %vm1805, %v1780, %v1019
      %v1814 = vsel %vm1805, %v1781, %v1021
      %v1815 = vsel %vm1805, %v1782, %v1023
      %v1816 = vsel %vm1805, %v1783, %v1025
      %v1817 = vsel %vm1805, %v1784, %v1027
      %v1818 = vsel %vm1805, %v1785, %v1029
      %v1819 = vsel %vm1805, %v1786, %v1031
      %v1820 = vsel %vm1805, %v1787, %v1033
      %v1821 = vsel %vm1805, %v1788, %v1035
      %v1822 = vsel %vm1805, %v1789, %v1037
      %v1823 = vsel %vm1805, %v1790, %v1039
      %v1824 = vsel %vm1805, %v1791, %v1041
      %v1825 = vsel %vm1805, %v1792, %v1043
      %v1826 = vsel %vm1805, %v1793, %v1045
      %v1827 = vsel %vm1805, %v1794, %v1047
      %v1828 = vsel %vm1805, %v1795, %v1049
      %v1829 = vsel %vm1805, %v1796, %v1051
      %v1830 = vsel %vm1805, %v1797, %v1053
      %v1831 = vsel %vm1805, %v1798, %v1055
      %v1832 = vsel %vm1805, %v1799, %v1057
      %v1833 = vsel %vm1805, %v1800, %v1059
      %v1834 = vsel %vm1805, %v1801, %v1061
      %v1835 = vsel %vm1805, %v1802, %v1063
      %v1836 = vsel %vm1805, %v1803, %v1065
      %v1837 = vsel %vm1805, %v1804, %v1067
      %vm1838 = vcmask 261120
      %v1839 = vsel %vm1838, %v1806, %v1133
      %v1840 = vsel %vm1838, %v1807, %v1135
      %v1841 = vsel %vm1838, %v1808, %v1137
      %v1842 = vsel %vm1838, %v1809, %v1139
      %v1843 = vsel %vm1838, %v1810, %v1141
      %v1844 = vsel %vm1838, %v1811, %v1143
      %v1845 = vsel %vm1838, %v1812, %v1145
      %v1846 = vsel %vm1838, %v1813, %v1147
      %v1847 = vsel %vm1838, %v1814, %v1149
      %v1848 = vsel %vm1838, %v1815, %v1151
      %v1849 = vsel %vm1838, %v1816, %v1153
      %v1850 = vsel %vm1838, %v1817, %v1155
      %v1851 = vsel %vm1838, %v1818, %v1157
      %v1852 = vsel %vm1838, %v1819, %v1159
      %v1853 = vsel %vm1838, %v1820, %v1161
      %v1854 = vsel %vm1838, %v1821, %v1163
      %v1855 = vsel %vm1838, %v1822, %v1165
      %v1856 = vsel %vm1838, %v1823, %v1167
      %v1857 = vsel %vm1838, %v1824, %v1169
      %v1858 = vsel %vm1838, %v1825, %v1171
      %v1859 = vsel %vm1838, %v1826, %v1173
      %v1860 = vsel %vm1838, %v1827, %v1175
      %v1861 = vsel %vm1838, %v1828, %v1177
      %v1862 = vsel %vm1838, %v1829, %v1179
      %v1863 = vsel %vm1838, %v1830, %v1181
      %v1864 = vsel %vm1838, %v1831, %v1183
      %v1865 = vsel %vm1838, %v1832, %v1185
      %v1866 = vsel %vm1838, %v1833, %v1187
      %v1867 = vsel %vm1838, %v1834, %v1189
      %v1868 = vsel %vm1838, %v1835, %v1191
      %v1869 = vsel %vm1838, %v1836, %v1193
      %v1870 = vsel %vm1838, %v1837, %v1195
      %vm1871 = vcmask 326656
      %v1872 = vsel %vm1871, %v1839, %v1261
      %v1873 = vsel %vm1871, %v1840, %v1263
      %v1874 = vsel %vm1871, %v1841, %v1265
      %v1875 = vsel %vm1871, %v1842, %v1267
      %v1876 = vsel %vm1871, %v1843, %v1269
      %v1877 = vsel %vm1871, %v1844, %v1271
      %v1878 = vsel %vm1871, %v1845, %v1273
      %v1879 = vsel %vm1871, %v1846, %v1275
      %v1880 = vsel %vm1871, %v1847, %v1277
      %v1881 = vsel %vm1871, %v1848, %v1279
      %v1882 = vsel %vm1871, %v1849, %v1281
      %v1883 = vsel %vm1871, %v1850, %v1283
      %v1884 = vsel %vm1871, %v1851, %v1285
      %v1885 = vsel %vm1871, %v1852, %v1287
      %v1886 = vsel %vm1871, %v1853, %v1289
      %v1887 = vsel %vm1871, %v1854, %v1291
      %v1888 = vsel %vm1871, %v1855, %v1293
      %v1889 = vsel %vm1871, %v1856, %v1295
      %v1890 = vsel %vm1871, %v1857, %v1297
      %v1891 = vsel %vm1871, %v1858, %v1299
      %v1892 = vsel %vm1871, %v1859, %v1301
      %v1893 = vsel %vm1871, %v1860, %v1303
      %v1894 = vsel %vm1871, %v1861, %v1305
      %v1895 = vsel %vm1871, %v1862, %v1307
      %v1896 = vsel %vm1871, %v1863, %v1309
      %v1897 = vsel %vm1871, %v1864, %v1311
      %v1898 = vsel %vm1871, %v1865, %v1313
      %v1899 = vsel %vm1871, %v1866, %v1315
      %v1900 = vsel %vm1871, %v1867, %v1317
      %v1901 = vsel %vm1871, %v1868, %v1319
      %v1902 = vsel %vm1871, %v1869, %v1321
      %v1903 = vsel %vm1871, %v1870, %v1323
      %vm1904 = vcmask 392192
      %v1905 = vsel %vm1904, %v1872, %v1389
      %v1906 = vsel %vm1904, %v1873, %v1391
      %v1907 = vsel %vm1904, %v1874, %v1393
      %v1908 = vsel %vm1904, %v1875, %v1395
      %v1909 = vsel %vm1904, %v1876, %v1397
      %v1910 = vsel %vm1904, %v1877, %v1399
      %v1911 = vsel %vm1904, %v1878, %v1401
      %v1912 = vsel %vm1904, %v1879, %v1403
      %v1913 = vsel %vm1904, %v1880, %v1405
      %v1914 = vsel %vm1904, %v1881, %v1407
      %v1915 = vsel %vm1904, %v1882, %v1409
      %v1916 = vsel %vm1904, %v1883, %v1411
      %v1917 = vsel %vm1904, %v1884, %v1413
      %v1918 = vsel %vm1904, %v1885, %v1415
      %v1919 = vsel %vm1904, %v1886, %v1417
      %v1920 = vsel %vm1904, %v1887, %v1419
      %v1921 = vsel %vm1904, %v1888, %v1421
      %v1922 = vsel %vm1904, %v1889, %v1423
      %v1923 = vsel %vm1904, %v1890, %v1425
      %v1924 = vsel %vm1904, %v1891, %v1427
      %v1925 = vsel %vm1904, %v1892, %v1429
      %v1926 = vsel %vm1904, %v1893, %v1431
      %v1927 = vsel %vm1904, %v1894, %v1433
      %v1928 = vsel %vm1904, %v1895, %v1435
      %v1929 = vsel %vm1904, %v1896, %v1437
      %v1930 = vsel %vm1904, %v1897, %v1439
      %v1931 = vsel %vm1904, %v1898, %v1441
      %v1932 = vsel %vm1904, %v1899, %v1443
      %v1933 = vsel %vm1904, %v1900, %v1445
      %v1934 = vsel %vm1904, %v1901, %v1447
      %v1935 = vsel %vm1904, %v1902, %v1449
      %v1936 = vsel %vm1904, %v1903, %v1451
      %vm1937 = vcmask 457728
      %v1938 = vsel %vm1937, %v1905, %v1517
      %v1939 = vsel %vm1937, %v1906, %v1519
      %v1940 = vsel %vm1937, %v1907, %v1521
      %v1941 = vsel %vm1937, %v1908, %v1523
      %v1942 = vsel %vm1937, %v1909, %v1525
      %v1943 = vsel %vm1937, %v1910, %v1527
      %v1944 = vsel %vm1937, %v1911, %v1529
      %v1945 = vsel %vm1937, %v1912, %v1531
      %v1946 = vsel %vm1937, %v1913, %v1533
      %v1947 = vsel %vm1937, %v1914, %v1535
      %v1948 = vsel %vm1937, %v1915, %v1537
      %v1949 = vsel %vm1937, %v1916, %v1539
      %v1950 = vsel %vm1937, %v1917, %v1541
      %v1951 = vsel %vm1937, %v1918, %v1543
      %v1952 = vsel %vm1937, %v1919, %v1545
      %v1953 = vsel %vm1937, %v1920, %v1547
      %v1954 = vsel %vm1937, %v1921, %v1549
      %v1955 = vsel %vm1937, %v1922, %v1551
      %v1956 = vsel %vm1937, %v1923, %v1553
      %v1957 = vsel %vm1937, %v1924, %v1555
      %v1958 = vsel %vm1937, %v1925, %v1557
      %v1959 = vsel %vm1937, %v1926, %v1559
      %v1960 = vsel %vm1937, %v1927, %v1561
      %v1961 = vsel %vm1937, %v1928, %v1563
      %v1962 = vsel %vm1937, %v1929, %v1565
      %v1963 = vsel %vm1937, %v1930, %v1567
      %v1964 = vsel %vm1937, %v1931, %v1569
      %v1965 = vsel %vm1937, %v1932, %v1571
      %v1966 = vsel %vm1937, %v1933, %v1573
      %v1967 = vsel %vm1937, %v1934, %v1575
      %v1968 = vsel %vm1937, %v1935, %v1577
      %v1969 = vsel %vm1937, %v1936, %v1579
      %vm1970 = vcmask 523264
      %v1971 = vsel %vm1970, %v1938, %v1645
      %v1972 = vsel %vm1970, %v1939, %v1647
      %v1973 = vsel %vm1970, %v1940, %v1649
      %v1974 = vsel %vm1970, %v1941, %v1651
      %v1975 = vsel %vm1970, %v1942, %v1653
      %v1976 = vsel %vm1970, %v1943, %v1655
      %v1977 = vsel %vm1970, %v1944, %v1657
      %v1978 = vsel %vm1970, %v1945, %v1659
      %v1979 = vsel %vm1970, %v1946, %v1661
      %v1980 = vsel %vm1970, %v1947, %v1663
      %v1981 = vsel %vm1970, %v1948, %v1665
      %v1982 = vsel %vm1970, %v1949, %v1667
      %v1983 = vsel %vm1970, %v1950, %v1669
      %v1984 = vsel %vm1970, %v1951, %v1671
      %v1985 = vsel %vm1970, %v1952, %v1673
      %v1986 = vsel %vm1970, %v1953, %v1675
      %v1987 = vsel %vm1970, %v1954, %v1677
      %v1988 = vsel %vm1970, %v1955, %v1679
      %v1989 = vsel %vm1970, %v1956, %v1681
      %v1990 = vsel %vm1970, %v1957, %v1683
      %v1991 = vsel %vm1970, %v1958, %v1685
      %v1992 = vsel %vm1970, %v1959, %v1687
      %v1993 = vsel %vm1970, %v1960, %v1689
      %v1994 = vsel %vm1970, %v1961, %v1691
      %v1995 = vsel %vm1970, %v1962, %v1693
      %v1996 = vsel %vm1970, %v1963, %v1695
      %v1997 = vsel %vm1970, %v1964, %v1697
      %v1998 = vsel %vm1970, %v1965, %v1699
      %v1999 = vsel %vm1970, %v1966, %v1701
      %v2000 = vsel %vm1970, %v1967, %v1703
      %v2001 = vsel %vm1970, %v1968, %v1705
      %v2002 = vsel %vm1970, %v1969, %v1707
      %vm2003 = vcmask 588800
      %v2004 = vsel %vm2003, %v1971, 0.0
      %v2005 = vsel %vm2003, %v1972, 0.0
      %v2006 = vsel %vm2003, %v1973, 0.0
      %v2007 = vsel %vm2003, %v1974, 0.0
      %v2008 = vsel %vm2003, %v1975, 0.0
      %v2009 = vsel %vm2003, %v1976, 0.0
      %v2010 = vsel %vm2003, %v1977, 0.0
      %v2011 = vsel %vm2003, %v1978, 0.0
      %v2012 = vsel %vm2003, %v1979, 0.0
      %v2013 = vsel %vm2003, %v1980, 0.0
      %v2014 = vsel %vm2003, %v1981, 0.0
      %v2015 = vsel %vm2003, %v1982, 0.0
      %v2016 = vsel %vm2003, %v1983, 0.0
      %v2017 = vsel %vm2003, %v1984, 0.0
      %v2018 = vsel %vm2003, %v1985, 0.0
      %v2019 = vsel %vm2003, %v1986, 0.0
      %v2020 = vsel %vm2003, %v1987, 0.0
      %v2021 = vsel %vm2003, %v1988, 0.0
      %v2022 = vsel %vm2003, %v1989, 0.0
      %v2023 = vsel %vm2003, %v1990, 0.0
      %v2024 = vsel %vm2003, %v1991, 0.0
      %v2025 = vsel %vm2003, %v1992, 0.0
      %v2026 = vsel %vm2003, %v1993, 0.0
      %v2027 = vsel %vm2003, %v1994, 0.0
      %v2028 = vsel %vm2003, %v1995, 0.0
      %v2029 = vsel %vm2003, %v1996, 0.0
      %v2030 = vsel %vm2003, %v1997, 0.0
      %v2031 = vsel %vm2003, %v1998, 0.0
      %v2032 = vsel %vm2003, %v1999, 0.0
      %v2033 = vsel %vm2003, %v2000, 0.0
      %v2034 = vsel %vm2003, %v2001, 0.0
      %v2035 = vsel %vm2003, %v2002, 0.0
      %v2036 = vpack.c.bf16 %v2004, %v2004
      %v2037 = vpack.c.bf16 %v2005, %v2005
      %v2038 = vpack.c.bf16 %v2006, %v2006
      %v2039 = vpack.c.bf16 %v2007, %v2007
      %v2040 = vpack.c.bf16 %v2008, %v2008
      %v2041 = vpack.c.bf16 %v2009, %v2009
      %v2042 = vpack.c.bf16 %v2010, %v2010
      %v2043 = vpack.c.bf16 %v2011, %v2011
      %v2044 = vpack.c.bf16 %v2012, %v2012
      %v2045 = vpack.c.bf16 %v2013, %v2013
      %v2046 = vpack.c.bf16 %v2014, %v2014
      %v2047 = vpack.c.bf16 %v2015, %v2015
      %v2048 = vpack.c.bf16 %v2016, %v2016
      %v2049 = vpack.c.bf16 %v2017, %v2017
      %v2050 = vpack.c.bf16 %v2018, %v2018
      %v2051 = vpack.c.bf16 %v2019, %v2019
      %v2052 = vpack.c.bf16 %v2020, %v2020
      %v2053 = vpack.c.bf16 %v2021, %v2021
      %v2054 = vpack.c.bf16 %v2022, %v2022
      %v2055 = vpack.c.bf16 %v2023, %v2023
      %v2056 = vpack.c.bf16 %v2024, %v2024
      %v2057 = vpack.c.bf16 %v2025, %v2025
      %v2058 = vpack.c.bf16 %v2026, %v2026
      %v2059 = vpack.c.bf16 %v2027, %v2027
      %v2060 = vpack.c.bf16 %v2028, %v2028
      %v2061 = vpack.c.bf16 %v2029, %v2029
      %v2062 = vpack.c.bf16 %v2030, %v2030
      %v2063 = vpack.c.bf16 %v2031, %v2031
      %v2064 = vpack.c.bf16 %v2032, %v2032
      %v2065 = vpack.c.bf16 %v2033, %v2033
      %v2066 = vpack.c.bf16 %v2034, %v2034
      %v2067 = vpack.c.bf16 %v2035, %v2035
      %v2068 = vld [vmem:[%s1] sm:$0xf]
      %v2069 = vld [vmem:[%s1 + $0x4] sm:$0xf]
      %v2070 = vld [vmem:[%s1 + $0x8] sm:$0xf]
      %v2071 = vld [vmem:[%s1 + $0xc] sm:$0xf]
      %v2072 = vld [vmem:[%s1 + $0x10] sm:$0xf]
      %v2073 = vld [vmem:[%s1 + $0x14] sm:$0xf]
      %v2074 = vld [vmem:[%s1 + $0x18] sm:$0xf]
      %v2075 = vld [vmem:[%s1 + $0x1c] sm:$0xf]
      %v2076 = vld [vmem:[%s1 + $0x20] sm:$0xf]
      %v2077 = vld [vmem:[%s1 + $0x24] sm:$0xf]
      %v2078 = vld [vmem:[%s1 + $0x28] sm:$0xf]
      %v2079 = vld [vmem:[%s1 + $0x2c] sm:$0xf]
      %v2080 = vld [vmem:[%s1 + $0x30] sm:$0xf]
      %v2081 = vld [vmem:[%s1 + $0x34] sm:$0xf]
      %v2082 = vld [vmem:[%s1 + $0x38] sm:$0xf]
      %v2083 = vld [vmem:[%s1 + $0x3c] sm:$0xf]
      %v2084 = vld [vmem:[%s2] sm:$0x1]
      %v2086 = vperm.slane %v2084, 0
      %v2120 = vunpack.c.l.b16 %v2036
      %v2121 = vunpack.c.l.b16 %v2037
      %v2122 = vunpack.c.l.b16 %v2038
      %v2123 = vunpack.c.l.b16 %v2039
      %v2124 = vunpack.c.l.b16 %v2040
      %v2125 = vunpack.c.l.b16 %v2041
      %v2126 = vunpack.c.l.b16 %v2042
      %v2127 = vunpack.c.l.b16 %v2043
      %v2128 = vunpack.c.l.b16 %v2044
      %v2129 = vunpack.c.l.b16 %v2045
      %v2130 = vunpack.c.l.b16 %v2046
      %v2131 = vunpack.c.l.b16 %v2047
      %v2132 = vunpack.c.l.b16 %v2048
      %v2133 = vunpack.c.l.b16 %v2049
      %v2134 = vunpack.c.l.b16 %v2050
      %v2135 = vunpack.c.l.b16 %v2051
      %v2136 = vunpack.c.l.b16 %v2052
      %v2137 = vunpack.c.l.b16 %v2053
      %v2138 = vunpack.c.l.b16 %v2054
      %v2139 = vunpack.c.l.b16 %v2055
      %v2140 = vunpack.c.l.b16 %v2056
      %v2141 = vunpack.c.l.b16 %v2057
      %v2142 = vunpack.c.l.b16 %v2058
      %v2143 = vunpack.c.l.b16 %v2059
      %v2144 = vunpack.c.l.b16 %v2060
      %v2145 = vunpack.c.l.b16 %v2061
      %v2146 = vunpack.c.l.b16 %v2062
      %v2147 = vunpack.c.l.b16 %v2063
      %v2148 = vunpack.c.l.b16 %v2064
      %v2149 = vunpack.c.l.b16 %v2065
      %v2150 = vunpack.c.l.b16 %v2066
      %v2151 = vunpack.c.l.b16 %v2067
      %v2152 = vpack.c.b16 %v2121, %v2120
      %v2153 = vpack.c.b16 %v2123, %v2122
      %v2154 = vpack.c.b16 %v2125, %v2124
      %v2155 = vpack.c.b16 %v2127, %v2126
      %v2156 = vpack.c.b16 %v2129, %v2128
      %v2157 = vpack.c.b16 %v2131, %v2130
      %v2158 = vpack.c.b16 %v2133, %v2132
      %v2159 = vpack.c.b16 %v2135, %v2134
      %v2160 = vpack.c.b16 %v2137, %v2136
      %v2161 = vpack.c.b16 %v2139, %v2138
      %v2162 = vpack.c.b16 %v2141, %v2140
      %v2163 = vpack.c.b16 %v2143, %v2142
      %v2164 = vpack.c.b16 %v2145, %v2144
      %v2165 = vpack.c.b16 %v2147, %v2146
      %v2166 = vpack.c.b16 %v2149, %v2148
      %v2167 = vpack.c.b16 %v2151, %v2150
      %v2200 = vunpack.c.l.b16 %v2068
      %v2201 = vunpack.c.l.b16 %v2069
      %v2202 = vunpack.c.l.b16 %v2070
      %v2203 = vunpack.c.l.b16 %v2071
      %v2204 = vunpack.c.l.b16 %v2072
      %v2205 = vunpack.c.l.b16 %v2073
      %v2206 = vunpack.c.l.b16 %v2074
      %v2207 = vunpack.c.l.b16 %v2075
      %v2208 = vunpack.c.l.b16 %v2076
      %v2209 = vunpack.c.l.b16 %v2077
      %v2210 = vunpack.c.l.b16 %v2078
      %v2211 = vunpack.c.l.b16 %v2079
      %v2212 = vunpack.c.l.b16 %v2080
      %v2213 = vunpack.c.l.b16 %v2081
      %v2214 = vunpack.c.l.b16 %v2082
      %v2215 = vunpack.c.l.b16 %v2083
      %v2216 = vpack.c.b16 %v2201, %v2200
      %v2217 = vpack.c.b16 %v2203, %v2202
      %v2218 = vpack.c.b16 %v2205, %v2204
      %v2219 = vpack.c.b16 %v2207, %v2206
      %v2220 = vpack.c.b16 %v2209, %v2208
      %v2221 = vpack.c.b16 %v2211, %v2210
      %v2222 = vpack.c.b16 %v2213, %v2212
      %v2223 = vpack.c.b16 %v2215, %v2214
      %2232 = vmatpush.bf16.msra.mxu0 %v2223
      %2233 = vmatpush.bf16.msra.mxu0 %v2222
      %2234 = vmatpush.bf16.msra.mxu0 %v2221
      %2235 = vmatpush.bf16.msra.mxu0 %v2220
      %2236 = vmatpush.bf16.msra.mxu0 %v2219
      %2237 = vmatpush.bf16.msra.mxu0 %v2218
      %2238 = vmatpush.bf16.msra.mxu0 %v2217
      %2239 = vmatpush.bf16.msra.mxu0 %v2216
      %2240 = vmatmul.bf16.gmra.mxu0 %v2152
      %v2241 = vpop.f32.mrf.mxu0
      %v2242 = vadd.f32 %v2086, %v2241
      %v2243 = vpop.f32.mrf.mxu0
      %v2244 = vadd.f32 %v2086, %v2243
      %2245 = vmatmul.bf16.gmra.mxu0 %v2153
      %v2246 = vpop.f32.mrf.mxu0
      %v2247 = vadd.f32 %v2086, %v2246
      %v2248 = vpop.f32.mrf.mxu0
      %v2249 = vadd.f32 %v2086, %v2248
      %2250 = vmatmul.bf16.gmra.mxu0 %v2154
      %v2251 = vpop.f32.mrf.mxu0
      %v2252 = vadd.f32 %v2086, %v2251
      %v2253 = vpop.f32.mrf.mxu0
      %v2254 = vadd.f32 %v2086, %v2253
      %2255 = vmatmul.bf16.gmra.mxu0 %v2155
      %v2256 = vpop.f32.mrf.mxu0
      %v2257 = vadd.f32 %v2086, %v2256
      %v2258 = vpop.f32.mrf.mxu0
      %v2259 = vadd.f32 %v2086, %v2258
      %2260 = vmatmul.bf16.gmra.mxu0 %v2156
      %v2261 = vpop.f32.mrf.mxu0
      %v2262 = vadd.f32 %v2086, %v2261
      %v2263 = vpop.f32.mrf.mxu0
      %v2264 = vadd.f32 %v2086, %v2263
      %2265 = vmatmul.bf16.gmra.mxu0 %v2157
      %v2266 = vpop.f32.mrf.mxu0
      %v2267 = vadd.f32 %v2086, %v2266
      %v2268 = vpop.f32.mrf.mxu0
      %v2269 = vadd.f32 %v2086, %v2268
      %2270 = vmatmul.bf16.gmra.mxu0 %v2158
      %v2271 = vpop.f32.mrf.mxu0
      %v2272 = vadd.f32 %v2086, %v2271
      %v2273 = vpop.f32.mrf.mxu0
      %v2274 = vadd.f32 %v2086, %v2273
      %2275 = vmatmul.bf16.gmra.mxu0 %v2159
      %v2276 = vpop.f32.mrf.mxu0
      %v2277 = vadd.f32 %v2086, %v2276
      %v2278 = vpop.f32.mrf.mxu0
      %v2279 = vadd.f32 %v2086, %v2278
      %2280 = vmatmul.bf16.gmra.mxu0 %v2160
      %v2281 = vpop.f32.mrf.mxu0
      %v2282 = vadd.f32 %v2086, %v2281
      %v2283 = vpop.f32.mrf.mxu0
      %v2284 = vadd.f32 %v2086, %v2283
      %2285 = vmatmul.bf16.gmra.mxu0 %v2161
      %v2286 = vpop.f32.mrf.mxu0
      %v2287 = vadd.f32 %v2086, %v2286
      %v2288 = vpop.f32.mrf.mxu0
      %v2289 = vadd.f32 %v2086, %v2288
      %2290 = vmatmul.bf16.gmra.mxu0 %v2162
      %v2291 = vpop.f32.mrf.mxu0
      %v2292 = vadd.f32 %v2086, %v2291
      %v2293 = vpop.f32.mrf.mxu0
      %v2294 = vadd.f32 %v2086, %v2293
      %2295 = vmatmul.bf16.gmra.mxu0 %v2163
      %v2296 = vpop.f32.mrf.mxu0
      %v2297 = vadd.f32 %v2086, %v2296
      %v2298 = vpop.f32.mrf.mxu0
      %v2299 = vadd.f32 %v2086, %v2298
      %2300 = vmatmul.bf16.gmra.mxu0 %v2164
      %v2301 = vpop.f32.mrf.mxu0
      %v2302 = vadd.f32 %v2086, %v2301
      %v2303 = vpop.f32.mrf.mxu0
      %v2304 = vadd.f32 %v2086, %v2303
      %2305 = vmatmul.bf16.gmra.mxu0 %v2165
      %v2306 = vpop.f32.mrf.mxu0
      %v2307 = vadd.f32 %v2086, %v2306
      %v2308 = vpop.f32.mrf.mxu0
      %v2309 = vadd.f32 %v2086, %v2308
      %2310 = vmatmul.bf16.gmra.mxu0 %v2166
      %v2311 = vpop.f32.mrf.mxu0
      %v2312 = vadd.f32 %v2086, %v2311
      %v2313 = vpop.f32.mrf.mxu0
      %v2314 = vadd.f32 %v2086, %v2313
      %2315 = vmatmul.bf16.gmra.mxu0 %v2167
      %v2316 = vpop.f32.mrf.mxu0
      %v2317 = vadd.f32 %v2086, %v2316
      %v2318 = vpop.f32.mrf.mxu0
      %v2319 = vadd.f32 %v2086, %v2318
      %2320 = vdwg.mxu0
      %v2321 = vld [vmem:[%s3] sm:$0x1]
      %vm2322 = vcmp.gt.f32.partialorder %v2321, 0.5
      %v2323 = vmax.f32 %v2242, 0.0
      %v2324 = vmax.f32 %v2244, 0.0
      %v2325 = vmax.f32 %v2247, 0.0
      %v2326 = vmax.f32 %v2249, 0.0
      %v2327 = vmax.f32 %v2252, 0.0
      %v2328 = vmax.f32 %v2254, 0.0
      %v2329 = vmax.f32 %v2257, 0.0
      %v2330 = vmax.f32 %v2259, 0.0
      %v2331 = vmax.f32 %v2262, 0.0
      %v2332 = vmax.f32 %v2264, 0.0
      %v2333 = vmax.f32 %v2267, 0.0
      %v2334 = vmax.f32 %v2269, 0.0
      %v2335 = vmax.f32 %v2272, 0.0
      %v2336 = vmax.f32 %v2274, 0.0
      %v2337 = vmax.f32 %v2277, 0.0
      %v2338 = vmax.f32 %v2279, 0.0
      %v2339 = vmax.f32 %v2282, 0.0
      %v2340 = vmax.f32 %v2284, 0.0
      %v2341 = vmax.f32 %v2287, 0.0
      %v2342 = vmax.f32 %v2289, 0.0
      %v2343 = vmax.f32 %v2292, 0.0
      %v2344 = vmax.f32 %v2294, 0.0
      %v2345 = vmax.f32 %v2297, 0.0
      %v2346 = vmax.f32 %v2299, 0.0
      %v2347 = vmax.f32 %v2302, 0.0
      %v2348 = vmax.f32 %v2304, 0.0
      %v2349 = vmax.f32 %v2307, 0.0
      %v2350 = vmax.f32 %v2309, 0.0
      %v2351 = vmax.f32 %v2312, 0.0
      %v2352 = vmax.f32 %v2314, 0.0
      %v2353 = vmax.f32 %v2317, 0.0
      %v2354 = vmax.f32 %v2319, 0.0
      %v2355 = vsel %vm2322, 1, 0
      %v2356 = vperm.slane %v2355, 0
      %vm2357 = vcmp.eq.s32.totalorder %v2356, 1
      %v2358 = vsel %vm2357, %v2323, %v2242
      %v2359 = vsel %vm2357, %v2324, %v2244
      %v2360 = vsel %vm2357, %v2325, %v2247
      %v2361 = vsel %vm2357, %v2326, %v2249
      %v2362 = vsel %vm2357, %v2327, %v2252
      %v2363 = vsel %vm2357, %v2328, %v2254
      %v2364 = vsel %vm2357, %v2329, %v2257
      %v2365 = vsel %vm2357, %v2330, %v2259
      %v2366 = vsel %vm2357, %v2331, %v2262
      %v2367 = vsel %vm2357, %v2332, %v2264
      %v2368 = vsel %vm2357, %v2333, %v2267
      %v2369 = vsel %vm2357, %v2334, %v2269
      %v2370 = vsel %vm2357, %v2335, %v2272
      %v2371 = vsel %vm2357, %v2336, %v2274
      %v2372 = vsel %vm2357, %v2337, %v2277
      %v2373 = vsel %vm2357, %v2338, %v2279
      %v2374 = vsel %vm2357, %v2339, %v2282
      %v2375 = vsel %vm2357, %v2340, %v2284
      %v2376 = vsel %vm2357, %v2341, %v2287
      %v2377 = vsel %vm2357, %v2342, %v2289
      %v2378 = vsel %vm2357, %v2343, %v2292
      %v2379 = vsel %vm2357, %v2344, %v2294
      %v2380 = vsel %vm2357, %v2345, %v2297
      %v2381 = vsel %vm2357, %v2346, %v2299
      %v2382 = vsel %vm2357, %v2347, %v2302
      %v2383 = vsel %vm2357, %v2348, %v2304
      %v2384 = vsel %vm2357, %v2349, %v2307
      %v2385 = vsel %vm2357, %v2350, %v2309
      %v2386 = vsel %vm2357, %v2351, %v2312
      %v2387 = vsel %vm2357, %v2352, %v2314
      %v2388 = vsel %vm2357, %v2353, %v2317
      %v2389 = vsel %vm2357, %v2354, %v2319
      %2422 = vrot.lane.b32.xlu0 %v2358, 112
      %v2423 = vpop.permute.xlu0 %2422
      %2424 = vrot.lane.b32.xlu0 %v2359, 112
      %v2425 = vpop.permute.xlu0 %2424
      %2426 = vrot.lane.b32.xlu0 %v2360, 112
      %v2427 = vpop.permute.xlu0 %2426
      %2428 = vrot.lane.b32.xlu0 %v2361, 112
      %v2429 = vpop.permute.xlu0 %2428
      %2430 = vrot.lane.b32.xlu0 %v2362, 112
      %v2431 = vpop.permute.xlu0 %2430
      %2432 = vrot.lane.b32.xlu0 %v2363, 112
      %v2433 = vpop.permute.xlu0 %2432
      %2434 = vrot.lane.b32.xlu0 %v2364, 112
      %v2435 = vpop.permute.xlu0 %2434
      %2436 = vrot.lane.b32.xlu0 %v2365, 112
      %v2437 = vpop.permute.xlu0 %2436
      %2438 = vrot.lane.b32.xlu0 %v2366, 112
      %v2439 = vpop.permute.xlu0 %2438
      %2440 = vrot.lane.b32.xlu0 %v2367, 112
      %v2441 = vpop.permute.xlu0 %2440
      %2442 = vrot.lane.b32.xlu0 %v2368, 112
      %v2443 = vpop.permute.xlu0 %2442
      %2444 = vrot.lane.b32.xlu0 %v2369, 112
      %v2445 = vpop.permute.xlu0 %2444
      %2446 = vrot.lane.b32.xlu0 %v2370, 112
      %v2447 = vpop.permute.xlu0 %2446
      %2448 = vrot.lane.b32.xlu0 %v2371, 112
      %v2449 = vpop.permute.xlu0 %2448
      %2450 = vrot.lane.b32.xlu0 %v2372, 112
      %v2451 = vpop.permute.xlu0 %2450
      %2452 = vrot.lane.b32.xlu0 %v2373, 112
      %v2453 = vpop.permute.xlu0 %2452
      %2454 = vrot.lane.b32.xlu0 %v2374, 112
      %v2455 = vpop.permute.xlu0 %2454
      %2456 = vrot.lane.b32.xlu0 %v2375, 112
      %v2457 = vpop.permute.xlu0 %2456
      %2458 = vrot.lane.b32.xlu0 %v2376, 112
      %v2459 = vpop.permute.xlu0 %2458
      %2460 = vrot.lane.b32.xlu0 %v2377, 112
      %v2461 = vpop.permute.xlu0 %2460
      %2462 = vrot.lane.b32.xlu0 %v2378, 112
      %v2463 = vpop.permute.xlu0 %2462
      %2464 = vrot.lane.b32.xlu0 %v2379, 112
      %v2465 = vpop.permute.xlu0 %2464
      %2466 = vrot.lane.b32.xlu0 %v2380, 112
      %v2467 = vpop.permute.xlu0 %2466
      %2468 = vrot.lane.b32.xlu0 %v2381, 112
      %v2469 = vpop.permute.xlu0 %2468
      %2470 = vrot.lane.b32.xlu0 %v2382, 112
      %v2471 = vpop.permute.xlu0 %2470
      %2472 = vrot.lane.b32.xlu0 %v2383, 112
      %v2473 = vpop.permute.xlu0 %2472
      %2474 = vrot.lane.b32.xlu0 %v2384, 112
      %v2475 = vpop.permute.xlu0 %2474
      %2476 = vrot.lane.b32.xlu0 %v2385, 112
      %v2477 = vpop.permute.xlu0 %2476
      %2478 = vrot.lane.b32.xlu0 %v2386, 112
      %v2479 = vpop.permute.xlu0 %2478
      %2480 = vrot.lane.b32.xlu0 %v2387, 112
      %v2481 = vpop.permute.xlu0 %2480
      %2482 = vrot.lane.b32.xlu0 %v2388, 112
      %v2483 = vpop.permute.xlu0 %2482
      %2484 = vrot.lane.b32.xlu0 %v2389, 112
      %v2485 = vpop.permute.xlu0 %2484
      %v2518 = vadd.f32 %v2358, %v2423
      %v2519 = vadd.f32 %v2359, %v2425
      %v2520 = vadd.f32 %v2360, %v2427
      %v2521 = vadd.f32 %v2361, %v2429
      %v2522 = vadd.f32 %v2362, %v2431
      %v2523 = vadd.f32 %v2363, %v2433
      %v2524 = vadd.f32 %v2364, %v2435
      %v2525 = vadd.f32 %v2365, %v2437
      %v2526 = vadd.f32 %v2366, %v2439
      %v2527 = vadd.f32 %v2367, %v2441
      %v2528 = vadd.f32 %v2368, %v2443
      %v2529 = vadd.f32 %v2369, %v2445
      %v2530 = vadd.f32 %v2370, %v2447
      %v2531 = vadd.f32 %v2371, %v2449
      %v2532 = vadd.f32 %v2372, %v2451
      %v2533 = vadd.f32 %v2373, %v2453
      %v2534 = vadd.f32 %v2374, %v2455
      %v2535 = vadd.f32 %v2375, %v2457
      %v2536 = vadd.f32 %v2376, %v2459
      %v2537 = vadd.f32 %v2377, %v2461
      %v2538 = vadd.f32 %v2378, %v2463
      %v2539 = vadd.f32 %v2379, %v2465
      %v2540 = vadd.f32 %v2380, %v2467
      %v2541 = vadd.f32 %v2381, %v2469
      %v2542 = vadd.f32 %v2382, %v2471
      %v2543 = vadd.f32 %v2383, %v2473
      %v2544 = vadd.f32 %v2384, %v2475
      %v2545 = vadd.f32 %v2385, %v2477
      %v2546 = vadd.f32 %v2386, %v2479
      %v2547 = vadd.f32 %v2387, %v2481
      %v2548 = vadd.f32 %v2388, %v2483
      %v2549 = vadd.f32 %v2389, %v2485
      %2550 = vrot.lane.b32.xlu0 %v2358, 96
      %v2551 = vpop.permute.xlu0 %2550
      %2552 = vrot.lane.b32.xlu0 %v2359, 96
      %v2553 = vpop.permute.xlu0 %2552
      %2554 = vrot.lane.b32.xlu0 %v2360, 96
      %v2555 = vpop.permute.xlu0 %2554
      %2556 = vrot.lane.b32.xlu0 %v2361, 96
      %v2557 = vpop.permute.xlu0 %2556
      %2558 = vrot.lane.b32.xlu0 %v2362, 96
      %v2559 = vpop.permute.xlu0 %2558
      %2560 = vrot.lane.b32.xlu0 %v2363, 96
      %v2561 = vpop.permute.xlu0 %2560
      %2562 = vrot.lane.b32.xlu0 %v2364, 96
      %v2563 = vpop.permute.xlu0 %2562
      %2564 = vrot.lane.b32.xlu0 %v2365, 96
      %v2565 = vpop.permute.xlu0 %2564
      %2566 = vrot.lane.b32.xlu0 %v2366, 96
      %v2567 = vpop.permute.xlu0 %2566
      %2568 = vrot.lane.b32.xlu0 %v2367, 96
      %v2569 = vpop.permute.xlu0 %2568
      %2570 = vrot.lane.b32.xlu0 %v2368, 96
      %v2571 = vpop.permute.xlu0 %2570
      %2572 = vrot.lane.b32.xlu0 %v2369, 96
      %v2573 = vpop.permute.xlu0 %2572
      %2574 = vrot.lane.b32.xlu0 %v2370, 96
      %v2575 = vpop.permute.xlu0 %2574
      %2576 = vrot.lane.b32.xlu0 %v2371, 96
      %v2577 = vpop.permute.xlu0 %2576
      %2578 = vrot.lane.b32.xlu0 %v2372, 96
      %v2579 = vpop.permute.xlu0 %2578
      %2580 = vrot.lane.b32.xlu0 %v2373, 96
      %v2581 = vpop.permute.xlu0 %2580
      %2582 = vrot.lane.b32.xlu0 %v2374, 96
      %v2583 = vpop.permute.xlu0 %2582
      %2584 = vrot.lane.b32.xlu0 %v2375, 96
      %v2585 = vpop.permute.xlu0 %2584
      %2586 = vrot.lane.b32.xlu0 %v2376, 96
      %v2587 = vpop.permute.xlu0 %2586
      %2588 = vrot.lane.b32.xlu0 %v2377, 96
      %v2589 = vpop.permute.xlu0 %2588
      %2590 = vrot.lane.b32.xlu0 %v2378, 96
      %v2591 = vpop.permute.xlu0 %2590
      %2592 = vrot.lane.b32.xlu0 %v2379, 96
      %v2593 = vpop.permute.xlu0 %2592
      %2594 = vrot.lane.b32.xlu0 %v2380, 96
      %v2595 = vpop.permute.xlu0 %2594
      %2596 = vrot.lane.b32.xlu0 %v2381, 96
      %v2597 = vpop.permute.xlu0 %2596
      %2598 = vrot.lane.b32.xlu0 %v2382, 96
      %v2599 = vpop.permute.xlu0 %2598
      %2600 = vrot.lane.b32.xlu0 %v2383, 96
      %v2601 = vpop.permute.xlu0 %2600
      %2602 = vrot.lane.b32.xlu0 %v2384, 96
      %v2603 = vpop.permute.xlu0 %2602
      %2604 = vrot.lane.b32.xlu0 %v2385, 96
      %v2605 = vpop.permute.xlu0 %2604
      %2606 = vrot.lane.b32.xlu0 %v2386, 96
      %v2607 = vpop.permute.xlu0 %2606
      %2608 = vrot.lane.b32.xlu0 %v2387, 96
      %v2609 = vpop.permute.xlu0 %2608
      %2610 = vrot.lane.b32.xlu0 %v2388, 96
      %v2611 = vpop.permute.xlu0 %2610
      %2612 = vrot.lane.b32.xlu0 %v2389, 96
      %v2613 = vpop.permute.xlu0 %2612
      %v2646 = vadd.f32 %v2518, %v2551
      %v2647 = vadd.f32 %v2519, %v2553
      %v2648 = vadd.f32 %v2520, %v2555
      %v2649 = vadd.f32 %v2521, %v2557
      %v2650 = vadd.f32 %v2522, %v2559
      %v2651 = vadd.f32 %v2523, %v2561
      %v2652 = vadd.f32 %v2524, %v2563
      %v2653 = vadd.f32 %v2525, %v2565
      %v2654 = vadd.f32 %v2526, %v2567
      %v2655 = vadd.f32 %v2527, %v2569
      %v2656 = vadd.f32 %v2528, %v2571
      %v2657 = vadd.f32 %v2529, %v2573
      %v2658 = vadd.f32 %v2530, %v2575
      %v2659 = vadd.f32 %v2531, %v2577
      %v2660 = vadd.f32 %v2532, %v2579
      %v2661 = vadd.f32 %v2533, %v2581
      %v2662 = vadd.f32 %v2534, %v2583
      %v2663 = vadd.f32 %v2535, %v2585
      %v2664 = vadd.f32 %v2536, %v2587
      %v2665 = vadd.f32 %v2537, %v2589
      %v2666 = vadd.f32 %v2538, %v2591
      %v2667 = vadd.f32 %v2539, %v2593
      %v2668 = vadd.f32 %v2540, %v2595
      %v2669 = vadd.f32 %v2541, %v2597
      %v2670 = vadd.f32 %v2542, %v2599
      %v2671 = vadd.f32 %v2543, %v2601
      %v2672 = vadd.f32 %v2544, %v2603
      %v2673 = vadd.f32 %v2545, %v2605
      %v2674 = vadd.f32 %v2546, %v2607
      %v2675 = vadd.f32 %v2547, %v2609
      %v2676 = vadd.f32 %v2548, %v2611
      %v2677 = vadd.f32 %v2549, %v2613
      %v2678 = vpack.c.bf16 %v2359, %v2358
      %v2679 = vpack.c.bf16 %v2361, %v2360
      %v2680 = vpack.c.bf16 %v2363, %v2362
      %v2681 = vpack.c.bf16 %v2365, %v2364
      %v2682 = vpack.c.bf16 %v2367, %v2366
      %v2683 = vpack.c.bf16 %v2369, %v2368
      %v2684 = vpack.c.bf16 %v2371, %v2370
      %v2685 = vpack.c.bf16 %v2373, %v2372
      %v2686 = vpack.c.bf16 %v2375, %v2374
      %v2687 = vpack.c.bf16 %v2377, %v2376
      %v2688 = vpack.c.bf16 %v2379, %v2378
      %v2689 = vpack.c.bf16 %v2381, %v2380
      %v2690 = vpack.c.bf16 %v2383, %v2382
      %v2691 = vpack.c.bf16 %v2385, %v2384
      %v2692 = vpack.c.bf16 %v2387, %v2386
      %v2693 = vpack.c.bf16 %v2389, %v2388
      %v2694 = vld [vmem:[%s4] sm:$0xf]
      %v2695 = vld [vmem:[%s4 + $0x4] sm:$0xf]
      %v2696 = vld [vmem:[%s4 + $0x8] sm:$0xf]
      %v2697 = vld [vmem:[%s4 + $0xc] sm:$0xf]
      %v2698 = vld [vmem:[%s4 + $0x10] sm:$0xf]
      %v2699 = vld [vmem:[%s4 + $0x14] sm:$0xf]
      %v2700 = vld [vmem:[%s4 + $0x18] sm:$0xf]
      %v2701 = vld [vmem:[%s4 + $0x1c] sm:$0xf]
      %v2702 = vld [vmem:[%s4 + $0x20] sm:$0xf]
      %v2703 = vld [vmem:[%s4 + $0x24] sm:$0xf]
      %v2704 = vld [vmem:[%s4 + $0x28] sm:$0xf]
      %v2705 = vld [vmem:[%s4 + $0x2c] sm:$0xf]
      %v2706 = vld [vmem:[%s4 + $0x30] sm:$0xf]
      %v2707 = vld [vmem:[%s4 + $0x34] sm:$0xf]
      %v2708 = vld [vmem:[%s4 + $0x38] sm:$0xf]
      %v2709 = vld [vmem:[%s4 + $0x3c] sm:$0xf]
      %v2710 = vld [vmem:[%s5] sm:$0x1]
      %v2712 = vperm.slane %v2710, 0
      %v2730 = vunpack.c.l.b16 %v2694
      %v2731 = vunpack.c.l.b16 %v2695
      %v2732 = vunpack.c.l.b16 %v2696
      %v2733 = vunpack.c.l.b16 %v2697
      %v2734 = vunpack.c.l.b16 %v2698
      %v2735 = vunpack.c.l.b16 %v2699
      %v2736 = vunpack.c.l.b16 %v2700
      %v2737 = vunpack.c.l.b16 %v2701
      %v2738 = vunpack.c.l.b16 %v2702
      %v2739 = vunpack.c.l.b16 %v2703
      %v2740 = vunpack.c.l.b16 %v2704
      %v2741 = vunpack.c.l.b16 %v2705
      %v2742 = vunpack.c.l.b16 %v2706
      %v2743 = vunpack.c.l.b16 %v2707
      %v2744 = vunpack.c.l.b16 %v2708
      %v2745 = vunpack.c.l.b16 %v2709
      %v2746 = vpack.c.b16 %v2731, %v2730
      %v2747 = vpack.c.b16 %v2733, %v2732
      %v2748 = vpack.c.b16 %v2735, %v2734
      %v2749 = vpack.c.b16 %v2737, %v2736
      %v2750 = vpack.c.b16 %v2739, %v2738
      %v2751 = vpack.c.b16 %v2741, %v2740
      %v2752 = vpack.c.b16 %v2743, %v2742
      %v2753 = vpack.c.b16 %v2745, %v2744
      %2762 = vmatpush.bf16.msra.mxu0 %v2753
      %2763 = vmatpush.bf16.msra.mxu0 %v2752
      %2764 = vmatpush.bf16.msra.mxu0 %v2751
      %2765 = vmatpush.bf16.msra.mxu0 %v2750
      %2766 = vmatpush.bf16.msra.mxu0 %v2749
      %2767 = vmatpush.bf16.msra.mxu0 %v2748
      %2768 = vmatpush.bf16.msra.mxu0 %v2747
      %2769 = vmatpush.bf16.msra.mxu0 %v2746
      %2770 = vmatmul.bf16.gmra.mxu0 %v2678
      %v2771 = vpop.f32.mrf.mxu0
      %v2772 = vadd.f32 %v2712, %v2771
      %v2773 = vpop.f32.mrf.mxu0
      %v2774 = vadd.f32 %v2712, %v2773
      %2775 = vmatmul.bf16.gmra.mxu0 %v2679
      %v2776 = vpop.f32.mrf.mxu0
      %v2777 = vadd.f32 %v2712, %v2776
      %v2778 = vpop.f32.mrf.mxu0
      %v2779 = vadd.f32 %v2712, %v2778
      %2780 = vmatmul.bf16.gmra.mxu0 %v2680
      %v2781 = vpop.f32.mrf.mxu0
      %v2782 = vadd.f32 %v2712, %v2781
      %v2783 = vpop.f32.mrf.mxu0
      %v2784 = vadd.f32 %v2712, %v2783
      %2785 = vmatmul.bf16.gmra.mxu0 %v2681
      %v2786 = vpop.f32.mrf.mxu0
      %v2787 = vadd.f32 %v2712, %v2786
      %v2788 = vpop.f32.mrf.mxu0
      %v2789 = vadd.f32 %v2712, %v2788
      %2790 = vmatmul.bf16.gmra.mxu0 %v2682
      %v2791 = vpop.f32.mrf.mxu0
      %v2792 = vadd.f32 %v2712, %v2791
      %v2793 = vpop.f32.mrf.mxu0
      %v2794 = vadd.f32 %v2712, %v2793
      %2795 = vmatmul.bf16.gmra.mxu0 %v2683
      %v2796 = vpop.f32.mrf.mxu0
      %v2797 = vadd.f32 %v2712, %v2796
      %v2798 = vpop.f32.mrf.mxu0
      %v2799 = vadd.f32 %v2712, %v2798
      %2800 = vmatmul.bf16.gmra.mxu0 %v2684
      %v2801 = vpop.f32.mrf.mxu0
      %v2802 = vadd.f32 %v2712, %v2801
      %v2803 = vpop.f32.mrf.mxu0
      %v2804 = vadd.f32 %v2712, %v2803
      %2805 = vmatmul.bf16.gmra.mxu0 %v2685
      %v2806 = vpop.f32.mrf.mxu0
      %v2807 = vadd.f32 %v2712, %v2806
      %v2808 = vpop.f32.mrf.mxu0
      %v2809 = vadd.f32 %v2712, %v2808
      %2810 = vmatmul.bf16.gmra.mxu0 %v2686
      %v2811 = vpop.f32.mrf.mxu0
      %v2812 = vadd.f32 %v2712, %v2811
      %v2813 = vpop.f32.mrf.mxu0
      %v2814 = vadd.f32 %v2712, %v2813
      %2815 = vmatmul.bf16.gmra.mxu0 %v2687
      %v2816 = vpop.f32.mrf.mxu0
      %v2817 = vadd.f32 %v2712, %v2816
      %v2818 = vpop.f32.mrf.mxu0
      %v2819 = vadd.f32 %v2712, %v2818
      %2820 = vmatmul.bf16.gmra.mxu0 %v2688
      %v2821 = vpop.f32.mrf.mxu0
      %v2822 = vadd.f32 %v2712, %v2821
      %v2823 = vpop.f32.mrf.mxu0
      %v2824 = vadd.f32 %v2712, %v2823
      %2825 = vmatmul.bf16.gmra.mxu0 %v2689
      %v2826 = vpop.f32.mrf.mxu0
      %v2827 = vadd.f32 %v2712, %v2826
      %v2828 = vpop.f32.mrf.mxu0
      %v2829 = vadd.f32 %v2712, %v2828
      %2830 = vmatmul.bf16.gmra.mxu0 %v2690
      %v2831 = vpop.f32.mrf.mxu0
      %v2832 = vadd.f32 %v2712, %v2831
      %v2833 = vpop.f32.mrf.mxu0
      %v2834 = vadd.f32 %v2712, %v2833
      %2835 = vmatmul.bf16.gmra.mxu0 %v2691
      %v2836 = vpop.f32.mrf.mxu0
      %v2837 = vadd.f32 %v2712, %v2836
      %v2838 = vpop.f32.mrf.mxu0
      %v2839 = vadd.f32 %v2712, %v2838
      %2840 = vmatmul.bf16.gmra.mxu0 %v2692
      %v2841 = vpop.f32.mrf.mxu0
      %v2842 = vadd.f32 %v2712, %v2841
      %v2843 = vpop.f32.mrf.mxu0
      %v2844 = vadd.f32 %v2712, %v2843
      %2845 = vmatmul.bf16.gmra.mxu0 %v2693
      %v2846 = vpop.f32.mrf.mxu0
      %v2847 = vadd.f32 %v2712, %v2846
      %v2848 = vpop.f32.mrf.mxu0
      %v2849 = vadd.f32 %v2712, %v2848
      %2850 = vdwg.mxu0
      %2851 = vst.msk [vmem:[%s394 + $0x1] sm:$0xff] %vm306, %v2772
      %2852 = vst.msk [vmem:[%s394 + $0x9] sm:$0xff] %vm306, %v2774
      %2853 = vst.msk [vmem:[%s394 + $0x19] sm:$0xff] %vm306, %v2777
      %2854 = vst.msk [vmem:[%s394 + $0x21] sm:$0xff] %vm306, %v2779
      %2855 = vst.msk [vmem:[%s394 + $0x31] sm:$0xff] %vm306, %v2782
      %2856 = vst.msk [vmem:[%s394 + $0x39] sm:$0xff] %vm306, %v2784
      %2857 = vst.msk [vmem:[%s394 + $0x49] sm:$0xff] %vm306, %v2787
      %2858 = vst.msk [vmem:[%s394 + $0x51] sm:$0xff] %vm306, %v2789
      %2859 = vst.msk [vmem:[%s394 + $0x61] sm:$0xff] %vm306, %v2792
      %2860 = vst.msk [vmem:[%s394 + $0x69] sm:$0xff] %vm306, %v2794
      %2861 = vst.msk [vmem:[%s394 + $0x79] sm:$0xff] %vm306, %v2797
      %2862 = vst.msk [vmem:[%s394 + $0x81] sm:$0xff] %vm306, %v2799
      %2863 = vst.msk [vmem:[%s394 + $0x91] sm:$0xff] %vm306, %v2802
      %2864 = vst.msk [vmem:[%s394 + $0x99] sm:$0xff] %vm306, %v2804
      %2865 = vst.msk [vmem:[%s394 + $0xa9] sm:$0xff] %vm306, %v2807
      %2866 = vst.msk [vmem:[%s394 + $0xb1] sm:$0xff] %vm306, %v2809
      %2867 = vst.msk [vmem:[%s394 + $0xc1] sm:$0xff] %vm306, %v2812
      %2868 = vst.msk [vmem:[%s394 + $0xc9] sm:$0xff] %vm306, %v2814
      %2869 = vst.msk [vmem:[%s394 + $0xd9] sm:$0xff] %vm306, %v2817
      %2870 = vst.msk [vmem:[%s394 + $0xe1] sm:$0xff] %vm306, %v2819
      %2871 = vst.msk [vmem:[%s394 + $0xf1] sm:$0xff] %vm306, %v2822
      %2872 = vst.msk [vmem:[%s394 + $0xf9] sm:$0xff] %vm306, %v2824
      %2873 = vst.msk [vmem:[%s394 + $0x109] sm:$0xff] %vm306, %v2827
      %2874 = vst.msk [vmem:[%s394 + $0x111] sm:$0xff] %vm306, %v2829
      %2875 = vst.msk [vmem:[%s394 + $0x121] sm:$0xff] %vm306, %v2832
      %2876 = vst.msk [vmem:[%s394 + $0x129] sm:$0xff] %vm306, %v2834
      %2877 = vst.msk [vmem:[%s394 + $0x139] sm:$0xff] %vm306, %v2837
      %2878 = vst.msk [vmem:[%s394 + $0x141] sm:$0xff] %vm306, %v2839
      %2879 = vst.msk [vmem:[%s394 + $0x151] sm:$0xff] %vm306, %v2842
      %2880 = vst.msk [vmem:[%s394 + $0x159] sm:$0xff] %vm306, %v2844
      %2881 = vst.msk [vmem:[%s394 + $0x169] sm:$0xff] %vm306, %v2847
      %2882 = vst.msk [vmem:[%s394 + $0x171] sm:$0xff] %vm306, %v2849
      %v2883 = vld [vmem:[#allocation2] sm:$0xff]
      %v2884 = vld [vmem:[#allocation2 + $0x8] sm:$0xff]
      %v2885 = vld [vmem:[#allocation2 + $0x18] sm:$0xff]
      %v2886 = vld [vmem:[#allocation2 + $0x20] sm:$0xff]
      %v2887 = vld [vmem:[#allocation2 + $0x30] sm:$0xff]
      %v2888 = vld [vmem:[#allocation2 + $0x38] sm:$0xff]
      %v2889 = vld [vmem:[#allocation2 + $0x48] sm:$0xff]
      %v2890 = vld [vmem:[#allocation2 + $0x50] sm:$0xff]
      %v2891 = vld [vmem:[#allocation2 + $0x60] sm:$0xff]
      %v2892 = vld [vmem:[#allocation2 + $0x68] sm:$0xff]
      %v2893 = vld [vmem:[#allocation2 + $0x78] sm:$0xff]
      %v2894 = vld [vmem:[#allocation2 + $0x80] sm:$0xff]
      %v2895 = vld [vmem:[#allocation2 + $0x90] sm:$0xff]
      %v2896 = vld [vmem:[#allocation2 + $0x98] sm:$0xff]
      %v2897 = vld [vmem:[#allocation2 + $0xa8] sm:$0xff]
      %v2898 = vld [vmem:[#allocation2 + $0xb0] sm:$0xff]
      %v2899 = vld [vmem:[#allocation2 + $0xc0] sm:$0xff]
      %v2900 = vld [vmem:[#allocation2 + $0xc8] sm:$0xff]
      %v2901 = vld [vmem:[#allocation2 + $0xd8] sm:$0xff]
      %v2902 = vld [vmem:[#allocation2 + $0xe0] sm:$0xff]
      %v2903 = vld [vmem:[#allocation2 + $0xf0] sm:$0xff]
      %v2904 = vld [vmem:[#allocation2 + $0xf8] sm:$0xff]
      %v2905 = vld [vmem:[#allocation2 + $0x108] sm:$0xff]
      %v2906 = vld [vmem:[#allocation2 + $0x110] sm:$0xff]
      %v2907 = vld [vmem:[#allocation2 + $0x120] sm:$0xff]
      %v2908 = vld [vmem:[#allocation2 + $0x128] sm:$0xff]
      %v2909 = vld [vmem:[#allocation2 + $0x138] sm:$0xff]
      %v2910 = vld [vmem:[#allocation2 + $0x140] sm:$0xff]
      %v2911 = vld [vmem:[#allocation2 + $0x150] sm:$0xff]
      %v2912 = vld [vmem:[#allocation2 + $0x158] sm:$0xff]
      %v2913 = vld [vmem:[#allocation2 + $0x168] sm:$0xff]
      %v2914 = vld [vmem:[#allocation2 + $0x170] sm:$0xff]
      %v2915 = vld [vmem:[#allocation2 + $0x1] sm:$0xff]
      %v2916 = vld [vmem:[#allocation2 + $0x9] sm:$0xff]
      %v2917 = vld [vmem:[#allocation2 + $0x19] sm:$0xff]
      %v2918 = vld [vmem:[#allocation2 + $0x21] sm:$0xff]
      %v2919 = vld [vmem:[#allocation2 + $0x31] sm:$0xff]
      %v2920 = vld [vmem:[#allocation2 + $0x39] sm:$0xff]
      %v2921 = vld [vmem:[#allocation2 + $0x49] sm:$0xff]
      %v2922 = vld [vmem:[#allocation2 + $0x51] sm:$0xff]
      %v2923 = vld [vmem:[#allocation2 + $0x61] sm:$0xff]
      %v2924 = vld [vmem:[#allocation2 + $0x69] sm:$0xff]
      %v2925 = vld [vmem:[#allocation2 + $0x79] sm:$0xff]
      %v2926 = vld [vmem:[#allocation2 + $0x81] sm:$0xff]
      %v2927 = vld [vmem:[#allocation2 + $0x91] sm:$0xff]
      %v2928 = vld [vmem:[#allocation2 + $0x99] sm:$0xff]
      %v2929 = vld [vmem:[#allocation2 + $0xa9] sm:$0xff]
      %v2930 = vld [vmem:[#allocation2 + $0xb1] sm:$0xff]
      %v2931 = vld [vmem:[#allocation2 + $0xc1] sm:$0xff]
      %v2932 = vld [vmem:[#allocation2 + $0xc9] sm:$0xff]
      %v2933 = vld [vmem:[#allocation2 + $0xd9] sm:$0xff]
      %v2934 = vld [vmem:[#allocation2 + $0xe1] sm:$0xff]
      %v2935 = vld [vmem:[#allocation2 + $0xf1] sm:$0xff]
      %v2936 = vld [vmem:[#allocation2 + $0xf9] sm:$0xff]
      %v2937 = vld [vmem:[#allocation2 + $0x109] sm:$0xff]
      %v2938 = vld [vmem:[#allocation2 + $0x111] sm:$0xff]
      %v2939 = vld [vmem:[#allocation2 + $0x121] sm:$0xff]
      %v2940 = vld [vmem:[#allocation2 + $0x129] sm:$0xff]
      %v2941 = vld [vmem:[#allocation2 + $0x139] sm:$0xff]
      %v2942 = vld [vmem:[#allocation2 + $0x141] sm:$0xff]
      %v2943 = vld [vmem:[#allocation2 + $0x151] sm:$0xff]
      %v2944 = vld [vmem:[#allocation2 + $0x159] sm:$0xff]
      %v2945 = vld [vmem:[#allocation2 + $0x169] sm:$0xff]
      %v2946 = vld [vmem:[#allocation2 + $0x171] sm:$0xff]
      %v2947 = vld [vmem:[#allocation2 + $0x2] sm:$0xff]
      %v2948 = vld [vmem:[#allocation2 + $0xa] sm:$0xff]
      %v2949 = vld [vmem:[#allocation2 + $0x1a] sm:$0xff]
      %v2950 = vld [vmem:[#allocation2 + $0x22] sm:$0xff]
      %v2951 = vld [vmem:[#allocation2 + $0x32] sm:$0xff]
      %v2952 = vld [vmem:[#allocation2 + $0x3a] sm:$0xff]
      %v2953 = vld [vmem:[#allocation2 + $0x4a] sm:$0xff]
      %v2954 = vld [vmem:[#allocation2 + $0x52] sm:$0xff]
      %v2955 = vld [vmem:[#allocation2 + $0x62] sm:$0xff]
      %v2956 = vld [vmem:[#allocation2 + $0x6a] sm:$0xff]
      %v2957 = vld [vmem:[#allocation2 + $0x7a] sm:$0xff]
      %v2958 = vld [vmem:[#allocation2 + $0x82] sm:$0xff]
      %v2959 = vld [vmem:[#allocation2 + $0x92] sm:$0xff]
      %v2960 = vld [vmem:[#allocation2 + $0x9a] sm:$0xff]
      %v2961 = vld [vmem:[#allocation2 + $0xaa] sm:$0xff]
      %v2962 = vld [vmem:[#allocation2 + $0xb2] sm:$0xff]
      %v2963 = vld [vmem:[#allocation2 + $0xc2] sm:$0xff]
      %v2964 = vld [vmem:[#allocation2 + $0xca] sm:$0xff]
      %v2965 = vld [vmem:[#allocation2 + $0xda] sm:$0xff]
      %v2966 = vld [vmem:[#allocation2 + $0xe2] sm:$0xff]
      %v2967 = vld [vmem:[#allocation2 + $0xf2] sm:$0xff]
      %v2968 = vld [vmem:[#allocation2 + $0xfa] sm:$0xff]
      %v2969 = vld [vmem:[#allocation2 + $0x10a] sm:$0xff]
      %v2970 = vld [vmem:[#allocation2 + $0x112] sm:$0xff]
      %v2971 = vld [vmem:[#allocation2 + $0x122] sm:$0xff]
      %v2972 = vld [vmem:[#allocation2 + $0x12a] sm:$0xff]
      %v2973 = vld [vmem:[#allocation2 + $0x13a] sm:$0xff]
      %v2974 = vld [vmem:[#allocation2 + $0x142] sm:$0xff]
      %v2975 = vld [vmem:[#allocation2 + $0x152] sm:$0xff]
      %v2976 = vld [vmem:[#allocation2 + $0x15a] sm:$0xff]
      %v2977 = vld [vmem:[#allocation2 + $0x16a] sm:$0xff]
      %v2978 = vld [vmem:[#allocation2 + $0x172] sm:$0xff]
      %v2979 = vld [vmem:[%s394] sm:$0xff]
      %v2980 = vld [vmem:[%s394 + $0x8] sm:$0xff]
      %v2981 = vld [vmem:[%s394 + $0x18] sm:$0xff]
      %v2982 = vld [vmem:[%s394 + $0x20] sm:$0xff]
      %v2983 = vld [vmem:[%s394 + $0x30] sm:$0xff]
      %v2984 = vld [vmem:[%s394 + $0x38] sm:$0xff]
      %v2985 = vld [vmem:[%s394 + $0x48] sm:$0xff]
      %v2986 = vld [vmem:[%s394 + $0x50] sm:$0xff]
      %v2987 = vld [vmem:[%s394 + $0x60] sm:$0xff]
      %v2988 = vld [vmem:[%s394 + $0x68] sm:$0xff]
      %v2989 = vld [vmem:[%s394 + $0x78] sm:$0xff]
      %v2990 = vld [vmem:[%s394 + $0x80] sm:$0xff]
      %v2991 = vld [vmem:[%s394 + $0x90] sm:$0xff]
      %v2992 = vld [vmem:[%s394 + $0x98] sm:$0xff]
      %v2993 = vld [vmem:[%s394 + $0xa8] sm:$0xff]
      %v2994 = vld [vmem:[%s394 + $0xb0] sm:$0xff]
      %v2995 = vld [vmem:[%s394 + $0xc0] sm:$0xff]
      %v2996 = vld [vmem:[%s394 + $0xc8] sm:$0xff]
      %v2997 = vld [vmem:[%s394 + $0xd8] sm:$0xff]
      %v2998 = vld [vmem:[%s394 + $0xe0] sm:$0xff]
      %v2999 = vld [vmem:[%s394 + $0xf0] sm:$0xff]
      %v3000 = vld [vmem:[%s394 + $0xf8] sm:$0xff]
      %v3001 = vld [vmem:[%s394 + $0x108] sm:$0xff]
      %v3002 = vld [vmem:[%s394 + $0x110] sm:$0xff]
      %v3003 = vld [vmem:[%s394 + $0x120] sm:$0xff]
      %v3004 = vld [vmem:[%s394 + $0x128] sm:$0xff]
      %v3005 = vld [vmem:[%s394 + $0x138] sm:$0xff]
      %v3006 = vld [vmem:[%s394 + $0x140] sm:$0xff]
      %v3007 = vld [vmem:[%s394 + $0x150] sm:$0xff]
      %v3008 = vld [vmem:[%s394 + $0x158] sm:$0xff]
      %v3009 = vld [vmem:[%s394 + $0x168] sm:$0xff]
      %v3010 = vld [vmem:[%s394 + $0x170] sm:$0xff]
      %v3011 = vld [vmem:[%s394 + $0x1] sm:$0xff]
      %v3012 = vld [vmem:[%s394 + $0x9] sm:$0xff]
      %v3013 = vld [vmem:[%s394 + $0x19] sm:$0xff]
      %v3014 = vld [vmem:[%s394 + $0x21] sm:$0xff]
      %v3015 = vld [vmem:[%s394 + $0x31] sm:$0xff]
      %v3016 = vld [vmem:[%s394 + $0x39] sm:$0xff]
      %v3017 = vld [vmem:[%s394 + $0x49] sm:$0xff]
      %v3018 = vld [vmem:[%s394 + $0x51] sm:$0xff]
      %v3019 = vld [vmem:[%s394 + $0x61] sm:$0xff]
      %v3020 = vld [vmem:[%s394 + $0x69] sm:$0xff]
      %v3021 = vld [vmem:[%s394 + $0x79] sm:$0xff]
      %v3022 = vld [vmem:[%s394 + $0x81] sm:$0xff]
      %v3023 = vld [vmem:[%s394 + $0x91] sm:$0xff]
      %v3024 = vld [vmem:[%s394 + $0x99] sm:$0xff]
      %v3025 = vld [vmem:[%s394 + $0xa9] sm:$0xff]
      %v3026 = vld [vmem:[%s394 + $0xb1] sm:$0xff]
      %v3027 = vld [vmem:[%s394 + $0xc1] sm:$0xff]
      %v3028 = vld [vmem:[%s394 + $0xc9] sm:$0xff]
      %v3029 = vld [vmem:[%s394 + $0xd9] sm:$0xff]
      %v3030 = vld [vmem:[%s394 + $0xe1] sm:$0xff]
      %v3031 = vld [vmem:[%s394 + $0xf1] sm:$0xff]
      %v3032 = vld [vmem:[%s394 + $0xf9] sm:$0xff]
      %v3033 = vld [vmem:[%s394 + $0x109] sm:$0xff]
      %v3034 = vld [vmem:[%s394 + $0x111] sm:$0xff]
      %v3035 = vld [vmem:[%s394 + $0x121] sm:$0xff]
      %v3036 = vld [vmem:[%s394 + $0x129] sm:$0xff]
      %v3037 = vld [vmem:[%s394 + $0x139] sm:$0xff]
      %v3038 = vld [vmem:[%s394 + $0x141] sm:$0xff]
      %v3039 = vld [vmem:[%s394 + $0x151] sm:$0xff]
      %v3040 = vld [vmem:[%s394 + $0x159] sm:$0xff]
      %v3041 = vld [vmem:[%s394 + $0x169] sm:$0xff]
      %v3042 = vld [vmem:[%s394 + $0x171] sm:$0xff]
      %v3043 = vld [vmem:[%s394 + $0x2] sm:$0xff]
      %v3044 = vld [vmem:[%s394 + $0xa] sm:$0xff]
      %v3045 = vld [vmem:[%s394 + $0x1a] sm:$0xff]
      %v3046 = vld [vmem:[%s394 + $0x22] sm:$0xff]
      %v3047 = vld [vmem:[%s394 + $0x32] sm:$0xff]
      %v3048 = vld [vmem:[%s394 + $0x3a] sm:$0xff]
      %v3049 = vld [vmem:[%s394 + $0x4a] sm:$0xff]
      %v3050 = vld [vmem:[%s394 + $0x52] sm:$0xff]
      %v3051 = vld [vmem:[%s394 + $0x62] sm:$0xff]
      %v3052 = vld [vmem:[%s394 + $0x6a] sm:$0xff]
      %v3053 = vld [vmem:[%s394 + $0x7a] sm:$0xff]
      %v3054 = vld [vmem:[%s394 + $0x82] sm:$0xff]
      %v3055 = vld [vmem:[%s394 + $0x92] sm:$0xff]
      %v3056 = vld [vmem:[%s394 + $0x9a] sm:$0xff]
      %v3057 = vld [vmem:[%s394 + $0xaa] sm:$0xff]
      %v3058 = vld [vmem:[%s394 + $0xb2] sm:$0xff]
      %v3059 = vld [vmem:[%s394 + $0xc2] sm:$0xff]
      %v3060 = vld [vmem:[%s394 + $0xca] sm:$0xff]
      %v3061 = vld [vmem:[%s394 + $0xda] sm:$0xff]
      %v3062 = vld [vmem:[%s394 + $0xe2] sm:$0xff]
      %v3063 = vld [vmem:[%s394 + $0xf2] sm:$0xff]
      %v3064 = vld [vmem:[%s394 + $0xfa] sm:$0xff]
      %v3065 = vld [vmem:[%s394 + $0x10a] sm:$0xff]
      %v3066 = vld [vmem:[%s394 + $0x112] sm:$0xff]
      %v3067 = vld [vmem:[%s394 + $0x122] sm:$0xff]
      %v3068 = vld [vmem:[%s394 + $0x12a] sm:$0xff]
      %v3069 = vld [vmem:[%s394 + $0x13a] sm:$0xff]
      %v3070 = vld [vmem:[%s394 + $0x142] sm:$0xff]
      %v3071 = vld [vmem:[%s394 + $0x152] sm:$0xff]
      %v3072 = vld [vmem:[%s394 + $0x15a] sm:$0xff]
      %v3073 = vld [vmem:[%s394 + $0x16a] sm:$0xff]
      %v3074 = vld [vmem:[%s394 + $0x172] sm:$0xff]
      %v3075 = vld [vmem:[%s619] sm:$0xff]
      %v3076 = vld [vmem:[%s619 + $0x8] sm:$0xff]
      %v3077 = vld [vmem:[%s619 + $0x18] sm:$0xff]
      %v3078 = vld [vmem:[%s619 + $0x20] sm:$0xff]
      %v3079 = vld [vmem:[%s619 + $0x30] sm:$0xff]
      %v3080 = vld [vmem:[%s619 + $0x38] sm:$0xff]
      %v3081 = vld [vmem:[%s619 + $0x48] sm:$0xff]
      %v3082 = vld [vmem:[%s619 + $0x50] sm:$0xff]
      %v3083 = vld [vmem:[%s619 + $0x60] sm:$0xff]
      %v3084 = vld [vmem:[%s619 + $0x68] sm:$0xff]
      %v3085 = vld [vmem:[%s619 + $0x78] sm:$0xff]
      %v3086 = vld [vmem:[%s619 + $0x80] sm:$0xff]
      %v3087 = vld [vmem:[%s619 + $0x90] sm:$0xff]
      %v3088 = vld [vmem:[%s619 + $0x98] sm:$0xff]
      %v3089 = vld [vmem:[%s619 + $0xa8] sm:$0xff]
      %v3090 = vld [vmem:[%s619 + $0xb0] sm:$0xff]
      %v3091 = vld [vmem:[%s619 + $0xc0] sm:$0xff]
      %v3092 = vld [vmem:[%s619 + $0xc8] sm:$0xff]
      %v3093 = vld [vmem:[%s619 + $0xd8] sm:$0xff]
      %v3094 = vld [vmem:[%s619 + $0xe0] sm:$0xff]
      %v3095 = vld [vmem:[%s619 + $0xf0] sm:$0xff]
      %v3096 = vld [vmem:[%s619 + $0xf8] sm:$0xff]
      %v3097 = vld [vmem:[%s619 + $0x108] sm:$0xff]
      %v3098 = vld [vmem:[%s619 + $0x110] sm:$0xff]
      %v3099 = vld [vmem:[%s619 + $0x120] sm:$0xff]
      %v3100 = vld [vmem:[%s619 + $0x128] sm:$0xff]
      %v3101 = vld [vmem:[%s619 + $0x138] sm:$0xff]
      %v3102 = vld [vmem:[%s619 + $0x140] sm:$0xff]
      %v3103 = vld [vmem:[%s619 + $0x150] sm:$0xff]
      %v3104 = vld [vmem:[%s619 + $0x158] sm:$0xff]
      %v3105 = vld [vmem:[%s619 + $0x168] sm:$0xff]
      %v3106 = vld [vmem:[%s619 + $0x170] sm:$0xff]
      %v3107 = vld [vmem:[%s619 + $0x1] sm:$0xff]
      %v3108 = vld [vmem:[%s619 + $0x9] sm:$0xff]
      %v3109 = vld [vmem:[%s619 + $0x19] sm:$0xff]
      %v3110 = vld [vmem:[%s619 + $0x21] sm:$0xff]
      %v3111 = vld [vmem:[%s619 + $0x31] sm:$0xff]
      %v3112 = vld [vmem:[%s619 + $0x39] sm:$0xff]
      %v3113 = vld [vmem:[%s619 + $0x49] sm:$0xff]
      %v3114 = vld [vmem:[%s619 + $0x51] sm:$0xff]
      %v3115 = vld [vmem:[%s619 + $0x61] sm:$0xff]
      %v3116 = vld [vmem:[%s619 + $0x69] sm:$0xff]
      %v3117 = vld [vmem:[%s619 + $0x79] sm:$0xff]
      %v3118 = vld [vmem:[%s619 + $0x81] sm:$0xff]
      %v3119 = vld [vmem:[%s619 + $0x91] sm:$0xff]
      %v3120 = vld [vmem:[%s619 + $0x99] sm:$0xff]
      %v3121 = vld [vmem:[%s619 + $0xa9] sm:$0xff]
      %v3122 = vld [vmem:[%s619 + $0xb1] sm:$0xff]
      %v3123 = vld [vmem:[%s619 + $0xc1] sm:$0xff]
      %v3124 = vld [vmem:[%s619 + $0xc9] sm:$0xff]
      %v3125 = vld [vmem:[%s619 + $0xd9] sm:$0xff]
      %v3126 = vld [vmem:[%s619 + $0xe1] sm:$0xff]
      %v3127 = vld [vmem:[%s619 + $0xf1] sm:$0xff]
      %v3128 = vld [vmem:[%s619 + $0xf9] sm:$0xff]
      %v3129 = vld [vmem:[%s619 + $0x109] sm:$0xff]
      %v3130 = vld [vmem:[%s619 + $0x111] sm:$0xff]
      %v3131 = vld [vmem:[%s619 + $0x121] sm:$0xff]
      %v3132 = vld [vmem:[%s619 + $0x129] sm:$0xff]
      %v3133 = vld [vmem:[%s619 + $0x139] sm:$0xff]
      %v3134 = vld [vmem:[%s619 + $0x141] sm:$0xff]
      %v3135 = vld [vmem:[%s619 + $0x151] sm:$0xff]
      %v3136 = vld [vmem:[%s619 + $0x159] sm:$0xff]
      %v3137 = vld [vmem:[%s619 + $0x169] sm:$0xff]
      %v3138 = vld [vmem:[%s619 + $0x171] sm:$0xff]
      %v3139 = vld [vmem:[%s619 + $0x2] sm:$0xff]
      %v3140 = vld [vmem:[%s619 + $0xa] sm:$0xff]
      %v3141 = vld [vmem:[%s619 + $0x1a] sm:$0xff]
      %v3142 = vld [vmem:[%s619 + $0x22] sm:$0xff]
      %v3143 = vld [vmem:[%s619 + $0x32] sm:$0xff]
      %v3144 = vld [vmem:[%s619 + $0x3a] sm:$0xff]
      %v3145 = vld [vmem:[%s619 + $0x4a] sm:$0xff]
      %v3146 = vld [vmem:[%s619 + $0x52] sm:$0xff]
      %v3147 = vld [vmem:[%s619 + $0x62] sm:$0xff]
      %v3148 = vld [vmem:[%s619 + $0x6a] sm:$0xff]
      %v3149 = vld [vmem:[%s619 + $0x7a] sm:$0xff]
      %v3150 = vld [vmem:[%s619 + $0x82] sm:$0xff]
      %v3151 = vld [vmem:[%s619 + $0x92] sm:$0xff]
      %v3152 = vld [vmem:[%s619 + $0x9a] sm:$0xff]
      %v3153 = vld [vmem:[%s619 + $0xaa] sm:$0xff]
      %v3154 = vld [vmem:[%s619 + $0xb2] sm:$0xff]
      %v3155 = vld [vmem:[%s619 + $0xc2] sm:$0xff]
      %v3156 = vld [vmem:[%s619 + $0xca] sm:$0xff]
      %v3157 = vld [vmem:[%s619 + $0xda] sm:$0xff]
      %v3158 = vld [vmem:[%s619 + $0xe2] sm:$0xff]
      %v3159 = vld [vmem:[%s619 + $0xf2] sm:$0xff]
      %v3160 = vld [vmem:[%s619 + $0xfa] sm:$0xff]
      %v3161 = vld [vmem:[%s619 + $0x10a] sm:$0xff]
      %v3162 = vld [vmem:[%s619 + $0x112] sm:$0xff]
      %v3163 = vld [vmem:[%s619 + $0x122] sm:$0xff]
      %v3164 = vld [vmem:[%s619 + $0x12a] sm:$0xff]
      %v3165 = vld [vmem:[%s619 + $0x13a] sm:$0xff]
      %v3166 = vld [vmem:[%s619 + $0x142] sm:$0xff]
      %v3167 = vld [vmem:[%s619 + $0x152] sm:$0xff]
      %v3168 = vld [vmem:[%s619 + $0x15a] sm:$0xff]
      %v3169 = vld [vmem:[%s619 + $0x16a] sm:$0xff]
      %v3170 = vld [vmem:[%s619 + $0x172] sm:$0xff]
      %3203 = vrot.lane.b32.xlu0 %v2915, 8
      %v3204 = vpop.permute.xlu0 %3203
      %3205 = vrot.lane.b32.xlu0 %v2916, 8
      %v3206 = vpop.permute.xlu0 %3205
      %3207 = vrot.lane.b32.xlu0 %v2917, 8
      %v3208 = vpop.permute.xlu0 %3207
      %3209 = vrot.lane.b32.xlu0 %v2918, 8
      %v3210 = vpop.permute.xlu0 %3209
      %3211 = vrot.lane.b32.xlu0 %v2919, 8
      %v3212 = vpop.permute.xlu0 %3211
      %3213 = vrot.lane.b32.xlu0 %v2920, 8
      %v3214 = vpop.permute.xlu0 %3213
      %3215 = vrot.lane.b32.xlu0 %v2921, 8
      %v3216 = vpop.permute.xlu0 %3215
      %3217 = vrot.lane.b32.xlu0 %v2922, 8
      %v3218 = vpop.permute.xlu0 %3217
      %3219 = vrot.lane.b32.xlu0 %v2923, 8
      %v3220 = vpop.permute.xlu0 %3219
      %3221 = vrot.lane.b32.xlu0 %v2924, 8
      %v3222 = vpop.permute.xlu0 %3221
      %3223 = vrot.lane.b32.xlu0 %v2925, 8
      %v3224 = vpop.permute.xlu0 %3223
      %3225 = vrot.lane.b32.xlu0 %v2926, 8
      %v3226 = vpop.permute.xlu0 %3225
      %3227 = vrot.lane.b32.xlu0 %v2927, 8
      %v3228 = vpop.permute.xlu0 %3227
      %3229 = vrot.lane.b32.xlu0 %v2928, 8
      %v3230 = vpop.permute.xlu0 %3229
      %3231 = vrot.lane.b32.xlu0 %v2929, 8
      %v3232 = vpop.permute.xlu0 %3231
      %3233 = vrot.lane.b32.xlu0 %v2930, 8
      %v3234 = vpop.permute.xlu0 %3233
      %3235 = vrot.lane.b32.xlu0 %v2931, 8
      %v3236 = vpop.permute.xlu0 %3235
      %3237 = vrot.lane.b32.xlu0 %v2932, 8
      %v3238 = vpop.permute.xlu0 %3237
      %3239 = vrot.lane.b32.xlu0 %v2933, 8
      %v3240 = vpop.permute.xlu0 %3239
      %3241 = vrot.lane.b32.xlu0 %v2934, 8
      %v3242 = vpop.permute.xlu0 %3241
      %3243 = vrot.lane.b32.xlu0 %v2935, 8
      %v3244 = vpop.permute.xlu0 %3243
      %3245 = vrot.lane.b32.xlu0 %v2936, 8
      %v3246 = vpop.permute.xlu0 %3245
      %3247 = vrot.lane.b32.xlu0 %v2937, 8
      %v3248 = vpop.permute.xlu0 %3247
      %3249 = vrot.lane.b32.xlu0 %v2938, 8
      %v3250 = vpop.permute.xlu0 %3249
      %3251 = vrot.lane.b32.xlu0 %v2939, 8
      %v3252 = vpop.permute.xlu0 %3251
      %3253 = vrot.lane.b32.xlu0 %v2940, 8
      %v3254 = vpop.permute.xlu0 %3253
      %3255 = vrot.lane.b32.xlu0 %v2941, 8
      %v3256 = vpop.permute.xlu0 %3255
      %3257 = vrot.lane.b32.xlu0 %v2942, 8
      %v3258 = vpop.permute.xlu0 %3257
      %3259 = vrot.lane.b32.xlu0 %v2943, 8
      %v3260 = vpop.permute.xlu0 %3259
      %3261 = vrot.lane.b32.xlu0 %v2944, 8
      %v3262 = vpop.permute.xlu0 %3261
      %3263 = vrot.lane.b32.xlu0 %v2945, 8
      %v3264 = vpop.permute.xlu0 %3263
      %3265 = vrot.lane.b32.xlu0 %v2946, 8
      %v3266 = vpop.permute.xlu0 %3265
      %3331 = vrot.lane.b32.xlu0 %v2947, 16
      %v3332 = vpop.permute.xlu0 %3331
      %3333 = vrot.lane.b32.xlu0 %v2948, 16
      %v3334 = vpop.permute.xlu0 %3333
      %3335 = vrot.lane.b32.xlu0 %v2949, 16
      %v3336 = vpop.permute.xlu0 %3335
      %3337 = vrot.lane.b32.xlu0 %v2950, 16
      %v3338 = vpop.permute.xlu0 %3337
      %3339 = vrot.lane.b32.xlu0 %v2951, 16
      %v3340 = vpop.permute.xlu0 %3339
      %3341 = vrot.lane.b32.xlu0 %v2952, 16
      %v3342 = vpop.permute.xlu0 %3341
      %3343 = vrot.lane.b32.xlu0 %v2953, 16
      %v3344 = vpop.permute.xlu0 %3343
      %3345 = vrot.lane.b32.xlu0 %v2954, 16
      %v3346 = vpop.permute.xlu0 %3345
      %3347 = vrot.lane.b32.xlu0 %v2955, 16
      %v3348 = vpop.permute.xlu0 %3347
      %3349 = vrot.lane.b32.xlu0 %v2956, 16
      %v3350 = vpop.permute.xlu0 %3349
      %3351 = vrot.lane.b32.xlu0 %v2957, 16
      %v3352 = vpop.permute.xlu0 %3351
      %3353 = vrot.lane.b32.xlu0 %v2958, 16
      %v3354 = vpop.permute.xlu0 %3353
      %3355 = vrot.lane.b32.xlu0 %v2959, 16
      %v3356 = vpop.permute.xlu0 %3355
      %3357 = vrot.lane.b32.xlu0 %v2960, 16
      %v3358 = vpop.permute.xlu0 %3357
      %3359 = vrot.lane.b32.xlu0 %v2961, 16
      %v3360 = vpop.permute.xlu0 %3359
      %3361 = vrot.lane.b32.xlu0 %v2962, 16
      %v3362 = vpop.permute.xlu0 %3361
      %3363 = vrot.lane.b32.xlu0 %v2963, 16
      %v3364 = vpop.permute.xlu0 %3363
      %3365 = vrot.lane.b32.xlu0 %v2964, 16
      %v3366 = vpop.permute.xlu0 %3365
      %3367 = vrot.lane.b32.xlu0 %v2965, 16
      %v3368 = vpop.permute.xlu0 %3367
      %3369 = vrot.lane.b32.xlu0 %v2966, 16
      %v3370 = vpop.permute.xlu0 %3369
      %3371 = vrot.lane.b32.xlu0 %v2967, 16
      %v3372 = vpop.permute.xlu0 %3371
      %3373 = vrot.lane.b32.xlu0 %v2968, 16
      %v3374 = vpop.permute.xlu0 %3373
      %3375 = vrot.lane.b32.xlu0 %v2969, 16
      %v3376 = vpop.permute.xlu0 %3375
      %3377 = vrot.lane.b32.xlu0 %v2970, 16
      %v3378 = vpop.permute.xlu0 %3377
      %3379 = vrot.lane.b32.xlu0 %v2971, 16
      %v3380 = vpop.permute.xlu0 %3379
      %3381 = vrot.lane.b32.xlu0 %v2972, 16
      %v3382 = vpop.permute.xlu0 %3381
      %3383 = vrot.lane.b32.xlu0 %v2973, 16
      %v3384 = vpop.permute.xlu0 %3383
      %3385 = vrot.lane.b32.xlu0 %v2974, 16
      %v3386 = vpop.permute.xlu0 %3385
      %3387 = vrot.lane.b32.xlu0 %v2975, 16
      %v3388 = vpop.permute.xlu0 %3387
      %3389 = vrot.lane.b32.xlu0 %v2976, 16
      %v3390 = vpop.permute.xlu0 %3389
      %3391 = vrot.lane.b32.xlu0 %v2977, 16
      %v3392 = vpop.permute.xlu0 %3391
      %3393 = vrot.lane.b32.xlu0 %v2978, 16
      %v3394 = vpop.permute.xlu0 %3393
      %3459 = vrot.lane.b32.xlu0 %v2979, 24
      %v3460 = vpop.permute.xlu0 %3459
      %3461 = vrot.lane.b32.xlu0 %v2980, 24
      %v3462 = vpop.permute.xlu0 %3461
      %3463 = vrot.lane.b32.xlu0 %v2981, 24
      %v3464 = vpop.permute.xlu0 %3463
      %3465 = vrot.lane.b32.xlu0 %v2982, 24
      %v3466 = vpop.permute.xlu0 %3465
      %3467 = vrot.lane.b32.xlu0 %v2983, 24
      %v3468 = vpop.permute.xlu0 %3467
      %3469 = vrot.lane.b32.xlu0 %v2984, 24
      %v3470 = vpop.permute.xlu0 %3469
      %3471 = vrot.lane.b32.xlu0 %v2985, 24
      %v3472 = vpop.permute.xlu0 %3471
      %3473 = vrot.lane.b32.xlu0 %v2986, 24
      %v3474 = vpop.permute.xlu0 %3473
      %3475 = vrot.lane.b32.xlu0 %v2987, 24
      %v3476 = vpop.permute.xlu0 %3475
      %3477 = vrot.lane.b32.xlu0 %v2988, 24
      %v3478 = vpop.permute.xlu0 %3477
      %3479 = vrot.lane.b32.xlu0 %v2989, 24
      %v3480 = vpop.permute.xlu0 %3479
      %3481 = vrot.lane.b32.xlu0 %v2990, 24
      %v3482 = vpop.permute.xlu0 %3481
      %3483 = vrot.lane.b32.xlu0 %v2991, 24
      %v3484 = vpop.permute.xlu0 %3483
      %3485 = vrot.lane.b32.xlu0 %v2992, 24
      %v3486 = vpop.permute.xlu0 %3485
      %3487 = vrot.lane.b32.xlu0 %v2993, 24
      %v3488 = vpop.permute.xlu0 %3487
      %3489 = vrot.lane.b32.xlu0 %v2994, 24
      %v3490 = vpop.permute.xlu0 %3489
      %3491 = vrot.lane.b32.xlu0 %v2995, 24
      %v3492 = vpop.permute.xlu0 %3491
      %3493 = vrot.lane.b32.xlu0 %v2996, 24
      %v3494 = vpop.permute.xlu0 %3493
      %3495 = vrot.lane.b32.xlu0 %v2997, 24
      %v3496 = vpop.permute.xlu0 %3495
      %3497 = vrot.lane.b32.xlu0 %v2998, 24
      %v3498 = vpop.permute.xlu0 %3497
      %3499 = vrot.lane.b32.xlu0 %v2999, 24
      %v3500 = vpop.permute.xlu0 %3499
      %3501 = vrot.lane.b32.xlu0 %v3000, 24
      %v3502 = vpop.permute.xlu0 %3501
      %3503 = vrot.lane.b32.xlu0 %v3001, 24
      %v3504 = vpop.permute.xlu0 %3503
      %3505 = vrot.lane.b32.xlu0 %v3002, 24
      %v3506 = vpop.permute.xlu0 %3505
      %3507 = vrot.lane.b32.xlu0 %v3003, 24
      %v3508 = vpop.permute.xlu0 %3507
      %3509 = vrot.lane.b32.xlu0 %v3004, 24
      %v3510 = vpop.permute.xlu0 %3509
      %3511 = vrot.lane.b32.xlu0 %v3005, 24
      %v3512 = vpop.permute.xlu0 %3511
      %3513 = vrot.lane.b32.xlu0 %v3006, 24
      %v3514 = vpop.permute.xlu0 %3513
      %3515 = vrot.lane.b32.xlu0 %v3007, 24
      %v3516 = vpop.permute.xlu0 %3515
      %3517 = vrot.lane.b32.xlu0 %v3008, 24
      %v3518 = vpop.permute.xlu0 %3517
      %3519 = vrot.lane.b32.xlu0 %v3009, 24
      %v3520 = vpop.permute.xlu0 %3519
      %3521 = vrot.lane.b32.xlu0 %v3010, 24
      %v3522 = vpop.permute.xlu0 %3521
      %3587 = vrot.lane.b32.xlu0 %v3011, 32
      %v3588 = vpop.permute.xlu0 %3587
      %3589 = vrot.lane.b32.xlu0 %v3012, 32
      %v3590 = vpop.permute.xlu0 %3589
      %3591 = vrot.lane.b32.xlu0 %v3013, 32
      %v3592 = vpop.permute.xlu0 %3591
      %3593 = vrot.lane.b32.xlu0 %v3014, 32
      %v3594 = vpop.permute.xlu0 %3593
      %3595 = vrot.lane.b32.xlu0 %v3015, 32
      %v3596 = vpop.permute.xlu0 %3595
      %3597 = vrot.lane.b32.xlu0 %v3016, 32
      %v3598 = vpop.permute.xlu0 %3597
      %3599 = vrot.lane.b32.xlu0 %v3017, 32
      %v3600 = vpop.permute.xlu0 %3599
      %3601 = vrot.lane.b32.xlu0 %v3018, 32
      %v3602 = vpop.permute.xlu0 %3601
      %3603 = vrot.lane.b32.xlu0 %v3019, 32
      %v3604 = vpop.permute.xlu0 %3603
      %3605 = vrot.lane.b32.xlu0 %v3020, 32
      %v3606 = vpop.permute.xlu0 %3605
      %3607 = vrot.lane.b32.xlu0 %v3021, 32
      %v3608 = vpop.permute.xlu0 %3607
      %3609 = vrot.lane.b32.xlu0 %v3022, 32
      %v3610 = vpop.permute.xlu0 %3609
      %3611 = vrot.lane.b32.xlu0 %v3023, 32
      %v3612 = vpop.permute.xlu0 %3611
      %3613 = vrot.lane.b32.xlu0 %v3024, 32
      %v3614 = vpop.permute.xlu0 %3613
      %3615 = vrot.lane.b32.xlu0 %v3025, 32
      %v3616 = vpop.permute.xlu0 %3615
      %3617 = vrot.lane.b32.xlu0 %v3026, 32
      %v3618 = vpop.permute.xlu0 %3617
      %3619 = vrot.lane.b32.xlu0 %v3027, 32
      %v3620 = vpop.permute.xlu0 %3619
      %3621 = vrot.lane.b32.xlu0 %v3028, 32
      %v3622 = vpop.permute.xlu0 %3621
      %3623 = vrot.lane.b32.xlu0 %v3029, 32
      %v3624 = vpop.permute.xlu0 %3623
      %3625 = vrot.lane.b32.xlu0 %v3030, 32
      %v3626 = vpop.permute.xlu0 %3625
      %3627 = vrot.lane.b32.xlu0 %v3031, 32
      %v3628 = vpop.permute.xlu0 %3627
      %3629 = vrot.lane.b32.xlu0 %v3032, 32
      %v3630 = vpop.permute.xlu0 %3629
      %3631 = vrot.lane.b32.xlu0 %v3033, 32
      %v3632 = vpop.permute.xlu0 %3631
      %3633 = vrot.lane.b32.xlu0 %v3034, 32
      %v3634 = vpop.permute.xlu0 %3633
      %3635 = vrot.lane.b32.xlu0 %v3035, 32
      %v3636 = vpop.permute.xlu0 %3635
      %3637 = vrot.lane.b32.xlu0 %v3036, 32
      %v3638 = vpop.permute.xlu0 %3637
      %3639 = vrot.lane.b32.xlu0 %v3037, 32
      %v3640 = vpop.permute.xlu0 %3639
      %3641 = vrot.lane.b32.xlu0 %v3038, 32
      %v3642 = vpop.permute.xlu0 %3641
      %3643 = vrot.lane.b32.xlu0 %v3039, 32
      %v3644 = vpop.permute.xlu0 %3643
      %3645 = vrot.lane.b32.xlu0 %v3040, 32
      %v3646 = vpop.permute.xlu0 %3645
      %3647 = vrot.lane.b32.xlu0 %v3041, 32
      %v3648 = vpop.permute.xlu0 %3647
      %3649 = vrot.lane.b32.xlu0 %v3042, 32
      %v3650 = vpop.permute.xlu0 %3649
      %3715 = vrot.lane.b32.xlu0 %v3043, 40
      %v3716 = vpop.permute.xlu0 %3715
      %3717 = vrot.lane.b32.xlu0 %v3044, 40
      %v3718 = vpop.permute.xlu0 %3717
      %3719 = vrot.lane.b32.xlu0 %v3045, 40
      %v3720 = vpop.permute.xlu0 %3719
      %3721 = vrot.lane.b32.xlu0 %v3046, 40
      %v3722 = vpop.permute.xlu0 %3721
      %3723 = vrot.lane.b32.xlu0 %v3047, 40
      %v3724 = vpop.permute.xlu0 %3723
      %3725 = vrot.lane.b32.xlu0 %v3048, 40
      %v3726 = vpop.permute.xlu0 %3725
      %3727 = vrot.lane.b32.xlu0 %v3049, 40
      %v3728 = vpop.permute.xlu0 %3727
      %3729 = vrot.lane.b32.xlu0 %v3050, 40
      %v3730 = vpop.permute.xlu0 %3729
      %3731 = vrot.lane.b32.xlu0 %v3051, 40
      %v3732 = vpop.permute.xlu0 %3731
      %3733 = vrot.lane.b32.xlu0 %v3052, 40
      %v3734 = vpop.permute.xlu0 %3733
      %3735 = vrot.lane.b32.xlu0 %v3053, 40
      %v3736 = vpop.permute.xlu0 %3735
      %3737 = vrot.lane.b32.xlu0 %v3054, 40
      %v3738 = vpop.permute.xlu0 %3737
      %3739 = vrot.lane.b32.xlu0 %v3055, 40
      %v3740 = vpop.permute.xlu0 %3739
      %3741 = vrot.lane.b32.xlu0 %v3056, 40
      %v3742 = vpop.permute.xlu0 %3741
      %3743 = vrot.lane.b32.xlu0 %v3057, 40
      %v3744 = vpop.permute.xlu0 %3743
      %3745 = vrot.lane.b32.xlu0 %v3058, 40
      %v3746 = vpop.permute.xlu0 %3745
      %3747 = vrot.lane.b32.xlu0 %v3059, 40
      %v3748 = vpop.permute.xlu0 %3747
      %3749 = vrot.lane.b32.xlu0 %v3060, 40
      %v3750 = vpop.permute.xlu0 %3749
      %3751 = vrot.lane.b32.xlu0 %v3061, 40
      %v3752 = vpop.permute.xlu0 %3751
      %3753 = vrot.lane.b32.xlu0 %v3062, 40
      %v3754 = vpop.permute.xlu0 %3753
      %3755 = vrot.lane.b32.xlu0 %v3063, 40
      %v3756 = vpop.permute.xlu0 %3755
      %3757 = vrot.lane.b32.xlu0 %v3064, 40
      %v3758 = vpop.permute.xlu0 %3757
      %3759 = vrot.lane.b32.xlu0 %v3065, 40
      %v3760 = vpop.permute.xlu0 %3759
      %3761 = vrot.lane.b32.xlu0 %v3066, 40
      %v3762 = vpop.permute.xlu0 %3761
      %3763 = vrot.lane.b32.xlu0 %v3067, 40
      %v3764 = vpop.permute.xlu0 %3763
      %3765 = vrot.lane.b32.xlu0 %v3068, 40
      %v3766 = vpop.permute.xlu0 %3765
      %3767 = vrot.lane.b32.xlu0 %v3069, 40
      %v3768 = vpop.permute.xlu0 %3767
      %3769 = vrot.lane.b32.xlu0 %v3070, 40
      %v3770 = vpop.permute.xlu0 %3769
      %3771 = vrot.lane.b32.xlu0 %v3071, 40
      %v3772 = vpop.permute.xlu0 %3771
      %3773 = vrot.lane.b32.xlu0 %v3072, 40
      %v3774 = vpop.permute.xlu0 %3773
      %3775 = vrot.lane.b32.xlu0 %v3073, 40
      %v3776 = vpop.permute.xlu0 %3775
      %3777 = vrot.lane.b32.xlu0 %v3074, 40
      %v3778 = vpop.permute.xlu0 %3777
      %3843 = vrot.lane.b32.xlu0 %v3075, 48
      %v3844 = vpop.permute.xlu0 %3843
      %3845 = vrot.lane.b32.xlu0 %v3076, 48
      %v3846 = vpop.permute.xlu0 %3845
      %3847 = vrot.lane.b32.xlu0 %v3077, 48
      %v3848 = vpop.permute.xlu0 %3847
      %3849 = vrot.lane.b32.xlu0 %v3078, 48
      %v3850 = vpop.permute.xlu0 %3849
      %3851 = vrot.lane.b32.xlu0 %v3079, 48
      %v3852 = vpop.permute.xlu0 %3851
      %3853 = vrot.lane.b32.xlu0 %v3080, 48
      %v3854 = vpop.permute.xlu0 %3853
      %3855 = vrot.lane.b32.xlu0 %v3081, 48
      %v3856 = vpop.permute.xlu0 %3855
      %3857 = vrot.lane.b32.xlu0 %v3082, 48
      %v3858 = vpop.permute.xlu0 %3857
      %3859 = vrot.lane.b32.xlu0 %v3083, 48
      %v3860 = vpop.permute.xlu0 %3859
      %3861 = vrot.lane.b32.xlu0 %v3084, 48
      %v3862 = vpop.permute.xlu0 %3861
      %3863 = vrot.lane.b32.xlu0 %v3085, 48
      %v3864 = vpop.permute.xlu0 %3863
      %3865 = vrot.lane.b32.xlu0 %v3086, 48
      %v3866 = vpop.permute.xlu0 %3865
      %3867 = vrot.lane.b32.xlu0 %v3087, 48
      %v3868 = vpop.permute.xlu0 %3867
      %3869 = vrot.lane.b32.xlu0 %v3088, 48
      %v3870 = vpop.permute.xlu0 %3869
      %3871 = vrot.lane.b32.xlu0 %v3089, 48
      %v3872 = vpop.permute.xlu0 %3871
      %3873 = vrot.lane.b32.xlu0 %v3090, 48
      %v3874 = vpop.permute.xlu0 %3873
      %3875 = vrot.lane.b32.xlu0 %v3091, 48
      %v3876 = vpop.permute.xlu0 %3875
      %3877 = vrot.lane.b32.xlu0 %v3092, 48
      %v3878 = vpop.permute.xlu0 %3877
      %3879 = vrot.lane.b32.xlu0 %v3093, 48
      %v3880 = vpop.permute.xlu0 %3879
      %3881 = vrot.lane.b32.xlu0 %v3094, 48
      %v3882 = vpop.permute.xlu0 %3881
      %3883 = vrot.lane.b32.xlu0 %v3095, 48
      %v3884 = vpop.permute.xlu0 %3883
      %3885 = vrot.lane.b32.xlu0 %v3096, 48
      %v3886 = vpop.permute.xlu0 %3885
      %3887 = vrot.lane.b32.xlu0 %v3097, 48
      %v3888 = vpop.permute.xlu0 %3887
      %3889 = vrot.lane.b32.xlu0 %v3098, 48
      %v3890 = vpop.permute.xlu0 %3889
      %3891 = vrot.lane.b32.xlu0 %v3099, 48
      %v3892 = vpop.permute.xlu0 %3891
      %3893 = vrot.lane.b32.xlu0 %v3100, 48
      %v3894 = vpop.permute.xlu0 %3893
      %3895 = vrot.lane.b32.xlu0 %v3101, 48
      %v3896 = vpop.permute.xlu0 %3895
      %3897 = vrot.lane.b32.xlu0 %v3102, 48
      %v3898 = vpop.permute.xlu0 %3897
      %3899 = vrot.lane.b32.xlu0 %v3103, 48
      %v3900 = vpop.permute.xlu0 %3899
      %3901 = vrot.lane.b32.xlu0 %v3104, 48
      %v3902 = vpop.permute.xlu0 %3901
      %3903 = vrot.lane.b32.xlu0 %v3105, 48
      %v3904 = vpop.permute.xlu0 %3903
      %3905 = vrot.lane.b32.xlu0 %v3106, 48
      %v3906 = vpop.permute.xlu0 %3905
      %3971 = vrot.lane.b32.xlu0 %v3107, 56
      %v3972 = vpop.permute.xlu0 %3971
      %3973 = vrot.lane.b32.xlu0 %v3108, 56
      %v3974 = vpop.permute.xlu0 %3973
      %3975 = vrot.lane.b32.xlu0 %v3109, 56
      %v3976 = vpop.permute.xlu0 %3975
      %3977 = vrot.lane.b32.xlu0 %v3110, 56
      %v3978 = vpop.permute.xlu0 %3977
      %3979 = vrot.lane.b32.xlu0 %v3111, 56
      %v3980 = vpop.permute.xlu0 %3979
      %3981 = vrot.lane.b32.xlu0 %v3112, 56
      %v3982 = vpop.permute.xlu0 %3981
      %3983 = vrot.lane.b32.xlu0 %v3113, 56
      %v3984 = vpop.permute.xlu0 %3983
      %3985 = vrot.lane.b32.xlu0 %v3114, 56
      %v3986 = vpop.permute.xlu0 %3985
      %3987 = vrot.lane.b32.xlu0 %v3115, 56
      %v3988 = vpop.permute.xlu0 %3987
      %3989 = vrot.lane.b32.xlu0 %v3116, 56
      %v3990 = vpop.permute.xlu0 %3989
      %3991 = vrot.lane.b32.xlu0 %v3117, 56
      %v3992 = vpop.permute.xlu0 %3991
      %3993 = vrot.lane.b32.xlu0 %v3118, 56
      %v3994 = vpop.permute.xlu0 %3993
      %3995 = vrot.lane.b32.xlu0 %v3119, 56
      %v3996 = vpop.permute.xlu0 %3995
      %3997 = vrot.lane.b32.xlu0 %v3120, 56
      %v3998 = vpop.permute.xlu0 %3997
      %3999 = vrot.lane.b32.xlu0 %v3121, 56
      %v4000 = vpop.permute.xlu0 %3999
      %4001 = vrot.lane.b32.xlu0 %v3122, 56
      %v4002 = vpop.permute.xlu0 %4001
      %4003 = vrot.lane.b32.xlu0 %v3123, 56
      %v4004 = vpop.permute.xlu0 %4003
      %4005 = vrot.lane.b32.xlu0 %v3124, 56
      %v4006 = vpop.permute.xlu0 %4005
      %4007 = vrot.lane.b32.xlu0 %v3125, 56
      %v4008 = vpop.permute.xlu0 %4007
      %4009 = vrot.lane.b32.xlu0 %v3126, 56
      %v4010 = vpop.permute.xlu0 %4009
      %4011 = vrot.lane.b32.xlu0 %v3127, 56
      %v4012 = vpop.permute.xlu0 %4011
      %4013 = vrot.lane.b32.xlu0 %v3128, 56
      %v4014 = vpop.permute.xlu0 %4013
      %4015 = vrot.lane.b32.xlu0 %v3129, 56
      %v4016 = vpop.permute.xlu0 %4015
      %4017 = vrot.lane.b32.xlu0 %v3130, 56
      %v4018 = vpop.permute.xlu0 %4017
      %4019 = vrot.lane.b32.xlu0 %v3131, 56
      %v4020 = vpop.permute.xlu0 %4019
      %4021 = vrot.lane.b32.xlu0 %v3132, 56
      %v4022 = vpop.permute.xlu0 %4021
      %4023 = vrot.lane.b32.xlu0 %v3133, 56
      %v4024 = vpop.permute.xlu0 %4023
      %4025 = vrot.lane.b32.xlu0 %v3134, 56
      %v4026 = vpop.permute.xlu0 %4025
      %4027 = vrot.lane.b32.xlu0 %v3135, 56
      %v4028 = vpop.permute.xlu0 %4027
      %4029 = vrot.lane.b32.xlu0 %v3136, 56
      %v4030 = vpop.permute.xlu0 %4029
      %4031 = vrot.lane.b32.xlu0 %v3137, 56
      %v4032 = vpop.permute.xlu0 %4031
      %4033 = vrot.lane.b32.xlu0 %v3138, 56
      %v4034 = vpop.permute.xlu0 %4033
      %4099 = vrot.lane.b32.xlu0 %v3139, 64
      %v4100 = vpop.permute.xlu0 %4099
      %4101 = vrot.lane.b32.xlu0 %v3140, 64
      %v4102 = vpop.permute.xlu0 %4101
      %4103 = vrot.lane.b32.xlu0 %v3141, 64
      %v4104 = vpop.permute.xlu0 %4103
      %4105 = vrot.lane.b32.xlu0 %v3142, 64
      %v4106 = vpop.permute.xlu0 %4105
      %4107 = vrot.lane.b32.xlu0 %v3143, 64
      %v4108 = vpop.permute.xlu0 %4107
      %4109 = vrot.lane.b32.xlu0 %v3144, 64
      %v4110 = vpop.permute.xlu0 %4109
      %4111 = vrot.lane.b32.xlu0 %v3145, 64
      %v4112 = vpop.permute.xlu0 %4111
      %4113 = vrot.lane.b32.xlu0 %v3146, 64
      %v4114 = vpop.permute.xlu0 %4113
      %4115 = vrot.lane.b32.xlu0 %v3147, 64
      %v4116 = vpop.permute.xlu0 %4115
      %4117 = vrot.lane.b32.xlu0 %v3148, 64
      %v4118 = vpop.permute.xlu0 %4117
      %4119 = vrot.lane.b32.xlu0 %v3149, 64
      %v4120 = vpop.permute.xlu0 %4119
      %4121 = vrot.lane.b32.xlu0 %v3150, 64
      %v4122 = vpop.permute.xlu0 %4121
      %4123 = vrot.lane.b32.xlu0 %v3151, 64
      %v4124 = vpop.permute.xlu0 %4123
      %4125 = vrot.lane.b32.xlu0 %v3152, 64
      %v4126 = vpop.permute.xlu0 %4125
      %4127 = vrot.lane.b32.xlu0 %v3153, 64
      %v4128 = vpop.permute.xlu0 %4127
      %4129 = vrot.lane.b32.xlu0 %v3154, 64
      %v4130 = vpop.permute.xlu0 %4129
      %4131 = vrot.lane.b32.xlu0 %v3155, 64
      %v4132 = vpop.permute.xlu0 %4131
      %4133 = vrot.lane.b32.xlu0 %v3156, 64
      %v4134 = vpop.permute.xlu0 %4133
      %4135 = vrot.lane.b32.xlu0 %v3157, 64
      %v4136 = vpop.permute.xlu0 %4135
      %4137 = vrot.lane.b32.xlu0 %v3158, 64
      %v4138 = vpop.permute.xlu0 %4137
      %4139 = vrot.lane.b32.xlu0 %v3159, 64
      %v4140 = vpop.permute.xlu0 %4139
      %4141 = vrot.lane.b32.xlu0 %v3160, 64
      %v4142 = vpop.permute.xlu0 %4141
      %4143 = vrot.lane.b32.xlu0 %v3161, 64
      %v4144 = vpop.permute.xlu0 %4143
      %4145 = vrot.lane.b32.xlu0 %v3162, 64
      %v4146 = vpop.permute.xlu0 %4145
      %4147 = vrot.lane.b32.xlu0 %v3163, 64
      %v4148 = vpop.permute.xlu0 %4147
      %4149 = vrot.lane.b32.xlu0 %v3164, 64
      %v4150 = vpop.permute.xlu0 %4149
      %4151 = vrot.lane.b32.xlu0 %v3165, 64
      %v4152 = vpop.permute.xlu0 %4151
      %4153 = vrot.lane.b32.xlu0 %v3166, 64
      %v4154 = vpop.permute.xlu0 %4153
      %4155 = vrot.lane.b32.xlu0 %v3167, 64
      %v4156 = vpop.permute.xlu0 %4155
      %4157 = vrot.lane.b32.xlu0 %v3168, 64
      %v4158 = vpop.permute.xlu0 %4157
      %4159 = vrot.lane.b32.xlu0 %v3169, 64
      %v4160 = vpop.permute.xlu0 %4159
      %4161 = vrot.lane.b32.xlu0 %v3170, 64
      %v4162 = vpop.permute.xlu0 %4161
      %v4195 = vsel %vm306, %v2883, %v3204
      %v4196 = vsel %vm306, %v2884, %v3206
      %v4197 = vsel %vm306, %v2885, %v3208
      %v4198 = vsel %vm306, %v2886, %v3210
      %v4199 = vsel %vm306, %v2887, %v3212
      %v4200 = vsel %vm306, %v2888, %v3214
      %v4201 = vsel %vm306, %v2889, %v3216
      %v4202 = vsel %vm306, %v2890, %v3218
      %v4203 = vsel %vm306, %v2891, %v3220
      %v4204 = vsel %vm306, %v2892, %v3222
      %v4205 = vsel %vm306, %v2893, %v3224
      %v4206 = vsel %vm306, %v2894, %v3226
      %v4207 = vsel %vm306, %v2895, %v3228
      %v4208 = vsel %vm306, %v2896, %v3230
      %v4209 = vsel %vm306, %v2897, %v3232
      %v4210 = vsel %vm306, %v2898, %v3234
      %v4211 = vsel %vm306, %v2899, %v3236
      %v4212 = vsel %vm306, %v2900, %v3238
      %v4213 = vsel %vm306, %v2901, %v3240
      %v4214 = vsel %vm306, %v2902, %v3242
      %v4215 = vsel %vm306, %v2903, %v3244
      %v4216 = vsel %vm306, %v2904, %v3246
      %v4217 = vsel %vm306, %v2905, %v3248
      %v4218 = vsel %vm306, %v2906, %v3250
      %v4219 = vsel %vm306, %v2907, %v3252
      %v4220 = vsel %vm306, %v2908, %v3254
      %v4221 = vsel %vm306, %v2909, %v3256
      %v4222 = vsel %vm306, %v2910, %v3258
      %v4223 = vsel %vm306, %v2911, %v3260
      %v4224 = vsel %vm306, %v2912, %v3262
      %v4225 = vsel %vm306, %v2913, %v3264
      %v4226 = vsel %vm306, %v2914, %v3266
      %v4227 = vsel %vm1772, %v4195, %v3332
      %v4228 = vsel %vm1772, %v4196, %v3334
      %v4229 = vsel %vm1772, %v4197, %v3336
      %v4230 = vsel %vm1772, %v4198, %v3338
      %v4231 = vsel %vm1772, %v4199, %v3340
      %v4232 = vsel %vm1772, %v4200, %v3342
      %v4233 = vsel %vm1772, %v4201, %v3344
      %v4234 = vsel %vm1772, %v4202, %v3346
      %v4235 = vsel %vm1772, %v4203, %v3348
      %v4236 = vsel %vm1772, %v4204, %v3350
      %v4237 = vsel %vm1772, %v4205, %v3352
      %v4238 = vsel %vm1772, %v4206, %v3354
      %v4239 = vsel %vm1772, %v4207, %v3356
      %v4240 = vsel %vm1772, %v4208, %v3358
      %v4241 = vsel %vm1772, %v4209, %v3360
      %v4242 = vsel %vm1772, %v4210, %v3362
      %v4243 = vsel %vm1772, %v4211, %v3364
      %v4244 = vsel %vm1772, %v4212, %v3366
      %v4245 = vsel %vm1772, %v4213, %v3368
      %v4246 = vsel %vm1772, %v4214, %v3370
      %v4247 = vsel %vm1772, %v4215, %v3372
      %v4248 = vsel %vm1772, %v4216, %v3374
      %v4249 = vsel %vm1772, %v4217, %v3376
      %v4250 = vsel %vm1772, %v4218, %v3378
      %v4251 = vsel %vm1772, %v4219, %v3380
      %v4252 = vsel %vm1772, %v4220, %v3382
      %v4253 = vsel %vm1772, %v4221, %v3384
      %v4254 = vsel %vm1772, %v4222, %v3386
      %v4255 = vsel %vm1772, %v4223, %v3388
      %v4256 = vsel %vm1772, %v4224, %v3390
      %v4257 = vsel %vm1772, %v4225, %v3392
      %v4258 = vsel %vm1772, %v4226, %v3394
      %v4259 = vsel %vm1805, %v4227, %v3460
      %v4260 = vsel %vm1805, %v4228, %v3462
      %v4261 = vsel %vm1805, %v4229, %v3464
      %v4262 = vsel %vm1805, %v4230, %v3466
      %v4263 = vsel %vm1805, %v4231, %v3468
      %v4264 = vsel %vm1805, %v4232, %v3470
      %v4265 = vsel %vm1805, %v4233, %v3472
      %v4266 = vsel %vm1805, %v4234, %v3474
      %v4267 = vsel %vm1805, %v4235, %v3476
      %v4268 = vsel %vm1805, %v4236, %v3478
      %v4269 = vsel %vm1805, %v4237, %v3480
      %v4270 = vsel %vm1805, %v4238, %v3482
      %v4271 = vsel %vm1805, %v4239, %v3484
      %v4272 = vsel %vm1805, %v4240, %v3486
      %v4273 = vsel %vm1805, %v4241, %v3488
      %v4274 = vsel %vm1805, %v4242, %v3490
      %v4275 = vsel %vm1805, %v4243, %v3492
      %v4276 = vsel %vm1805, %v4244, %v3494
      %v4277 = vsel %vm1805, %v4245, %v3496
      %v4278 = vsel %vm1805, %v4246, %v3498
      %v4279 = vsel %vm1805, %v4247, %v3500
      %v4280 = vsel %vm1805, %v4248, %v3502
      %v4281 = vsel %vm1805, %v4249, %v3504
      %v4282 = vsel %vm1805, %v4250, %v3506
      %v4283 = vsel %vm1805, %v4251, %v3508
      %v4284 = vsel %vm1805, %v4252, %v3510
      %v4285 = vsel %vm1805, %v4253, %v3512
      %v4286 = vsel %vm1805, %v4254, %v3514
      %v4287 = vsel %vm1805, %v4255, %v3516
      %v4288 = vsel %vm1805, %v4256, %v3518
      %v4289 = vsel %vm1805, %v4257, %v3520
      %v4290 = vsel %vm1805, %v4258, %v3522
      %v4291 = vsel %vm1838, %v4259, %v3588
      %v4292 = vsel %vm1838, %v4260, %v3590
      %v4293 = vsel %vm1838, %v4261, %v3592
      %v4294 = vsel %vm1838, %v4262, %v3594
      %v4295 = vsel %vm1838, %v4263, %v3596
      %v4296 = vsel %vm1838, %v4264, %v3598
      %v4297 = vsel %vm1838, %v4265, %v3600
      %v4298 = vsel %vm1838, %v4266, %v3602
      %v4299 = vsel %vm1838, %v4267, %v3604
      %v4300 = vsel %vm1838, %v4268, %v3606
      %v4301 = vsel %vm1838, %v4269, %v3608
      %v4302 = vsel %vm1838, %v4270, %v3610
      %v4303 = vsel %vm1838, %v4271, %v3612
      %v4304 = vsel %vm1838, %v4272, %v3614
      %v4305 = vsel %vm1838, %v4273, %v3616
      %v4306 = vsel %vm1838, %v4274, %v3618
      %v4307 = vsel %vm1838, %v4275, %v3620
      %v4308 = vsel %vm1838, %v4276, %v3622
      %v4309 = vsel %vm1838, %v4277, %v3624
      %v4310 = vsel %vm1838, %v4278, %v3626
      %v4311 = vsel %vm1838, %v4279, %v3628
      %v4312 = vsel %vm1838, %v4280, %v3630
      %v4313 = vsel %vm1838, %v4281, %v3632
      %v4314 = vsel %vm1838, %v4282, %v3634
      %v4315 = vsel %vm1838, %v4283, %v3636
      %v4316 = vsel %vm1838, %v4284, %v3638
      %v4317 = vsel %vm1838, %v4285, %v3640
      %v4318 = vsel %vm1838, %v4286, %v3642
      %v4319 = vsel %vm1838, %v4287, %v3644
      %v4320 = vsel %vm1838, %v4288, %v3646
      %v4321 = vsel %vm1838, %v4289, %v3648
      %v4322 = vsel %vm1838, %v4290, %v3650
      %v4323 = vsel %vm1871, %v4291, %v3716
      %v4324 = vsel %vm1871, %v4292, %v3718
      %v4325 = vsel %vm1871, %v4293, %v3720
      %v4326 = vsel %vm1871, %v4294, %v3722
      %v4327 = vsel %vm1871, %v4295, %v3724
      %v4328 = vsel %vm1871, %v4296, %v3726
      %v4329 = vsel %vm1871, %v4297, %v3728
      %v4330 = vsel %vm1871, %v4298, %v3730
      %v4331 = vsel %vm1871, %v4299, %v3732
      %v4332 = vsel %vm1871, %v4300, %v3734
      %v4333 = vsel %vm1871, %v4301, %v3736
      %v4334 = vsel %vm1871, %v4302, %v3738
      %v4335 = vsel %vm1871, %v4303, %v3740
      %v4336 = vsel %vm1871, %v4304, %v3742
      %v4337 = vsel %vm1871, %v4305, %v3744
      %v4338 = vsel %vm1871, %v4306, %v3746
      %v4339 = vsel %vm1871, %v4307, %v3748
      %v4340 = vsel %vm1871, %v4308, %v3750
      %v4341 = vsel %vm1871, %v4309, %v3752
      %v4342 = vsel %vm1871, %v4310, %v3754
      %v4343 = vsel %vm1871, %v4311, %v3756
      %v4344 = vsel %vm1871, %v4312, %v3758
      %v4345 = vsel %vm1871, %v4313, %v3760
      %v4346 = vsel %vm1871, %v4314, %v3762
      %v4347 = vsel %vm1871, %v4315, %v3764
      %v4348 = vsel %vm1871, %v4316, %v3766
      %v4349 = vsel %vm1871, %v4317, %v3768
      %v4350 = vsel %vm1871, %v4318, %v3770
      %v4351 = vsel %vm1871, %v4319, %v3772
      %v4352 = vsel %vm1871, %v4320, %v3774
      %v4353 = vsel %vm1871, %v4321, %v3776
      %v4354 = vsel %vm1871, %v4322, %v3778
      %v4355 = vsel %vm1904, %v4323, %v3844
      %v4356 = vsel %vm1904, %v4324, %v3846
      %v4357 = vsel %vm1904, %v4325, %v3848
      %v4358 = vsel %vm1904, %v4326, %v3850
      %v4359 = vsel %vm1904, %v4327, %v3852
      %v4360 = vsel %vm1904, %v4328, %v3854
      %v4361 = vsel %vm1904, %v4329, %v3856
      %v4362 = vsel %vm1904, %v4330, %v3858
      %v4363 = vsel %vm1904, %v4331, %v3860
      %v4364 = vsel %vm1904, %v4332, %v3862
      %v4365 = vsel %vm1904, %v4333, %v3864
      %v4366 = vsel %vm1904, %v4334, %v3866
      %v4367 = vsel %vm1904, %v4335, %v3868
      %v4368 = vsel %vm1904, %v4336, %v3870
      %v4369 = vsel %vm1904, %v4337, %v3872
      %v4370 = vsel %vm1904, %v4338, %v3874
      %v4371 = vsel %vm1904, %v4339, %v3876
      %v4372 = vsel %vm1904, %v4340, %v3878
      %v4373 = vsel %vm1904, %v4341, %v3880
      %v4374 = vsel %vm1904, %v4342, %v3882
      %v4375 = vsel %vm1904, %v4343, %v3884
      %v4376 = vsel %vm1904, %v4344, %v3886
      %v4377 = vsel %vm1904, %v4345, %v3888
      %v4378 = vsel %vm1904, %v4346, %v3890
      %v4379 = vsel %vm1904, %v4347, %v3892
      %v4380 = vsel %vm1904, %v4348, %v3894
      %v4381 = vsel %vm1904, %v4349, %v3896
      %v4382 = vsel %vm1904, %v4350, %v3898
      %v4383 = vsel %vm1904, %v4351, %v3900
      %v4384 = vsel %vm1904, %v4352, %v3902
      %v4385 = vsel %vm1904, %v4353, %v3904
      %v4386 = vsel %vm1904, %v4354, %v3906
      %v4387 = vsel %vm1937, %v4355, %v3972
      %v4388 = vsel %vm1937, %v4356, %v3974
      %v4389 = vsel %vm1937, %v4357, %v3976
      %v4390 = vsel %vm1937, %v4358, %v3978
      %v4391 = vsel %vm1937, %v4359, %v3980
      %v4392 = vsel %vm1937, %v4360, %v3982
      %v4393 = vsel %vm1937, %v4361, %v3984
      %v4394 = vsel %vm1937, %v4362, %v3986
      %v4395 = vsel %vm1937, %v4363, %v3988
      %v4396 = vsel %vm1937, %v4364, %v3990
      %v4397 = vsel %vm1937, %v4365, %v3992
      %v4398 = vsel %vm1937, %v4366, %v3994
      %v4399 = vsel %vm1937, %v4367, %v3996
      %v4400 = vsel %vm1937, %v4368, %v3998
      %v4401 = vsel %vm1937, %v4369, %v4000
      %v4402 = vsel %vm1937, %v4370, %v4002
      %v4403 = vsel %vm1937, %v4371, %v4004
      %v4404 = vsel %vm1937, %v4372, %v4006
      %v4405 = vsel %vm1937, %v4373, %v4008
      %v4406 = vsel %vm1937, %v4374, %v4010
      %v4407 = vsel %vm1937, %v4375, %v4012
      %v4408 = vsel %vm1937, %v4376, %v4014
      %v4409 = vsel %vm1937, %v4377, %v4016
      %v4410 = vsel %vm1937, %v4378, %v4018
      %v4411 = vsel %vm1937, %v4379, %v4020
      %v4412 = vsel %vm1937, %v4380, %v4022
      %v4413 = vsel %vm1937, %v4381, %v4024
      %v4414 = vsel %vm1937, %v4382, %v4026
      %v4415 = vsel %vm1937, %v4383, %v4028
      %v4416 = vsel %vm1937, %v4384, %v4030
      %v4417 = vsel %vm1937, %v4385, %v4032
      %v4418 = vsel %vm1937, %v4386, %v4034
      %v4419 = vsel %vm1970, %v4387, %v4100
      %v4420 = vsel %vm1970, %v4388, %v4102
      %v4421 = vsel %vm1970, %v4389, %v4104
      %v4422 = vsel %vm1970, %v4390, %v4106
      %v4423 = vsel %vm1970, %v4391, %v4108
      %v4424 = vsel %vm1970, %v4392, %v4110
      %v4425 = vsel %vm1970, %v4393, %v4112
      %v4426 = vsel %vm1970, %v4394, %v4114
      %v4427 = vsel %vm1970, %v4395, %v4116
      %v4428 = vsel %vm1970, %v4396, %v4118
      %v4429 = vsel %vm1970, %v4397, %v4120
      %v4430 = vsel %vm1970, %v4398, %v4122
      %v4431 = vsel %vm1970, %v4399, %v4124
      %v4432 = vsel %vm1970, %v4400, %v4126
      %v4433 = vsel %vm1970, %v4401, %v4128
      %v4434 = vsel %vm1970, %v4402, %v4130
      %v4435 = vsel %vm1970, %v4403, %v4132
      %v4436 = vsel %vm1970, %v4404, %v4134
      %v4437 = vsel %vm1970, %v4405, %v4136
      %v4438 = vsel %vm1970, %v4406, %v4138
      %v4439 = vsel %vm1970, %v4407, %v4140
      %v4440 = vsel %vm1970, %v4408, %v4142
      %v4441 = vsel %vm1970, %v4409, %v4144
      %v4442 = vsel %vm1970, %v4410, %v4146
      %v4443 = vsel %vm1970, %v4411, %v4148
      %v4444 = vsel %vm1970, %v4412, %v4150
      %v4445 = vsel %vm1970, %v4413, %v4152
      %v4446 = vsel %vm1970, %v4414, %v4154
      %v4447 = vsel %vm1970, %v4415, %v4156
      %v4448 = vsel %vm1970, %v4416, %v4158
      %v4449 = vsel %vm1970, %v4417, %v4160
      %v4450 = vsel %vm1970, %v4418, %v4162
      %v4451 = vsel %vm2003, %v4419, 0.0
      %v4452 = vsel %vm2003, %v4420, 0.0
      %v4453 = vsel %vm2003, %v4421, 0.0
      %v4454 = vsel %vm2003, %v4422, 0.0
      %v4455 = vsel %vm2003, %v4423, 0.0
      %v4456 = vsel %vm2003, %v4424, 0.0
      %v4457 = vsel %vm2003, %v4425, 0.0
      %v4458 = vsel %vm2003, %v4426, 0.0
      %v4459 = vsel %vm2003, %v4427, 0.0
      %v4460 = vsel %vm2003, %v4428, 0.0
      %v4461 = vsel %vm2003, %v4429, 0.0
      %v4462 = vsel %vm2003, %v4430, 0.0
      %v4463 = vsel %vm2003, %v4431, 0.0
      %v4464 = vsel %vm2003, %v4432, 0.0
      %v4465 = vsel %vm2003, %v4433, 0.0
      %v4466 = vsel %vm2003, %v4434, 0.0
      %v4467 = vsel %vm2003, %v4435, 0.0
      %v4468 = vsel %vm2003, %v4436, 0.0
      %v4469 = vsel %vm2003, %v4437, 0.0
      %v4470 = vsel %vm2003, %v4438, 0.0
      %v4471 = vsel %vm2003, %v4439, 0.0
      %v4472 = vsel %vm2003, %v4440, 0.0
      %v4473 = vsel %vm2003, %v4441, 0.0
      %v4474 = vsel %vm2003, %v4442, 0.0
      %v4475 = vsel %vm2003, %v4443, 0.0
      %v4476 = vsel %vm2003, %v4444, 0.0
      %v4477 = vsel %vm2003, %v4445, 0.0
      %v4478 = vsel %vm2003, %v4446, 0.0
      %v4479 = vsel %vm2003, %v4447, 0.0
      %v4480 = vsel %vm2003, %v4448, 0.0
      %v4481 = vsel %vm2003, %v4449, 0.0
      %v4482 = vsel %vm2003, %v4450, 0.0
      %v4483 = vpack.c.bf16 %v4451, %v4451
      %v4484 = vpack.c.bf16 %v4452, %v4452
      %v4485 = vpack.c.bf16 %v4453, %v4453
      %v4486 = vpack.c.bf16 %v4454, %v4454
      %v4487 = vpack.c.bf16 %v4455, %v4455
      %v4488 = vpack.c.bf16 %v4456, %v4456
      %v4489 = vpack.c.bf16 %v4457, %v4457
      %v4490 = vpack.c.bf16 %v4458, %v4458
      %v4491 = vpack.c.bf16 %v4459, %v4459
      %v4492 = vpack.c.bf16 %v4460, %v4460
      %v4493 = vpack.c.bf16 %v4461, %v4461
      %v4494 = vpack.c.bf16 %v4462, %v4462
      %v4495 = vpack.c.bf16 %v4463, %v4463
      %v4496 = vpack.c.bf16 %v4464, %v4464
      %v4497 = vpack.c.bf16 %v4465, %v4465
      %v4498 = vpack.c.bf16 %v4466, %v4466
      %v4499 = vpack.c.bf16 %v4467, %v4467
      %v4500 = vpack.c.bf16 %v4468, %v4468
      %v4501 = vpack.c.bf16 %v4469, %v4469
      %v4502 = vpack.c.bf16 %v4470, %v4470
      %v4503 = vpack.c.bf16 %v4471, %v4471
      %v4504 = vpack.c.bf16 %v4472, %v4472
      %v4505 = vpack.c.bf16 %v4473, %v4473
      %v4506 = vpack.c.bf16 %v4474, %v4474
      %v4507 = vpack.c.bf16 %v4475, %v4475
      %v4508 = vpack.c.bf16 %v4476, %v4476
      %v4509 = vpack.c.bf16 %v4477, %v4477
      %v4510 = vpack.c.bf16 %v4478, %v4478
      %v4511 = vpack.c.bf16 %v4479, %v4479
      %v4512 = vpack.c.bf16 %v4480, %v4480
      %v4513 = vpack.c.bf16 %v4481, %v4481
      %v4514 = vpack.c.bf16 %v4482, %v4482
      %v4515 = vld [vmem:[%s6] sm:$0xf]
      %v4516 = vld [vmem:[%s6 + $0x4] sm:$0xf]
      %v4517 = vld [vmem:[%s6 + $0x8] sm:$0xf]
      %v4518 = vld [vmem:[%s6 + $0xc] sm:$0xf]
      %v4519 = vld [vmem:[%s6 + $0x10] sm:$0xf]
      %v4520 = vld [vmem:[%s6 + $0x14] sm:$0xf]
      %v4521 = vld [vmem:[%s6 + $0x18] sm:$0xf]
      %v4522 = vld [vmem:[%s6 + $0x1c] sm:$0xf]
      %v4523 = vld [vmem:[%s6 + $0x20] sm:$0xf]
      %v4524 = vld [vmem:[%s6 + $0x24] sm:$0xf]
      %v4525 = vld [vmem:[%s6 + $0x28] sm:$0xf]
      %v4526 = vld [vmem:[%s6 + $0x2c] sm:$0xf]
      %v4527 = vld [vmem:[%s6 + $0x30] sm:$0xf]
      %v4528 = vld [vmem:[%s6 + $0x34] sm:$0xf]
      %v4529 = vld [vmem:[%s6 + $0x38] sm:$0xf]
      %v4530 = vld [vmem:[%s6 + $0x3c] sm:$0xf]
      %v4563 = vunpack.c.l.b16 %v4483
      %v4564 = vunpack.c.l.b16 %v4484
      %v4565 = vunpack.c.l.b16 %v4485
      %v4566 = vunpack.c.l.b16 %v4486
      %v4567 = vunpack.c.l.b16 %v4487
      %v4568 = vunpack.c.l.b16 %v4488
      %v4569 = vunpack.c.l.b16 %v4489
      %v4570 = vunpack.c.l.b16 %v4490
      %v4571 = vunpack.c.l.b16 %v4491
      %v4572 = vunpack.c.l.b16 %v4492
      %v4573 = vunpack.c.l.b16 %v4493
      %v4574 = vunpack.c.l.b16 %v4494
      %v4575 = vunpack.c.l.b16 %v4495
      %v4576 = vunpack.c.l.b16 %v4496
      %v4577 = vunpack.c.l.b16 %v4497
      %v4578 = vunpack.c.l.b16 %v4498
      %v4579 = vunpack.c.l.b16 %v4499
      %v4580 = vunpack.c.l.b16 %v4500
      %v4581 = vunpack.c.l.b16 %v4501
      %v4582 = vunpack.c.l.b16 %v4502
      %v4583 = vunpack.c.l.b16 %v4503
      %v4584 = vunpack.c.l.b16 %v4504
      %v4585 = vunpack.c.l.b16 %v4505
      %v4586 = vunpack.c.l.b16 %v4506
      %v4587 = vunpack.c.l.b16 %v4507
      %v4588 = vunpack.c.l.b16 %v4508
      %v4589 = vunpack.c.l.b16 %v4509
      %v4590 = vunpack.c.l.b16 %v4510
      %v4591 = vunpack.c.l.b16 %v4511
      %v4592 = vunpack.c.l.b16 %v4512
      %v4593 = vunpack.c.l.b16 %v4513
      %v4594 = vunpack.c.l.b16 %v4514
      %v4595 = vpack.c.b16 %v4564, %v4563
      %v4596 = vpack.c.b16 %v4566, %v4565
      %v4597 = vpack.c.b16 %v4568, %v4567
      %v4598 = vpack.c.b16 %v4570, %v4569
      %v4599 = vpack.c.b16 %v4572, %v4571
      %v4600 = vpack.c.b16 %v4574, %v4573
      %v4601 = vpack.c.b16 %v4576, %v4575
      %v4602 = vpack.c.b16 %v4578, %v4577
      %v4603 = vpack.c.b16 %v4580, %v4579
      %v4604 = vpack.c.b16 %v4582, %v4581
      %v4605 = vpack.c.b16 %v4584, %v4583
      %v4606 = vpack.c.b16 %v4586, %v4585
      %v4607 = vpack.c.b16 %v4588, %v4587
      %v4608 = vpack.c.b16 %v4590, %v4589
      %v4609 = vpack.c.b16 %v4592, %v4591
      %v4610 = vpack.c.b16 %v4594, %v4593
      %v4643 = vunpack.c.l.b16 %v4515
      %v4644 = vunpack.c.l.b16 %v4516
      %v4645 = vunpack.c.l.b16 %v4517
      %v4646 = vunpack.c.l.b16 %v4518
      %v4647 = vunpack.c.l.b16 %v4519
      %v4648 = vunpack.c.l.b16 %v4520
      %v4649 = vunpack.c.l.b16 %v4521
      %v4650 = vunpack.c.l.b16 %v4522
      %v4651 = vunpack.c.l.b16 %v4523
      %v4652 = vunpack.c.l.b16 %v4524
      %v4653 = vunpack.c.l.b16 %v4525
      %v4654 = vunpack.c.l.b16 %v4526
      %v4655 = vunpack.c.l.b16 %v4527
      %v4656 = vunpack.c.l.b16 %v4528
      %v4657 = vunpack.c.l.b16 %v4529
      %v4658 = vunpack.c.l.b16 %v4530
      %v4659 = vpack.c.b16 %v4644, %v4643
      %v4660 = vpack.c.b16 %v4646, %v4645
      %v4661 = vpack.c.b16 %v4648, %v4647
      %v4662 = vpack.c.b16 %v4650, %v4649
      %v4663 = vpack.c.b16 %v4652, %v4651
      %v4664 = vpack.c.b16 %v4654, %v4653
      %v4665 = vpack.c.b16 %v4656, %v4655
      %v4666 = vpack.c.b16 %v4658, %v4657
      %4675 = vmatpush.bf16.msra.mxu0 %v4666
      %4676 = vmatpush.bf16.msra.mxu0 %v4665
      %4677 = vmatpush.bf16.msra.mxu0 %v4664
      %4678 = vmatpush.bf16.msra.mxu0 %v4663
      %4679 = vmatpush.bf16.msra.mxu0 %v4662
      %4680 = vmatpush.bf16.msra.mxu0 %v4661
      %4681 = vmatpush.bf16.msra.mxu0 %v4660
      %4682 = vmatpush.bf16.msra.mxu0 %v4659
      %4683 = vmatmul.bf16.gmra.mxu0 %v4595
      %v4684 = vpop.f32.mrf.mxu0
      %v4685 = vadd.f32 0.0, %v4684
      %v4686 = vpop.f32.mrf.mxu0
      %v4687 = vadd.f32 0.0, %v4686
      %4688 = vmatmul.bf16.gmra.mxu0 %v4596
      %v4689 = vpop.f32.mrf.mxu0
      %v4690 = vadd.f32 0.0, %v4689
      %v4691 = vpop.f32.mrf.mxu0
      %v4692 = vadd.f32 0.0, %v4691
      %4693 = vmatmul.bf16.gmra.mxu0 %v4597
      %v4694 = vpop.f32.mrf.mxu0
      %v4695 = vadd.f32 0.0, %v4694
      %v4696 = vpop.f32.mrf.mxu0
      %v4697 = vadd.f32 0.0, %v4696
      %4698 = vmatmul.bf16.gmra.mxu0 %v4598
      %v4699 = vpop.f32.mrf.mxu0
      %v4700 = vadd.f32 0.0, %v4699
      %v4701 = vpop.f32.mrf.mxu0
      %v4702 = vadd.f32 0.0, %v4701
      %4703 = vmatmul.bf16.gmra.mxu0 %v4599
      %v4704 = vpop.f32.mrf.mxu0
      %v4705 = vadd.f32 0.0, %v4704
      %v4706 = vpop.f32.mrf.mxu0
      %v4707 = vadd.f32 0.0, %v4706
      %4708 = vmatmul.bf16.gmra.mxu0 %v4600
      %v4709 = vpop.f32.mrf.mxu0
      %v4710 = vadd.f32 0.0, %v4709
      %v4711 = vpop.f32.mrf.mxu0
      %v4712 = vadd.f32 0.0, %v4711
      %4713 = vmatmul.bf16.gmra.mxu0 %v4601
      %v4714 = vpop.f32.mrf.mxu0
      %v4715 = vadd.f32 0.0, %v4714
      %v4716 = vpop.f32.mrf.mxu0
      %v4717 = vadd.f32 0.0, %v4716
      %4718 = vmatmul.bf16.gmra.mxu0 %v4602
      %v4719 = vpop.f32.mrf.mxu0
      %v4720 = vadd.f32 0.0, %v4719
      %v4721 = vpop.f32.mrf.mxu0
      %v4722 = vadd.f32 0.0, %v4721
      %4723 = vmatmul.bf16.gmra.mxu0 %v4603
      %v4724 = vpop.f32.mrf.mxu0
      %v4725 = vadd.f32 0.0, %v4724
      %v4726 = vpop.f32.mrf.mxu0
      %v4727 = vadd.f32 0.0, %v4726
      %4728 = vmatmul.bf16.gmra.mxu0 %v4604
      %v4729 = vpop.f32.mrf.mxu0
      %v4730 = vadd.f32 0.0, %v4729
      %v4731 = vpop.f32.mrf.mxu0
      %v4732 = vadd.f32 0.0, %v4731
      %4733 = vmatmul.bf16.gmra.mxu0 %v4605
      %v4734 = vpop.f32.mrf.mxu0
      %v4735 = vadd.f32 0.0, %v4734
      %v4736 = vpop.f32.mrf.mxu0
      %v4737 = vadd.f32 0.0, %v4736
      %4738 = vmatmul.bf16.gmra.mxu0 %v4606
      %v4739 = vpop.f32.mrf.mxu0
      %v4740 = vadd.f32 0.0, %v4739
      %v4741 = vpop.f32.mrf.mxu0
      %v4742 = vadd.f32 0.0, %v4741
      %4743 = vmatmul.bf16.gmra.mxu0 %v4607
      %v4744 = vpop.f32.mrf.mxu0
      %v4745 = vadd.f32 0.0, %v4744
      %v4746 = vpop.f32.mrf.mxu0
      %v4747 = vadd.f32 0.0, %v4746
      %4748 = vmatmul.bf16.gmra.mxu0 %v4608
      %v4749 = vpop.f32.mrf.mxu0
      %v4750 = vadd.f32 0.0, %v4749
      %v4751 = vpop.f32.mrf.mxu0
      %v4752 = vadd.f32 0.0, %v4751
      %4753 = vmatmul.bf16.gmra.mxu0 %v4609
      %v4754 = vpop.f32.mrf.mxu0
      %v4755 = vadd.f32 0.0, %v4754
      %v4756 = vpop.f32.mrf.mxu0
      %v4757 = vadd.f32 0.0, %v4756
      %4758 = vmatmul.bf16.gmra.mxu0 %v4610
      %v4759 = vpop.f32.mrf.mxu0
      %v4760 = vadd.f32 0.0, %v4759
      %v4761 = vpop.f32.mrf.mxu0
      %v4762 = vadd.f32 0.0, %v4761
      %4763 = vdwg.mxu0
      %v4764 = vld [vmem:[%s300] sm:$0xff]
      %v4765 = vld [vmem:[%s300 + $0x8] sm:$0xff]
      %v4766 = vld [vmem:[%s300 + $0x10] sm:$0xff]
      %v4767 = vld [vmem:[%s300 + $0x18] sm:$0xff]
      %v4768 = vld [vmem:[%s300 + $0x20] sm:$0xff]
      %v4769 = vld [vmem:[%s300 + $0x28] sm:$0xff]
      %v4770 = vld [vmem:[%s300 + $0x30] sm:$0xff]
      %v4771 = vld [vmem:[%s300 + $0x38] sm:$0xff]
      %v4772 = vld [vmem:[%s300 + $0x40] sm:$0xff]
      %v4773 = vld [vmem:[%s300 + $0x48] sm:$0xff]
      %v4774 = vld [vmem:[%s300 + $0x50] sm:$0xff]
      %v4775 = vld [vmem:[%s300 + $0x58] sm:$0xff]
      %v4776 = vld [vmem:[%s300 + $0x60] sm:$0xff]
      %v4777 = vld [vmem:[%s300 + $0x68] sm:$0xff]
      %v4778 = vld [vmem:[%s300 + $0x70] sm:$0xff]
      %v4779 = vld [vmem:[%s300 + $0x78] sm:$0xff]
      %v4780 = vld [vmem:[%s300 + $0x80] sm:$0xff]
      %v4781 = vld [vmem:[%s300 + $0x88] sm:$0xff]
      %v4782 = vld [vmem:[%s300 + $0x90] sm:$0xff]
      %v4783 = vld [vmem:[%s300 + $0x98] sm:$0xff]
      %v4784 = vld [vmem:[%s300 + $0xa0] sm:$0xff]
      %v4785 = vld [vmem:[%s300 + $0xa8] sm:$0xff]
      %v4786 = vld [vmem:[%s300 + $0xb0] sm:$0xff]
      %v4787 = vld [vmem:[%s300 + $0xb8] sm:$0xff]
      %v4788 = vld [vmem:[%s300 + $0xc0] sm:$0xff]
      %v4789 = vld [vmem:[%s300 + $0xc8] sm:$0xff]
      %v4790 = vld [vmem:[%s300 + $0xd0] sm:$0xff]
      %v4791 = vld [vmem:[%s300 + $0xd8] sm:$0xff]
      %v4792 = vld [vmem:[%s300 + $0xe0] sm:$0xff]
      %v4793 = vld [vmem:[%s300 + $0xe8] sm:$0xff]
      %v4794 = vld [vmem:[%s300 + $0xf0] sm:$0xff]
      %v4795 = vld [vmem:[%s300 + $0xf8] sm:$0xff]
      %v4796 = vadd.f32 %v4685, %v4764
      %v4797 = vadd.f32 %v4687, %v4765
      %v4798 = vadd.f32 %v4690, %v4766
      %v4799 = vadd.f32 %v4692, %v4767
      %v4800 = vadd.f32 %v4695, %v4768
      %v4801 = vadd.f32 %v4697, %v4769
      %v4802 = vadd.f32 %v4700, %v4770
      %v4803 = vadd.f32 %v4702, %v4771
      %v4804 = vadd.f32 %v4705, %v4772
      %v4805 = vadd.f32 %v4707, %v4773
      %v4806 = vadd.f32 %v4710, %v4774
      %v4807 = vadd.f32 %v4712, %v4775
      %v4808 = vadd.f32 %v4715, %v4776
      %v4809 = vadd.f32 %v4717, %v4777
      %v4810 = vadd.f32 %v4720, %v4778
      %v4811 = vadd.f32 %v4722, %v4779
      %v4812 = vadd.f32 %v4725, %v4780
      %v4813 = vadd.f32 %v4727, %v4781
      %v4814 = vadd.f32 %v4730, %v4782
      %v4815 = vadd.f32 %v4732, %v4783
      %v4816 = vadd.f32 %v4735, %v4784
      %v4817 = vadd.f32 %v4737, %v4785
      %v4818 = vadd.f32 %v4740, %v4786
      %v4819 = vadd.f32 %v4742, %v4787
      %v4820 = vadd.f32 %v4745, %v4788
      %v4821 = vadd.f32 %v4747, %v4789
      %v4822 = vadd.f32 %v4750, %v4790
      %v4823 = vadd.f32 %v4752, %v4791
      %v4824 = vadd.f32 %v4755, %v4792
      %v4825 = vadd.f32 %v4757, %v4793
      %v4826 = vadd.f32 %v4760, %v4794
      %v4827 = vadd.f32 %v4762, %v4795
      %4828 = vst.msk [vmem:[%s394 + $0x1] sm:$0xff] %vm306, %v4796
      %4829 = vst.msk [vmem:[%s394 + $0x9] sm:$0xff] %vm306, %v4797
      %4830 = vst.msk [vmem:[%s394 + $0x19] sm:$0xff] %vm306, %v4798
      %4831 = vst.msk [vmem:[%s394 + $0x21] sm:$0xff] %vm306, %v4799
      %4832 = vst.msk [vmem:[%s394 + $0x31] sm:$0xff] %vm306, %v4800
      %4833 = vst.msk [vmem:[%s394 + $0x39] sm:$0xff] %vm306, %v4801
      %4834 = vst.msk [vmem:[%s394 + $0x49] sm:$0xff] %vm306, %v4802
      %4835 = vst.msk [vmem:[%s394 + $0x51] sm:$0xff] %vm306, %v4803
      %4836 = vst.msk [vmem:[%s394 + $0x61] sm:$0xff] %vm306, %v4804
      %4837 = vst.msk [vmem:[%s394 + $0x69] sm:$0xff] %vm306, %v4805
      %4838 = vst.msk [vmem:[%s394 + $0x79] sm:$0xff] %vm306, %v4806
      %4839 = vst.msk [vmem:[%s394 + $0x81] sm:$0xff] %vm306, %v4807
      %4840 = vst.msk [vmem:[%s394 + $0x91] sm:$0xff] %vm306, %v4808
      %4841 = vst.msk [vmem:[%s394 + $0x99] sm:$0xff] %vm306, %v4809
      %4842 = vst.msk [vmem:[%s394 + $0xa9] sm:$0xff] %vm306, %v4810
      %4843 = vst.msk [vmem:[%s394 + $0xb1] sm:$0xff] %vm306, %v4811
      %4844 = vst.msk [vmem:[%s394 + $0xc1] sm:$0xff] %vm306, %v4812
      %4845 = vst.msk [vmem:[%s394 + $0xc9] sm:$0xff] %vm306, %v4813
      %4846 = vst.msk [vmem:[%s394 + $0xd9] sm:$0xff] %vm306, %v4814
      %4847 = vst.msk [vmem:[%s394 + $0xe1] sm:$0xff] %vm306, %v4815
      %4848 = vst.msk [vmem:[%s394 + $0xf1] sm:$0xff] %vm306, %v4816
      %4849 = vst.msk [vmem:[%s394 + $0xf9] sm:$0xff] %vm306, %v4817
      %4850 = vst.msk [vmem:[%s394 + $0x109] sm:$0xff] %vm306, %v4818
      %4851 = vst.msk [vmem:[%s394 + $0x111] sm:$0xff] %vm306, %v4819
      %4852 = vst.msk [vmem:[%s394 + $0x121] sm:$0xff] %vm306, %v4820
      %4853 = vst.msk [vmem:[%s394 + $0x129] sm:$0xff] %vm306, %v4821
      %4854 = vst.msk [vmem:[%s394 + $0x139] sm:$0xff] %vm306, %v4822
      %4855 = vst.msk [vmem:[%s394 + $0x141] sm:$0xff] %vm306, %v4823
      %4856 = vst.msk [vmem:[%s394 + $0x151] sm:$0xff] %vm306, %v4824
      %4857 = vst.msk [vmem:[%s394 + $0x159] sm:$0xff] %vm306, %v4825
      %4858 = vst.msk [vmem:[%s394 + $0x169] sm:$0xff] %vm306, %v4826
      %4859 = vst.msk [vmem:[%s394 + $0x171] sm:$0xff] %vm306, %v4827
      %v4860 = vld [vmem:[#allocation2] sm:$0xff]
      %v4861 = vld [vmem:[#allocation2 + $0x8] sm:$0xff]
      %v4862 = vld [vmem:[#allocation2 + $0x18] sm:$0xff]
      %v4863 = vld [vmem:[#allocation2 + $0x20] sm:$0xff]
      %v4864 = vld [vmem:[#allocation2 + $0x30] sm:$0xff]
      %v4865 = vld [vmem:[#allocation2 + $0x38] sm:$0xff]
      %v4866 = vld [vmem:[#allocation2 + $0x48] sm:$0xff]
      %v4867 = vld [vmem:[#allocation2 + $0x50] sm:$0xff]
      %v4868 = vld [vmem:[#allocation2 + $0x60] sm:$0xff]
      %v4869 = vld [vmem:[#allocation2 + $0x68] sm:$0xff]
      %v4870 = vld [vmem:[#allocation2 + $0x78] sm:$0xff]
      %v4871 = vld [vmem:[#allocation2 + $0x80] sm:$0xff]
      %v4872 = vld [vmem:[#allocation2 + $0x90] sm:$0xff]
      %v4873 = vld [vmem:[#allocation2 + $0x98] sm:$0xff]
      %v4874 = vld [vmem:[#allocation2 + $0xa8] sm:$0xff]
      %v4875 = vld [vmem:[#allocation2 + $0xb0] sm:$0xff]
      %v4876 = vld [vmem:[#allocation2 + $0xc0] sm:$0xff]
      %v4877 = vld [vmem:[#allocation2 + $0xc8] sm:$0xff]
      %v4878 = vld [vmem:[#allocation2 + $0xd8] sm:$0xff]
      %v4879 = vld [vmem:[#allocation2 + $0xe0] sm:$0xff]
      %v4880 = vld [vmem:[#allocation2 + $0xf0] sm:$0xff]
      %v4881 = vld [vmem:[#allocation2 + $0xf8] sm:$0xff]
      %v4882 = vld [vmem:[#allocation2 + $0x108] sm:$0xff]
      %v4883 = vld [vmem:[#allocation2 + $0x110] sm:$0xff]
      %v4884 = vld [vmem:[#allocation2 + $0x120] sm:$0xff]
      %v4885 = vld [vmem:[#allocation2 + $0x128] sm:$0xff]
      %v4886 = vld [vmem:[#allocation2 + $0x138] sm:$0xff]
      %v4887 = vld [vmem:[#allocation2 + $0x140] sm:$0xff]
      %v4888 = vld [vmem:[#allocation2 + $0x150] sm:$0xff]
      %v4889 = vld [vmem:[#allocation2 + $0x158] sm:$0xff]
      %v4890 = vld [vmem:[#allocation2 + $0x168] sm:$0xff]
      %v4891 = vld [vmem:[#allocation2 + $0x170] sm:$0xff]
      %v4892 = vld [vmem:[#allocation2 + $0x1] sm:$0xff]
      %v4893 = vld [vmem:[#allocation2 + $0x9] sm:$0xff]
      %v4894 = vld [vmem:[#allocation2 + $0x19] sm:$0xff]
      %v4895 = vld [vmem:[#allocation2 + $0x21] sm:$0xff]
      %v4896 = vld [vmem:[#allocation2 + $0x31] sm:$0xff]
      %v4897 = vld [vmem:[#allocation2 + $0x39] sm:$0xff]
      %v4898 = vld [vmem:[#allocation2 + $0x49] sm:$0xff]
      %v4899 = vld [vmem:[#allocation2 + $0x51] sm:$0xff]
      %v4900 = vld [vmem:[#allocation2 + $0x61] sm:$0xff]
      %v4901 = vld [vmem:[#allocation2 + $0x69] sm:$0xff]
      %v4902 = vld [vmem:[#allocation2 + $0x79] sm:$0xff]
      %v4903 = vld [vmem:[#allocation2 + $0x81] sm:$0xff]
      %v4904 = vld [vmem:[#allocation2 + $0x91] sm:$0xff]
      %v4905 = vld [vmem:[#allocation2 + $0x99] sm:$0xff]
      %v4906 = vld [vmem:[#allocation2 + $0xa9] sm:$0xff]
      %v4907 = vld [vmem:[#allocation2 + $0xb1] sm:$0xff]
      %v4908 = vld [vmem:[#allocation2 + $0xc1] sm:$0xff]
      %v4909 = vld [vmem:[#allocation2 + $0xc9] sm:$0xff]
      %v4910 = vld [vmem:[#allocation2 + $0xd9] sm:$0xff]
      %v4911 = vld [vmem:[#allocation2 + $0xe1] sm:$0xff]
      %v4912 = vld [vmem:[#allocation2 + $0xf1] sm:$0xff]
      %v4913 = vld [vmem:[#allocation2 + $0xf9] sm:$0xff]
      %v4914 = vld [vmem:[#allocation2 + $0x109] sm:$0xff]
      %v4915 = vld [vmem:[#allocation2 + $0x111] sm:$0xff]
      %v4916 = vld [vmem:[#allocation2 + $0x121] sm:$0xff]
      %v4917 = vld [vmem:[#allocation2 + $0x129] sm:$0xff]
      %v4918 = vld [vmem:[#allocation2 + $0x139] sm:$0xff]
      %v4919 = vld [vmem:[#allocation2 + $0x141] sm:$0xff]
      %v4920 = vld [vmem:[#allocation2 + $0x151] sm:$0xff]
      %v4921 = vld [vmem:[#allocation2 + $0x159] sm:$0xff]
      %v4922 = vld [vmem:[#allocation2 + $0x169] sm:$0xff]
      %v4923 = vld [vmem:[#allocation2 + $0x171] sm:$0xff]
      %v4924 = vld [vmem:[#allocation2 + $0x2] sm:$0xff]
      %v4925 = vld [vmem:[#allocation2 + $0xa] sm:$0xff]
      %v4926 = vld [vmem:[#allocation2 + $0x1a] sm:$0xff]
      %v4927 = vld [vmem:[#allocation2 + $0x22] sm:$0xff]
      %v4928 = vld [vmem:[#allocation2 + $0x32] sm:$0xff]
      %v4929 = vld [vmem:[#allocation2 + $0x3a] sm:$0xff]
      %v4930 = vld [vmem:[#allocation2 + $0x4a] sm:$0xff]
      %v4931 = vld [vmem:[#allocation2 + $0x52] sm:$0xff]
      %v4932 = vld [vmem:[#allocation2 + $0x62] sm:$0xff]
      %v4933 = vld [vmem:[#allocation2 + $0x6a] sm:$0xff]
      %v4934 = vld [vmem:[#allocation2 + $0x7a] sm:$0xff]
      %v4935 = vld [vmem:[#allocation2 + $0x82] sm:$0xff]
      %v4936 = vld [vmem:[#allocation2 + $0x92] sm:$0xff]
      %v4937 = vld [vmem:[#allocation2 + $0x9a] sm:$0xff]
      %v4938 = vld [vmem:[#allocation2 + $0xaa] sm:$0xff]
      %v4939 = vld [vmem:[#allocation2 + $0xb2] sm:$0xff]
      %v4940 = vld [vmem:[#allocation2 + $0xc2] sm:$0xff]
      %v4941 = vld [vmem:[#allocation2 + $0xca] sm:$0xff]
      %v4942 = vld [vmem:[#allocation2 + $0xda] sm:$0xff]
      %v4943 = vld [vmem:[#allocation2 + $0xe2] sm:$0xff]
      %v4944 = vld [vmem:[#allocation2 + $0xf2] sm:$0xff]
      %v4945 = vld [vmem:[#allocation2 + $0xfa] sm:$0xff]
      %v4946 = vld [vmem:[#allocation2 + $0x10a] sm:$0xff]
      %v4947 = vld [vmem:[#allocation2 + $0x112] sm:$0xff]
      %v4948 = vld [vmem:[#allocation2 + $0x122] sm:$0xff]
      %v4949 = vld [vmem:[#allocation2 + $0x12a] sm:$0xff]
      %v4950 = vld [vmem:[#allocation2 + $0x13a] sm:$0xff]
      %v4951 = vld [vmem:[#allocation2 + $0x142] sm:$0xff]
      %v4952 = vld [vmem:[#allocation2 + $0x152] sm:$0xff]
      %v4953 = vld [vmem:[#allocation2 + $0x15a] sm:$0xff]
      %v4954 = vld [vmem:[#allocation2 + $0x16a] sm:$0xff]
      %v4955 = vld [vmem:[#allocation2 + $0x172] sm:$0xff]
      %v4956 = vld [vmem:[%s394] sm:$0xff]
      %v4957 = vld [vmem:[%s394 + $0x8] sm:$0xff]
      %v4958 = vld [vmem:[%s394 + $0x18] sm:$0xff]
      %v4959 = vld [vmem:[%s394 + $0x20] sm:$0xff]
      %v4960 = vld [vmem:[%s394 + $0x30] sm:$0xff]
      %v4961 = vld [vmem:[%s394 + $0x38] sm:$0xff]
      %v4962 = vld [vmem:[%s394 + $0x48] sm:$0xff]
      %v4963 = vld [vmem:[%s394 + $0x50] sm:$0xff]
      %v4964 = vld [vmem:[%s394 + $0x60] sm:$0xff]
      %v4965 = vld [vmem:[%s394 + $0x68] sm:$0xff]
      %v4966 = vld [vmem:[%s394 + $0x78] sm:$0xff]
      %v4967 = vld [vmem:[%s394 + $0x80] sm:$0xff]
      %v4968 = vld [vmem:[%s394 + $0x90] sm:$0xff]
      %v4969 = vld [vmem:[%s394 + $0x98] sm:$0xff]
      %v4970 = vld [vmem:[%s394 + $0xa8] sm:$0xff]
      %v4971 = vld [vmem:[%s394 + $0xb0] sm:$0xff]
      %v4972 = vld [vmem:[%s394 + $0xc0] sm:$0xff]
      %v4973 = vld [vmem:[%s394 + $0xc8] sm:$0xff]
      %v4974 = vld [vmem:[%s394 + $0xd8] sm:$0xff]
      %v4975 = vld [vmem:[%s394 + $0xe0] sm:$0xff]
      %v4976 = vld [vmem:[%s394 + $0xf0] sm:$0xff]
      %v4977 = vld [vmem:[%s394 + $0xf8] sm:$0xff]
      %v4978 = vld [vmem:[%s394 + $0x108] sm:$0xff]
      %v4979 = vld [vmem:[%s394 + $0x110] sm:$0xff]
      %v4980 = vld [vmem:[%s394 + $0x120] sm:$0xff]
      %v4981 = vld [vmem:[%s394 + $0x128] sm:$0xff]
      %v4982 = vld [vmem:[%s394 + $0x138] sm:$0xff]
      %v4983 = vld [vmem:[%s394 + $0x140] sm:$0xff]
      %v4984 = vld [vmem:[%s394 + $0x150] sm:$0xff]
      %v4985 = vld [vmem:[%s394 + $0x158] sm:$0xff]
      %v4986 = vld [vmem:[%s394 + $0x168] sm:$0xff]
      %v4987 = vld [vmem:[%s394 + $0x170] sm:$0xff]
      %v4988 = vld [vmem:[%s394 + $0x1] sm:$0xff]
      %v4989 = vld [vmem:[%s394 + $0x9] sm:$0xff]
      %v4990 = vld [vmem:[%s394 + $0x19] sm:$0xff]
      %v4991 = vld [vmem:[%s394 + $0x21] sm:$0xff]
      %v4992 = vld [vmem:[%s394 + $0x31] sm:$0xff]
      %v4993 = vld [vmem:[%s394 + $0x39] sm:$0xff]
      %v4994 = vld [vmem:[%s394 + $0x49] sm:$0xff]
      %v4995 = vld [vmem:[%s394 + $0x51] sm:$0xff]
      %v4996 = vld [vmem:[%s394 + $0x61] sm:$0xff]
      %v4997 = vld [vmem:[%s394 + $0x69] sm:$0xff]
      %v4998 = vld [vmem:[%s394 + $0x79] sm:$0xff]
      %v4999 = vld [vmem:[%s394 + $0x81] sm:$0xff]
      %v5000 = vld [vmem:[%s394 + $0x91] sm:$0xff]
      %v5001 = vld [vmem:[%s394 + $0x99] sm:$0xff]
      %v5002 = vld [vmem:[%s394 + $0xa9] sm:$0xff]
      %v5003 = vld [vmem:[%s394 + $0xb1] sm:$0xff]
      %v5004 = vld [vmem:[%s394 + $0xc1] sm:$0xff]
      %v5005 = vld [vmem:[%s394 + $0xc9] sm:$0xff]
      %v5006 = vld [vmem:[%s394 + $0xd9] sm:$0xff]
      %v5007 = vld [vmem:[%s394 + $0xe1] sm:$0xff]
      %v5008 = vld [vmem:[%s394 + $0xf1] sm:$0xff]
      %v5009 = vld [vmem:[%s394 + $0xf9] sm:$0xff]
      %v5010 = vld [vmem:[%s394 + $0x109] sm:$0xff]
      %v5011 = vld [vmem:[%s394 + $0x111] sm:$0xff]
      %v5012 = vld [vmem:[%s394 + $0x121] sm:$0xff]
      %v5013 = vld [vmem:[%s394 + $0x129] sm:$0xff]
      %v5014 = vld [vmem:[%s394 + $0x139] sm:$0xff]
      %v5015 = vld [vmem:[%s394 + $0x141] sm:$0xff]
      %v5016 = vld [vmem:[%s394 + $0x151] sm:$0xff]
      %v5017 = vld [vmem:[%s394 + $0x159] sm:$0xff]
      %v5018 = vld [vmem:[%s394 + $0x169] sm:$0xff]
      %v5019 = vld [vmem:[%s394 + $0x171] sm:$0xff]
      %v5020 = vld [vmem:[%s394 + $0x2] sm:$0xff]
      %v5021 = vld [vmem:[%s394 + $0xa] sm:$0xff]
      %v5022 = vld [vmem:[%s394 + $0x1a] sm:$0xff]
      %v5023 = vld [vmem:[%s394 + $0x22] sm:$0xff]
      %v5024 = vld [vmem:[%s394 + $0x32] sm:$0xff]
      %v5025 = vld [vmem:[%s394 + $0x3a] sm:$0xff]
      %v5026 = vld [vmem:[%s394 + $0x4a] sm:$0xff]
      %v5027 = vld [vmem:[%s394 + $0x52] sm:$0xff]
      %v5028 = vld [vmem:[%s394 + $0x62] sm:$0xff]
      %v5029 = vld [vmem:[%s394 + $0x6a] sm:$0xff]
      %v5030 = vld [vmem:[%s394 + $0x7a] sm:$0xff]
      %v5031 = vld [vmem:[%s394 + $0x82] sm:$0xff]
      %v5032 = vld [vmem:[%s394 + $0x92] sm:$0xff]
      %v5033 = vld [vmem:[%s394 + $0x9a] sm:$0xff]
      %v5034 = vld [vmem:[%s394 + $0xaa] sm:$0xff]
      %v5035 = vld [vmem:[%s394 + $0xb2] sm:$0xff]
      %v5036 = vld [vmem:[%s394 + $0xc2] sm:$0xff]
      %v5037 = vld [vmem:[%s394 + $0xca] sm:$0xff]
      %v5038 = vld [vmem:[%s394 + $0xda] sm:$0xff]
      %v5039 = vld [vmem:[%s394 + $0xe2] sm:$0xff]
      %v5040 = vld [vmem:[%s394 + $0xf2] sm:$0xff]
      %v5041 = vld [vmem:[%s394 + $0xfa] sm:$0xff]
      %v5042 = vld [vmem:[%s394 + $0x10a] sm:$0xff]
      %v5043 = vld [vmem:[%s394 + $0x112] sm:$0xff]
      %v5044 = vld [vmem:[%s394 + $0x122] sm:$0xff]
      %v5045 = vld [vmem:[%s394 + $0x12a] sm:$0xff]
      %v5046 = vld [vmem:[%s394 + $0x13a] sm:$0xff]
      %v5047 = vld [vmem:[%s394 + $0x142] sm:$0xff]
      %v5048 = vld [vmem:[%s394 + $0x152] sm:$0xff]
      %v5049 = vld [vmem:[%s394 + $0x15a] sm:$0xff]
      %v5050 = vld [vmem:[%s394 + $0x16a] sm:$0xff]
      %v5051 = vld [vmem:[%s394 + $0x172] sm:$0xff]
      %v5052 = vld [vmem:[%s619] sm:$0xff]
      %v5053 = vld [vmem:[%s619 + $0x8] sm:$0xff]
      %v5054 = vld [vmem:[%s619 + $0x18] sm:$0xff]
      %v5055 = vld [vmem:[%s619 + $0x20] sm:$0xff]
      %v5056 = vld [vmem:[%s619 + $0x30] sm:$0xff]
      %v5057 = vld [vmem:[%s619 + $0x38] sm:$0xff]
      %v5058 = vld [vmem:[%s619 + $0x48] sm:$0xff]
      %v5059 = vld [vmem:[%s619 + $0x50] sm:$0xff]
      %v5060 = vld [vmem:[%s619 + $0x60] sm:$0xff]
      %v5061 = vld [vmem:[%s619 + $0x68] sm:$0xff]
      %v5062 = vld [vmem:[%s619 + $0x78] sm:$0xff]
      %v5063 = vld [vmem:[%s619 + $0x80] sm:$0xff]
      %v5064 = vld [vmem:[%s619 + $0x90] sm:$0xff]
      %v5065 = vld [vmem:[%s619 + $0x98] sm:$0xff]
      %v5066 = vld [vmem:[%s619 + $0xa8] sm:$0xff]
      %v5067 = vld [vmem:[%s619 + $0xb0] sm:$0xff]
      %v5068 = vld [vmem:[%s619 + $0xc0] sm:$0xff]
      %v5069 = vld [vmem:[%s619 + $0xc8] sm:$0xff]
      %v5070 = vld [vmem:[%s619 + $0xd8] sm:$0xff]
      %v5071 = vld [vmem:[%s619 + $0xe0] sm:$0xff]
      %v5072 = vld [vmem:[%s619 + $0xf0] sm:$0xff]
      %v5073 = vld [vmem:[%s619 + $0xf8] sm:$0xff]
      %v5074 = vld [vmem:[%s619 + $0x108] sm:$0xff]
      %v5075 = vld [vmem:[%s619 + $0x110] sm:$0xff]
      %v5076 = vld [vmem:[%s619 + $0x120] sm:$0xff]
      %v5077 = vld [vmem:[%s619 + $0x128] sm:$0xff]
      %v5078 = vld [vmem:[%s619 + $0x138] sm:$0xff]
      %v5079 = vld [vmem:[%s619 + $0x140] sm:$0xff]
      %v5080 = vld [vmem:[%s619 + $0x150] sm:$0xff]
      %v5081 = vld [vmem:[%s619 + $0x158] sm:$0xff]
      %v5082 = vld [vmem:[%s619 + $0x168] sm:$0xff]
      %v5083 = vld [vmem:[%s619 + $0x170] sm:$0xff]
      %v5084 = vld [vmem:[%s619 + $0x1] sm:$0xff]
      %v5085 = vld [vmem:[%s619 + $0x9] sm:$0xff]
      %v5086 = vld [vmem:[%s619 + $0x19] sm:$0xff]
      %v5087 = vld [vmem:[%s619 + $0x21] sm:$0xff]
      %v5088 = vld [vmem:[%s619 + $0x31] sm:$0xff]
      %v5089 = vld [vmem:[%s619 + $0x39] sm:$0xff]
      %v5090 = vld [vmem:[%s619 + $0x49] sm:$0xff]
      %v5091 = vld [vmem:[%s619 + $0x51] sm:$0xff]
      %v5092 = vld [vmem:[%s619 + $0x61] sm:$0xff]
      %v5093 = vld [vmem:[%s619 + $0x69] sm:$0xff]
      %v5094 = vld [vmem:[%s619 + $0x79] sm:$0xff]
      %v5095 = vld [vmem:[%s619 + $0x81] sm:$0xff]
      %v5096 = vld [vmem:[%s619 + $0x91] sm:$0xff]
      %v5097 = vld [vmem:[%s619 + $0x99] sm:$0xff]
      %v5098 = vld [vmem:[%s619 + $0xa9] sm:$0xff]
      %v5099 = vld [vmem:[%s619 + $0xb1] sm:$0xff]
      %v5100 = vld [vmem:[%s619 + $0xc1] sm:$0xff]
      %v5101 = vld [vmem:[%s619 + $0xc9] sm:$0xff]
      %v5102 = vld [vmem:[%s619 + $0xd9] sm:$0xff]
      %v5103 = vld [vmem:[%s619 + $0xe1] sm:$0xff]
      %v5104 = vld [vmem:[%s619 + $0xf1] sm:$0xff]
      %v5105 = vld [vmem:[%s619 + $0xf9] sm:$0xff]
      %v5106 = vld [vmem:[%s619 + $0x109] sm:$0xff]
      %v5107 = vld [vmem:[%s619 + $0x111] sm:$0xff]
      %v5108 = vld [vmem:[%s619 + $0x121] sm:$0xff]
      %v5109 = vld [vmem:[%s619 + $0x129] sm:$0xff]
      %v5110 = vld [vmem:[%s619 + $0x139] sm:$0xff]
      %v5111 = vld [vmem:[%s619 + $0x141] sm:$0xff]
      %v5112 = vld [vmem:[%s619 + $0x151] sm:$0xff]
      %v5113 = vld [vmem:[%s619 + $0x159] sm:$0xff]
      %v5114 = vld [vmem:[%s619 + $0x169] sm:$0xff]
      %v5115 = vld [vmem:[%s619 + $0x171] sm:$0xff]
      %v5116 = vld [vmem:[%s619 + $0x2] sm:$0xff]
      %v5117 = vld [vmem:[%s619 + $0xa] sm:$0xff]
      %v5118 = vld [vmem:[%s619 + $0x1a] sm:$0xff]
      %v5119 = vld [vmem:[%s619 + $0x22] sm:$0xff]
      %v5120 = vld [vmem:[%s619 + $0x32] sm:$0xff]
      %v5121 = vld [vmem:[%s619 + $0x3a] sm:$0xff]
      %v5122 = vld [vmem:[%s619 + $0x4a] sm:$0xff]
      %v5123 = vld [vmem:[%s619 + $0x52] sm:$0xff]
      %v5124 = vld [vmem:[%s619 + $0x62] sm:$0xff]
      %v5125 = vld [vmem:[%s619 + $0x6a] sm:$0xff]
      %v5126 = vld [vmem:[%s619 + $0x7a] sm:$0xff]
      %v5127 = vld [vmem:[%s619 + $0x82] sm:$0xff]
      %v5128 = vld [vmem:[%s619 + $0x92] sm:$0xff]
      %v5129 = vld [vmem:[%s619 + $0x9a] sm:$0xff]
      %v5130 = vld [vmem:[%s619 + $0xaa] sm:$0xff]
      %v5131 = vld [vmem:[%s619 + $0xb2] sm:$0xff]
      %v5132 = vld [vmem:[%s619 + $0xc2] sm:$0xff]
      %v5133 = vld [vmem:[%s619 + $0xca] sm:$0xff]
      %v5134 = vld [vmem:[%s619 + $0xda] sm:$0xff]
      %v5135 = vld [vmem:[%s619 + $0xe2] sm:$0xff]
      %v5136 = vld [vmem:[%s619 + $0xf2] sm:$0xff]
      %v5137 = vld [vmem:[%s619 + $0xfa] sm:$0xff]
      %v5138 = vld [vmem:[%s619 + $0x10a] sm:$0xff]
      %v5139 = vld [vmem:[%s619 + $0x112] sm:$0xff]
      %v5140 = vld [vmem:[%s619 + $0x122] sm:$0xff]
      %v5141 = vld [vmem:[%s619 + $0x12a] sm:$0xff]
      %v5142 = vld [vmem:[%s619 + $0x13a] sm:$0xff]
      %v5143 = vld [vmem:[%s619 + $0x142] sm:$0xff]
      %v5144 = vld [vmem:[%s619 + $0x152] sm:$0xff]
      %v5145 = vld [vmem:[%s619 + $0x15a] sm:$0xff]
      %v5146 = vld [vmem:[%s619 + $0x16a] sm:$0xff]
      %v5147 = vld [vmem:[%s619 + $0x172] sm:$0xff]
      %5180 = vrot.lane.b32.xlu0 %v4892, 8
      %v5181 = vpop.permute.xlu0 %5180
      %5182 = vrot.lane.b32.xlu0 %v4893, 8
      %v5183 = vpop.permute.xlu0 %5182
      %5184 = vrot.lane.b32.xlu0 %v4894, 8
      %v5185 = vpop.permute.xlu0 %5184
      %5186 = vrot.lane.b32.xlu0 %v4895, 8
      %v5187 = vpop.permute.xlu0 %5186
      %5188 = vrot.lane.b32.xlu0 %v4896, 8
      %v5189 = vpop.permute.xlu0 %5188
      %5190 = vrot.lane.b32.xlu0 %v4897, 8
      %v5191 = vpop.permute.xlu0 %5190
      %5192 = vrot.lane.b32.xlu0 %v4898, 8
      %v5193 = vpop.permute.xlu0 %5192
      %5194 = vrot.lane.b32.xlu0 %v4899, 8
      %v5195 = vpop.permute.xlu0 %5194
      %5196 = vrot.lane.b32.xlu0 %v4900, 8
      %v5197 = vpop.permute.xlu0 %5196
      %5198 = vrot.lane.b32.xlu0 %v4901, 8
      %v5199 = vpop.permute.xlu0 %5198
      %5200 = vrot.lane.b32.xlu0 %v4902, 8
      %v5201 = vpop.permute.xlu0 %5200
      %5202 = vrot.lane.b32.xlu0 %v4903, 8
      %v5203 = vpop.permute.xlu0 %5202
      %5204 = vrot.lane.b32.xlu0 %v4904, 8
      %v5205 = vpop.permute.xlu0 %5204
      %5206 = vrot.lane.b32.xlu0 %v4905, 8
      %v5207 = vpop.permute.xlu0 %5206
      %5208 = vrot.lane.b32.xlu0 %v4906, 8
      %v5209 = vpop.permute.xlu0 %5208
      %5210 = vrot.lane.b32.xlu0 %v4907, 8
      %v5211 = vpop.permute.xlu0 %5210
      %5212 = vrot.lane.b32.xlu0 %v4908, 8
      %v5213 = vpop.permute.xlu0 %5212
      %5214 = vrot.lane.b32.xlu0 %v4909, 8
      %v5215 = vpop.permute.xlu0 %5214
      %5216 = vrot.lane.b32.xlu0 %v4910, 8
      %v5217 = vpop.permute.xlu0 %5216
      %5218 = vrot.lane.b32.xlu0 %v4911, 8
      %v5219 = vpop.permute.xlu0 %5218
      %5220 = vrot.lane.b32.xlu0 %v4912, 8
      %v5221 = vpop.permute.xlu0 %5220
      %5222 = vrot.lane.b32.xlu0 %v4913, 8
      %v5223 = vpop.permute.xlu0 %5222
      %5224 = vrot.lane.b32.xlu0 %v4914, 8
      %v5225 = vpop.permute.xlu0 %5224
      %5226 = vrot.lane.b32.xlu0 %v4915, 8
      %v5227 = vpop.permute.xlu0 %5226
      %5228 = vrot.lane.b32.xlu0 %v4916, 8
      %v5229 = vpop.permute.xlu0 %5228
      %5230 = vrot.lane.b32.xlu0 %v4917, 8
      %v5231 = vpop.permute.xlu0 %5230
      %5232 = vrot.lane.b32.xlu0 %v4918, 8
      %v5233 = vpop.permute.xlu0 %5232
      %5234 = vrot.lane.b32.xlu0 %v4919, 8
      %v5235 = vpop.permute.xlu0 %5234
      %5236 = vrot.lane.b32.xlu0 %v4920, 8
      %v5237 = vpop.permute.xlu0 %5236
      %5238 = vrot.lane.b32.xlu0 %v4921, 8
      %v5239 = vpop.permute.xlu0 %5238
      %5240 = vrot.lane.b32.xlu0 %v4922, 8
      %v5241 = vpop.permute.xlu0 %5240
      %5242 = vrot.lane.b32.xlu0 %v4923, 8
      %v5243 = vpop.permute.xlu0 %5242
      %5308 = vrot.lane.b32.xlu0 %v4924, 16
      %v5309 = vpop.permute.xlu0 %5308
      %5310 = vrot.lane.b32.xlu0 %v4925, 16
      %v5311 = vpop.permute.xlu0 %5310
      %5312 = vrot.lane.b32.xlu0 %v4926, 16
      %v5313 = vpop.permute.xlu0 %5312
      %5314 = vrot.lane.b32.xlu0 %v4927, 16
      %v5315 = vpop.permute.xlu0 %5314
      %5316 = vrot.lane.b32.xlu0 %v4928, 16
      %v5317 = vpop.permute.xlu0 %5316
      %5318 = vrot.lane.b32.xlu0 %v4929, 16
      %v5319 = vpop.permute.xlu0 %5318
      %5320 = vrot.lane.b32.xlu0 %v4930, 16
      %v5321 = vpop.permute.xlu0 %5320
      %5322 = vrot.lane.b32.xlu0 %v4931, 16
      %v5323 = vpop.permute.xlu0 %5322
      %5324 = vrot.lane.b32.xlu0 %v4932, 16
      %v5325 = vpop.permute.xlu0 %5324
      %5326 = vrot.lane.b32.xlu0 %v4933, 16
      %v5327 = vpop.permute.xlu0 %5326
      %5328 = vrot.lane.b32.xlu0 %v4934, 16
      %v5329 = vpop.permute.xlu0 %5328
      %5330 = vrot.lane.b32.xlu0 %v4935, 16
      %v5331 = vpop.permute.xlu0 %5330
      %5332 = vrot.lane.b32.xlu0 %v4936, 16
      %v5333 = vpop.permute.xlu0 %5332
      %5334 = vrot.lane.b32.xlu0 %v4937, 16
      %v5335 = vpop.permute.xlu0 %5334
      %5336 = vrot.lane.b32.xlu0 %v4938, 16
      %v5337 = vpop.permute.xlu0 %5336
      %5338 = vrot.lane.b32.xlu0 %v4939, 16
      %v5339 = vpop.permute.xlu0 %5338
      %5340 = vrot.lane.b32.xlu0 %v4940, 16
      %v5341 = vpop.permute.xlu0 %5340
      %5342 = vrot.lane.b32.xlu0 %v4941, 16
      %v5343 = vpop.permute.xlu0 %5342
      %5344 = vrot.lane.b32.xlu0 %v4942, 16
      %v5345 = vpop.permute.xlu0 %5344
      %5346 = vrot.lane.b32.xlu0 %v4943, 16
      %v5347 = vpop.permute.xlu0 %5346
      %5348 = vrot.lane.b32.xlu0 %v4944, 16
      %v5349 = vpop.permute.xlu0 %5348
      %5350 = vrot.lane.b32.xlu0 %v4945, 16
      %v5351 = vpop.permute.xlu0 %5350
      %5352 = vrot.lane.b32.xlu0 %v4946, 16
      %v5353 = vpop.permute.xlu0 %5352
      %5354 = vrot.lane.b32.xlu0 %v4947, 16
      %v5355 = vpop.permute.xlu0 %5354
      %5356 = vrot.lane.b32.xlu0 %v4948, 16
      %v5357 = vpop.permute.xlu0 %5356
      %5358 = vrot.lane.b32.xlu0 %v4949, 16
      %v5359 = vpop.permute.xlu0 %5358
      %5360 = vrot.lane.b32.xlu0 %v4950, 16
      %v5361 = vpop.permute.xlu0 %5360
      %5362 = vrot.lane.b32.xlu0 %v4951, 16
      %v5363 = vpop.permute.xlu0 %5362
      %5364 = vrot.lane.b32.xlu0 %v4952, 16
      %v5365 = vpop.permute.xlu0 %5364
      %5366 = vrot.lane.b32.xlu0 %v4953, 16
      %v5367 = vpop.permute.xlu0 %5366
      %5368 = vrot.lane.b32.xlu0 %v4954, 16
      %v5369 = vpop.permute.xlu0 %5368
      %5370 = vrot.lane.b32.xlu0 %v4955, 16
      %v5371 = vpop.permute.xlu0 %5370
      %5436 = vrot.lane.b32.xlu0 %v4956, 24
      %v5437 = vpop.permute.xlu0 %5436
      %5438 = vrot.lane.b32.xlu0 %v4957, 24
      %v5439 = vpop.permute.xlu0 %5438
      %5440 = vrot.lane.b32.xlu0 %v4958, 24
      %v5441 = vpop.permute.xlu0 %5440
      %5442 = vrot.lane.b32.xlu0 %v4959, 24
      %v5443 = vpop.permute.xlu0 %5442
      %5444 = vrot.lane.b32.xlu0 %v4960, 24
      %v5445 = vpop.permute.xlu0 %5444
      %5446 = vrot.lane.b32.xlu0 %v4961, 24
      %v5447 = vpop.permute.xlu0 %5446
      %5448 = vrot.lane.b32.xlu0 %v4962, 24
      %v5449 = vpop.permute.xlu0 %5448
      %5450 = vrot.lane.b32.xlu0 %v4963, 24
      %v5451 = vpop.permute.xlu0 %5450
      %5452 = vrot.lane.b32.xlu0 %v4964, 24
      %v5453 = vpop.permute.xlu0 %5452
      %5454 = vrot.lane.b32.xlu0 %v4965, 24
      %v5455 = vpop.permute.xlu0 %5454
      %5456 = vrot.lane.b32.xlu0 %v4966, 24
      %v5457 = vpop.permute.xlu0 %5456
      %5458 = vrot.lane.b32.xlu0 %v4967, 24
      %v5459 = vpop.permute.xlu0 %5458
      %5460 = vrot.lane.b32.xlu0 %v4968, 24
      %v5461 = vpop.permute.xlu0 %5460
      %5462 = vrot.lane.b32.xlu0 %v4969, 24
      %v5463 = vpop.permute.xlu0 %5462
      %5464 = vrot.lane.b32.xlu0 %v4970, 24
      %v5465 = vpop.permute.xlu0 %5464
      %5466 = vrot.lane.b32.xlu0 %v4971, 24
      %v5467 = vpop.permute.xlu0 %5466
      %5468 = vrot.lane.b32.xlu0 %v4972, 24
      %v5469 = vpop.permute.xlu0 %5468
      %5470 = vrot.lane.b32.xlu0 %v4973, 24
      %v5471 = vpop.permute.xlu0 %5470
      %5472 = vrot.lane.b32.xlu0 %v4974, 24
      %v5473 = vpop.permute.xlu0 %5472
      %5474 = vrot.lane.b32.xlu0 %v4975, 24
      %v5475 = vpop.permute.xlu0 %5474
      %5476 = vrot.lane.b32.xlu0 %v4976, 24
      %v5477 = vpop.permute.xlu0 %5476
      %5478 = vrot.lane.b32.xlu0 %v4977, 24
      %v5479 = vpop.permute.xlu0 %5478
      %5480 = vrot.lane.b32.xlu0 %v4978, 24
      %v5481 = vpop.permute.xlu0 %5480
      %5482 = vrot.lane.b32.xlu0 %v4979, 24
      %v5483 = vpop.permute.xlu0 %5482
      %5484 = vrot.lane.b32.xlu0 %v4980, 24
      %v5485 = vpop.permute.xlu0 %5484
      %5486 = vrot.lane.b32.xlu0 %v4981, 24
      %v5487 = vpop.permute.xlu0 %5486
      %5488 = vrot.lane.b32.xlu0 %v4982, 24
      %v5489 = vpop.permute.xlu0 %5488
      %5490 = vrot.lane.b32.xlu0 %v4983, 24
      %v5491 = vpop.permute.xlu0 %5490
      %5492 = vrot.lane.b32.xlu0 %v4984, 24
      %v5493 = vpop.permute.xlu0 %5492
      %5494 = vrot.lane.b32.xlu0 %v4985, 24
      %v5495 = vpop.permute.xlu0 %5494
      %5496 = vrot.lane.b32.xlu0 %v4986, 24
      %v5497 = vpop.permute.xlu0 %5496
      %5498 = vrot.lane.b32.xlu0 %v4987, 24
      %v5499 = vpop.permute.xlu0 %5498
      %5564 = vrot.lane.b32.xlu0 %v4988, 32
      %v5565 = vpop.permute.xlu0 %5564
      %5566 = vrot.lane.b32.xlu0 %v4989, 32
      %v5567 = vpop.permute.xlu0 %5566
      %5568 = vrot.lane.b32.xlu0 %v4990, 32
      %v5569 = vpop.permute.xlu0 %5568
      %5570 = vrot.lane.b32.xlu0 %v4991, 32
      %v5571 = vpop.permute.xlu0 %5570
      %5572 = vrot.lane.b32.xlu0 %v4992, 32
      %v5573 = vpop.permute.xlu0 %5572
      %5574 = vrot.lane.b32.xlu0 %v4993, 32
      %v5575 = vpop.permute.xlu0 %5574
      %5576 = vrot.lane.b32.xlu0 %v4994, 32
      %v5577 = vpop.permute.xlu0 %5576
      %5578 = vrot.lane.b32.xlu0 %v4995, 32
      %v5579 = vpop.permute.xlu0 %5578
      %5580 = vrot.lane.b32.xlu0 %v4996, 32
      %v5581 = vpop.permute.xlu0 %5580
      %5582 = vrot.lane.b32.xlu0 %v4997, 32
      %v5583 = vpop.permute.xlu0 %5582
      %5584 = vrot.lane.b32.xlu0 %v4998, 32
      %v5585 = vpop.permute.xlu0 %5584
      %5586 = vrot.lane.b32.xlu0 %v4999, 32
      %v5587 = vpop.permute.xlu0 %5586
      %5588 = vrot.lane.b32.xlu0 %v5000, 32
      %v5589 = vpop.permute.xlu0 %5588
      %5590 = vrot.lane.b32.xlu0 %v5001, 32
      %v5591 = vpop.permute.xlu0 %5590
      %5592 = vrot.lane.b32.xlu0 %v5002, 32
      %v5593 = vpop.permute.xlu0 %5592
      %5594 = vrot.lane.b32.xlu0 %v5003, 32
      %v5595 = vpop.permute.xlu0 %5594
      %5596 = vrot.lane.b32.xlu0 %v5004, 32
      %v5597 = vpop.permute.xlu0 %5596
      %5598 = vrot.lane.b32.xlu0 %v5005, 32
      %v5599 = vpop.permute.xlu0 %5598
      %5600 = vrot.lane.b32.xlu0 %v5006, 32
      %v5601 = vpop.permute.xlu0 %5600
      %5602 = vrot.lane.b32.xlu0 %v5007, 32
      %v5603 = vpop.permute.xlu0 %5602
      %5604 = vrot.lane.b32.xlu0 %v5008, 32
      %v5605 = vpop.permute.xlu0 %5604
      %5606 = vrot.lane.b32.xlu0 %v5009, 32
      %v5607 = vpop.permute.xlu0 %5606
      %5608 = vrot.lane.b32.xlu0 %v5010, 32
      %v5609 = vpop.permute.xlu0 %5608
      %5610 = vrot.lane.b32.xlu0 %v5011, 32
      %v5611 = vpop.permute.xlu0 %5610
      %5612 = vrot.lane.b32.xlu0 %v5012, 32
      %v5613 = vpop.permute.xlu0 %5612
      %5614 = vrot.lane.b32.xlu0 %v5013, 32
      %v5615 = vpop.permute.xlu0 %5614
      %5616 = vrot.lane.b32.xlu0 %v5014, 32
      %v5617 = vpop.permute.xlu0 %5616
      %5618 = vrot.lane.b32.xlu0 %v5015, 32
      %v5619 = vpop.permute.xlu0 %5618
      %5620 = vrot.lane.b32.xlu0 %v5016, 32
      %v5621 = vpop.permute.xlu0 %5620
      %5622 = vrot.lane.b32.xlu0 %v5017, 32
      %v5623 = vpop.permute.xlu0 %5622
      %5624 = vrot.lane.b32.xlu0 %v5018, 32
      %v5625 = vpop.permute.xlu0 %5624
      %5626 = vrot.lane.b32.xlu0 %v5019, 32
      %v5627 = vpop.permute.xlu0 %5626
      %5692 = vrot.lane.b32.xlu0 %v5020, 40
      %v5693 = vpop.permute.xlu0 %5692
      %5694 = vrot.lane.b32.xlu0 %v5021, 40
      %v5695 = vpop.permute.xlu0 %5694
      %5696 = vrot.lane.b32.xlu0 %v5022, 40
      %v5697 = vpop.permute.xlu0 %5696
      %5698 = vrot.lane.b32.xlu0 %v5023, 40
      %v5699 = vpop.permute.xlu0 %5698
      %5700 = vrot.lane.b32.xlu0 %v5024, 40
      %v5701 = vpop.permute.xlu0 %5700
      %5702 = vrot.lane.b32.xlu0 %v5025, 40
      %v5703 = vpop.permute.xlu0 %5702
      %5704 = vrot.lane.b32.xlu0 %v5026, 40
      %v5705 = vpop.permute.xlu0 %5704
      %5706 = vrot.lane.b32.xlu0 %v5027, 40
      %v5707 = vpop.permute.xlu0 %5706
      %5708 = vrot.lane.b32.xlu0 %v5028, 40
      %v5709 = vpop.permute.xlu0 %5708
      %5710 = vrot.lane.b32.xlu0 %v5029, 40
      %v5711 = vpop.permute.xlu0 %5710
      %5712 = vrot.lane.b32.xlu0 %v5030, 40
      %v5713 = vpop.permute.xlu0 %5712
      %5714 = vrot.lane.b32.xlu0 %v5031, 40
      %v5715 = vpop.permute.xlu0 %5714
      %5716 = vrot.lane.b32.xlu0 %v5032, 40
      %v5717 = vpop.permute.xlu0 %5716
      %5718 = vrot.lane.b32.xlu0 %v5033, 40
      %v5719 = vpop.permute.xlu0 %5718
      %5720 = vrot.lane.b32.xlu0 %v5034, 40
      %v5721 = vpop.permute.xlu0 %5720
      %5722 = vrot.lane.b32.xlu0 %v5035, 40
      %v5723 = vpop.permute.xlu0 %5722
      %5724 = vrot.lane.b32.xlu0 %v5036, 40
      %v5725 = vpop.permute.xlu0 %5724
      %5726 = vrot.lane.b32.xlu0 %v5037, 40
      %v5727 = vpop.permute.xlu0 %5726
      %5728 = vrot.lane.b32.xlu0 %v5038, 40
      %v5729 = vpop.permute.xlu0 %5728
      %5730 = vrot.lane.b32.xlu0 %v5039, 40
      %v5731 = vpop.permute.xlu0 %5730
      %5732 = vrot.lane.b32.xlu0 %v5040, 40
      %v5733 = vpop.permute.xlu0 %5732
      %5734 = vrot.lane.b32.xlu0 %v5041, 40
      %v5735 = vpop.permute.xlu0 %5734
      %5736 = vrot.lane.b32.xlu0 %v5042, 40
      %v5737 = vpop.permute.xlu0 %5736
      %5738 = vrot.lane.b32.xlu0 %v5043, 40
      %v5739 = vpop.permute.xlu0 %5738
      %5740 = vrot.lane.b32.xlu0 %v5044, 40
      %v5741 = vpop.permute.xlu0 %5740
      %5742 = vrot.lane.b32.xlu0 %v5045, 40
      %v5743 = vpop.permute.xlu0 %5742
      %5744 = vrot.lane.b32.xlu0 %v5046, 40
      %v5745 = vpop.permute.xlu0 %5744
      %5746 = vrot.lane.b32.xlu0 %v5047, 40
      %v5747 = vpop.permute.xlu0 %5746
      %5748 = vrot.lane.b32.xlu0 %v5048, 40
      %v5749 = vpop.permute.xlu0 %5748
      %5750 = vrot.lane.b32.xlu0 %v5049, 40
      %v5751 = vpop.permute.xlu0 %5750
      %5752 = vrot.lane.b32.xlu0 %v5050, 40
      %v5753 = vpop.permute.xlu0 %5752
      %5754 = vrot.lane.b32.xlu0 %v5051, 40
      %v5755 = vpop.permute.xlu0 %5754
      %5820 = vrot.lane.b32.xlu0 %v5052, 48
      %v5821 = vpop.permute.xlu0 %5820
      %5822 = vrot.lane.b32.xlu0 %v5053, 48
      %v5823 = vpop.permute.xlu0 %5822
      %5824 = vrot.lane.b32.xlu0 %v5054, 48
      %v5825 = vpop.permute.xlu0 %5824
      %5826 = vrot.lane.b32.xlu0 %v5055, 48
      %v5827 = vpop.permute.xlu0 %5826
      %5828 = vrot.lane.b32.xlu0 %v5056, 48
      %v5829 = vpop.permute.xlu0 %5828
      %5830 = vrot.lane.b32.xlu0 %v5057, 48
      %v5831 = vpop.permute.xlu0 %5830
      %5832 = vrot.lane.b32.xlu0 %v5058, 48
      %v5833 = vpop.permute.xlu0 %5832
      %5834 = vrot.lane.b32.xlu0 %v5059, 48
      %v5835 = vpop.permute.xlu0 %5834
      %5836 = vrot.lane.b32.xlu0 %v5060, 48
      %v5837 = vpop.permute.xlu0 %5836
      %5838 = vrot.lane.b32.xlu0 %v5061, 48
      %v5839 = vpop.permute.xlu0 %5838
      %5840 = vrot.lane.b32.xlu0 %v5062, 48
      %v5841 = vpop.permute.xlu0 %5840
      %5842 = vrot.lane.b32.xlu0 %v5063, 48
      %v5843 = vpop.permute.xlu0 %5842
      %5844 = vrot.lane.b32.xlu0 %v5064, 48
      %v5845 = vpop.permute.xlu0 %5844
      %5846 = vrot.lane.b32.xlu0 %v5065, 48
      %v5847 = vpop.permute.xlu0 %5846
      %5848 = vrot.lane.b32.xlu0 %v5066, 48
      %v5849 = vpop.permute.xlu0 %5848
      %5850 = vrot.lane.b32.xlu0 %v5067, 48
      %v5851 = vpop.permute.xlu0 %5850
      %5852 = vrot.lane.b32.xlu0 %v5068, 48
      %v5853 = vpop.permute.xlu0 %5852
      %5854 = vrot.lane.b32.xlu0 %v5069, 48
      %v5855 = vpop.permute.xlu0 %5854
      %5856 = vrot.lane.b32.xlu0 %v5070, 48
      %v5857 = vpop.permute.xlu0 %5856
      %5858 = vrot.lane.b32.xlu0 %v5071, 48
      %v5859 = vpop.permute.xlu0 %5858
      %5860 = vrot.lane.b32.xlu0 %v5072, 48
      %v5861 = vpop.permute.xlu0 %5860
      %5862 = vrot.lane.b32.xlu0 %v5073, 48
      %v5863 = vpop.permute.xlu0 %5862
      %5864 = vrot.lane.b32.xlu0 %v5074, 48
      %v5865 = vpop.permute.xlu0 %5864
      %5866 = vrot.lane.b32.xlu0 %v5075, 48
      %v5867 = vpop.permute.xlu0 %5866
      %5868 = vrot.lane.b32.xlu0 %v5076, 48
      %v5869 = vpop.permute.xlu0 %5868
      %5870 = vrot.lane.b32.xlu0 %v5077, 48
      %v5871 = vpop.permute.xlu0 %5870
      %5872 = vrot.lane.b32.xlu0 %v5078, 48
      %v5873 = vpop.permute.xlu0 %5872
      %5874 = vrot.lane.b32.xlu0 %v5079, 48
      %v5875 = vpop.permute.xlu0 %5874
      %5876 = vrot.lane.b32.xlu0 %v5080, 48
      %v5877 = vpop.permute.xlu0 %5876
      %5878 = vrot.lane.b32.xlu0 %v5081, 48
      %v5879 = vpop.permute.xlu0 %5878
      %5880 = vrot.lane.b32.xlu0 %v5082, 48
      %v5881 = vpop.permute.xlu0 %5880
      %5882 = vrot.lane.b32.xlu0 %v5083, 48
      %v5883 = vpop.permute.xlu0 %5882
      %5948 = vrot.lane.b32.xlu0 %v5084, 56
      %v5949 = vpop.permute.xlu0 %5948
      %5950 = vrot.lane.b32.xlu0 %v5085, 56
      %v5951 = vpop.permute.xlu0 %5950
      %5952 = vrot.lane.b32.xlu0 %v5086, 56
      %v5953 = vpop.permute.xlu0 %5952
      %5954 = vrot.lane.b32.xlu0 %v5087, 56
      %v5955 = vpop.permute.xlu0 %5954
      %5956 = vrot.lane.b32.xlu0 %v5088, 56
      %v5957 = vpop.permute.xlu0 %5956
      %5958 = vrot.lane.b32.xlu0 %v5089, 56
      %v5959 = vpop.permute.xlu0 %5958
      %5960 = vrot.lane.b32.xlu0 %v5090, 56
      %v5961 = vpop.permute.xlu0 %5960
      %5962 = vrot.lane.b32.xlu0 %v5091, 56
      %v5963 = vpop.permute.xlu0 %5962
      %5964 = vrot.lane.b32.xlu0 %v5092, 56
      %v5965 = vpop.permute.xlu0 %5964
      %5966 = vrot.lane.b32.xlu0 %v5093, 56
      %v5967 = vpop.permute.xlu0 %5966
      %5968 = vrot.lane.b32.xlu0 %v5094, 56
      %v5969 = vpop.permute.xlu0 %5968
      %5970 = vrot.lane.b32.xlu0 %v5095, 56
      %v5971 = vpop.permute.xlu0 %5970
      %5972 = vrot.lane.b32.xlu0 %v5096, 56
      %v5973 = vpop.permute.xlu0 %5972
      %5974 = vrot.lane.b32.xlu0 %v5097, 56
      %v5975 = vpop.permute.xlu0 %5974
      %5976 = vrot.lane.b32.xlu0 %v5098, 56
      %v5977 = vpop.permute.xlu0 %5976
      %5978 = vrot.lane.b32.xlu0 %v5099, 56
      %v5979 = vpop.permute.xlu0 %5978
      %5980 = vrot.lane.b32.xlu0 %v5100, 56
      %v5981 = vpop.permute.xlu0 %5980
      %5982 = vrot.lane.b32.xlu0 %v5101, 56
      %v5983 = vpop.permute.xlu0 %5982
      %5984 = vrot.lane.b32.xlu0 %v5102, 56
      %v5985 = vpop.permute.xlu0 %5984
      %5986 = vrot.lane.b32.xlu0 %v5103, 56
      %v5987 = vpop.permute.xlu0 %5986
      %5988 = vrot.lane.b32.xlu0 %v5104, 56
      %v5989 = vpop.permute.xlu0 %5988
      %5990 = vrot.lane.b32.xlu0 %v5105, 56
      %v5991 = vpop.permute.xlu0 %5990
      %5992 = vrot.lane.b32.xlu0 %v5106, 56
      %v5993 = vpop.permute.xlu0 %5992
      %5994 = vrot.lane.b32.xlu0 %v5107, 56
      %v5995 = vpop.permute.xlu0 %5994
      %5996 = vrot.lane.b32.xlu0 %v5108, 56
      %v5997 = vpop.permute.xlu0 %5996
      %5998 = vrot.lane.b32.xlu0 %v5109, 56
      %v5999 = vpop.permute.xlu0 %5998
      %6000 = vrot.lane.b32.xlu0 %v5110, 56
      %v6001 = vpop.permute.xlu0 %6000
      %6002 = vrot.lane.b32.xlu0 %v5111, 56
      %v6003 = vpop.permute.xlu0 %6002
      %6004 = vrot.lane.b32.xlu0 %v5112, 56
      %v6005 = vpop.permute.xlu0 %6004
      %6006 = vrot.lane.b32.xlu0 %v5113, 56
      %v6007 = vpop.permute.xlu0 %6006
      %6008 = vrot.lane.b32.xlu0 %v5114, 56
      %v6009 = vpop.permute.xlu0 %6008
      %6010 = vrot.lane.b32.xlu0 %v5115, 56
      %v6011 = vpop.permute.xlu0 %6010
      %6076 = vrot.lane.b32.xlu0 %v5116, 64
      %v6077 = vpop.permute.xlu0 %6076
      %6078 = vrot.lane.b32.xlu0 %v5117, 64
      %v6079 = vpop.permute.xlu0 %6078
      %6080 = vrot.lane.b32.xlu0 %v5118, 64
      %v6081 = vpop.permute.xlu0 %6080
      %6082 = vrot.lane.b32.xlu0 %v5119, 64
      %v6083 = vpop.permute.xlu0 %6082
      %6084 = vrot.lane.b32.xlu0 %v5120, 64
      %v6085 = vpop.permute.xlu0 %6084
      %6086 = vrot.lane.b32.xlu0 %v5121, 64
      %v6087 = vpop.permute.xlu0 %6086
      %6088 = vrot.lane.b32.xlu0 %v5122, 64
      %v6089 = vpop.permute.xlu0 %6088
      %6090 = vrot.lane.b32.xlu0 %v5123, 64
      %v6091 = vpop.permute.xlu0 %6090
      %6092 = vrot.lane.b32.xlu0 %v5124, 64
      %v6093 = vpop.permute.xlu0 %6092
      %6094 = vrot.lane.b32.xlu0 %v5125, 64
      %v6095 = vpop.permute.xlu0 %6094
      %6096 = vrot.lane.b32.xlu0 %v5126, 64
      %v6097 = vpop.permute.xlu0 %6096
      %6098 = vrot.lane.b32.xlu0 %v5127, 64
      %v6099 = vpop.permute.xlu0 %6098
      %6100 = vrot.lane.b32.xlu0 %v5128, 64
      %v6101 = vpop.permute.xlu0 %6100
      %6102 = vrot.lane.b32.xlu0 %v5129, 64
      %v6103 = vpop.permute.xlu0 %6102
      %6104 = vrot.lane.b32.xlu0 %v5130, 64
      %v6105 = vpop.permute.xlu0 %6104
      %6106 = vrot.lane.b32.xlu0 %v5131, 64
      %v6107 = vpop.permute.xlu0 %6106
      %6108 = vrot.lane.b32.xlu0 %v5132, 64
      %v6109 = vpop.permute.xlu0 %6108
      %6110 = vrot.lane.b32.xlu0 %v5133, 64
      %v6111 = vpop.permute.xlu0 %6110
      %6112 = vrot.lane.b32.xlu0 %v5134, 64
      %v6113 = vpop.permute.xlu0 %6112
      %6114 = vrot.lane.b32.xlu0 %v5135, 64
      %v6115 = vpop.permute.xlu0 %6114
      %6116 = vrot.lane.b32.xlu0 %v5136, 64
      %v6117 = vpop.permute.xlu0 %6116
      %6118 = vrot.lane.b32.xlu0 %v5137, 64
      %v6119 = vpop.permute.xlu0 %6118
      %6120 = vrot.lane.b32.xlu0 %v5138, 64
      %v6121 = vpop.permute.xlu0 %6120
      %6122 = vrot.lane.b32.xlu0 %v5139, 64
      %v6123 = vpop.permute.xlu0 %6122
      %6124 = vrot.lane.b32.xlu0 %v5140, 64
      %v6125 = vpop.permute.xlu0 %6124
      %6126 = vrot.lane.b32.xlu0 %v5141, 64
      %v6127 = vpop.permute.xlu0 %6126
      %6128 = vrot.lane.b32.xlu0 %v5142, 64
      %v6129 = vpop.permute.xlu0 %6128
      %6130 = vrot.lane.b32.xlu0 %v5143, 64
      %v6131 = vpop.permute.xlu0 %6130
      %6132 = vrot.lane.b32.xlu0 %v5144, 64
      %v6133 = vpop.permute.xlu0 %6132
      %6134 = vrot.lane.b32.xlu0 %v5145, 64
      %v6135 = vpop.permute.xlu0 %6134
      %6136 = vrot.lane.b32.xlu0 %v5146, 64
      %v6137 = vpop.permute.xlu0 %6136
      %6138 = vrot.lane.b32.xlu0 %v5147, 64
      %v6139 = vpop.permute.xlu0 %6138
      %v6172 = vsel %vm306, %v4860, %v5181
      %v6173 = vsel %vm306, %v4861, %v5183
      %v6174 = vsel %vm306, %v4862, %v5185
      %v6175 = vsel %vm306, %v4863, %v5187
      %v6176 = vsel %vm306, %v4864, %v5189
      %v6177 = vsel %vm306, %v4865, %v5191
      %v6178 = vsel %vm306, %v4866, %v5193
      %v6179 = vsel %vm306, %v4867, %v5195
      %v6180 = vsel %vm306, %v4868, %v5197
      %v6181 = vsel %vm306, %v4869, %v5199
      %v6182 = vsel %vm306, %v4870, %v5201
      %v6183 = vsel %vm306, %v4871, %v5203
      %v6184 = vsel %vm306, %v4872, %v5205
      %v6185 = vsel %vm306, %v4873, %v5207
      %v6186 = vsel %vm306, %v4874, %v5209
      %v6187 = vsel %vm306, %v4875, %v5211
      %v6188 = vsel %vm306, %v4876, %v5213
      %v6189 = vsel %vm306, %v4877, %v5215
      %v6190 = vsel %vm306, %v4878, %v5217
      %v6191 = vsel %vm306, %v4879, %v5219
      %v6192 = vsel %vm306, %v4880, %v5221
      %v6193 = vsel %vm306, %v4881, %v5223
      %v6194 = vsel %vm306, %v4882, %v5225
      %v6195 = vsel %vm306, %v4883, %v5227
      %v6196 = vsel %vm306, %v4884, %v5229
      %v6197 = vsel %vm306, %v4885, %v5231
      %v6198 = vsel %vm306, %v4886, %v5233
      %v6199 = vsel %vm306, %v4887, %v5235
      %v6200 = vsel %vm306, %v4888, %v5237
      %v6201 = vsel %vm306, %v4889, %v5239
      %v6202 = vsel %vm306, %v4890, %v5241
      %v6203 = vsel %vm306, %v4891, %v5243
      %v6204 = vsel %vm1772, %v6172, %v5309
      %v6205 = vsel %vm1772, %v6173, %v5311
      %v6206 = vsel %vm1772, %v6174, %v5313
      %v6207 = vsel %vm1772, %v6175, %v5315
      %v6208 = vsel %vm1772, %v6176, %v5317
      %v6209 = vsel %vm1772, %v6177, %v5319
      %v6210 = vsel %vm1772, %v6178, %v5321
      %v6211 = vsel %vm1772, %v6179, %v5323
      %v6212 = vsel %vm1772, %v6180, %v5325
      %v6213 = vsel %vm1772, %v6181, %v5327
      %v6214 = vsel %vm1772, %v6182, %v5329
      %v6215 = vsel %vm1772, %v6183, %v5331
      %v6216 = vsel %vm1772, %v6184, %v5333
      %v6217 = vsel %vm1772, %v6185, %v5335
      %v6218 = vsel %vm1772, %v6186, %v5337
      %v6219 = vsel %vm1772, %v6187, %v5339
      %v6220 = vsel %vm1772, %v6188, %v5341
      %v6221 = vsel %vm1772, %v6189, %v5343
      %v6222 = vsel %vm1772, %v6190, %v5345
      %v6223 = vsel %vm1772, %v6191, %v5347
      %v6224 = vsel %vm1772, %v6192, %v5349
      %v6225 = vsel %vm1772, %v6193, %v5351
      %v6226 = vsel %vm1772, %v6194, %v5353
      %v6227 = vsel %vm1772, %v6195, %v5355
      %v6228 = vsel %vm1772, %v6196, %v5357
      %v6229 = vsel %vm1772, %v6197, %v5359
      %v6230 = vsel %vm1772, %v6198, %v5361
      %v6231 = vsel %vm1772, %v6199, %v5363
      %v6232 = vsel %vm1772, %v6200, %v5365
      %v6233 = vsel %vm1772, %v6201, %v5367
      %v6234 = vsel %vm1772, %v6202, %v5369
      %v6235 = vsel %vm1772, %v6203, %v5371
      %v6236 = vsel %vm1805, %v6204, %v5437
      %v6237 = vsel %vm1805, %v6205, %v5439
      %v6238 = vsel %vm1805, %v6206, %v5441
      %v6239 = vsel %vm1805, %v6207, %v5443
      %v6240 = vsel %vm1805, %v6208, %v5445
      %v6241 = vsel %vm1805, %v6209, %v5447
      %v6242 = vsel %vm1805, %v6210, %v5449
      %v6243 = vsel %vm1805, %v6211, %v5451
      %v6244 = vsel %vm1805, %v6212, %v5453
      %v6245 = vsel %vm1805, %v6213, %v5455
      %v6246 = vsel %vm1805, %v6214, %v5457
      %v6247 = vsel %vm1805, %v6215, %v5459
      %v6248 = vsel %vm1805, %v6216, %v5461
      %v6249 = vsel %vm1805, %v6217, %v5463
      %v6250 = vsel %vm1805, %v6218, %v5465
      %v6251 = vsel %vm1805, %v6219, %v5467
      %v6252 = vsel %vm1805, %v6220, %v5469
      %v6253 = vsel %vm1805, %v6221, %v5471
      %v6254 = vsel %vm1805, %v6222, %v5473
      %v6255 = vsel %vm1805, %v6223, %v5475
      %v6256 = vsel %vm1805, %v6224, %v5477
      %v6257 = vsel %vm1805, %v6225, %v5479
      %v6258 = vsel %vm1805, %v6226, %v5481
      %v6259 = vsel %vm1805, %v6227, %v5483
      %v6260 = vsel %vm1805, %v6228, %v5485
      %v6261 = vsel %vm1805, %v6229, %v5487
      %v6262 = vsel %vm1805, %v6230, %v5489
      %v6263 = vsel %vm1805, %v6231, %v5491
      %v6264 = vsel %vm1805, %v6232, %v5493
      %v6265 = vsel %vm1805, %v6233, %v5495
      %v6266 = vsel %vm1805, %v6234, %v5497
      %v6267 = vsel %vm1805, %v6235, %v5499
      %v6268 = vsel %vm1838, %v6236, %v5565
      %v6269 = vsel %vm1838, %v6237, %v5567
      %v6270 = vsel %vm1838, %v6238, %v5569
      %v6271 = vsel %vm1838, %v6239, %v5571
      %v6272 = vsel %vm1838, %v6240, %v5573
      %v6273 = vsel %vm1838, %v6241, %v5575
      %v6274 = vsel %vm1838, %v6242, %v5577
      %v6275 = vsel %vm1838, %v6243, %v5579
      %v6276 = vsel %vm1838, %v6244, %v5581
      %v6277 = vsel %vm1838, %v6245, %v5583
      %v6278 = vsel %vm1838, %v6246, %v5585
      %v6279 = vsel %vm1838, %v6247, %v5587
      %v6280 = vsel %vm1838, %v6248, %v5589
      %v6281 = vsel %vm1838, %v6249, %v5591
      %v6282 = vsel %vm1838, %v6250, %v5593
      %v6283 = vsel %vm1838, %v6251, %v5595
      %v6284 = vsel %vm1838, %v6252, %v5597
      %v6285 = vsel %vm1838, %v6253, %v5599
      %v6286 = vsel %vm1838, %v6254, %v5601
      %v6287 = vsel %vm1838, %v6255, %v5603
      %v6288 = vsel %vm1838, %v6256, %v5605
      %v6289 = vsel %vm1838, %v6257, %v5607
      %v6290 = vsel %vm1838, %v6258, %v5609
      %v6291 = vsel %vm1838, %v6259, %v5611
      %v6292 = vsel %vm1838, %v6260, %v5613
      %v6293 = vsel %vm1838, %v6261, %v5615
      %v6294 = vsel %vm1838, %v6262, %v5617
      %v6295 = vsel %vm1838, %v6263, %v5619
      %v6296 = vsel %vm1838, %v6264, %v5621
      %v6297 = vsel %vm1838, %v6265, %v5623
      %v6298 = vsel %vm1838, %v6266, %v5625
      %v6299 = vsel %vm1838, %v6267, %v5627
      %v6300 = vsel %vm1871, %v6268, %v5693
      %v6301 = vsel %vm1871, %v6269, %v5695
      %v6302 = vsel %vm1871, %v6270, %v5697
      %v6303 = vsel %vm1871, %v6271, %v5699
      %v6304 = vsel %vm1871, %v6272, %v5701
      %v6305 = vsel %vm1871, %v6273, %v5703
      %v6306 = vsel %vm1871, %v6274, %v5705
      %v6307 = vsel %vm1871, %v6275, %v5707
      %v6308 = vsel %vm1871, %v6276, %v5709
      %v6309 = vsel %vm1871, %v6277, %v5711
      %v6310 = vsel %vm1871, %v6278, %v5713
      %v6311 = vsel %vm1871, %v6279, %v5715
      %v6312 = vsel %vm1871, %v6280, %v5717
      %v6313 = vsel %vm1871, %v6281, %v5719
      %v6314 = vsel %vm1871, %v6282, %v5721
      %v6315 = vsel %vm1871, %v6283, %v5723
      %v6316 = vsel %vm1871, %v6284, %v5725
      %v6317 = vsel %vm1871, %v6285, %v5727
      %v6318 = vsel %vm1871, %v6286, %v5729
      %v6319 = vsel %vm1871, %v6287, %v5731
      %v6320 = vsel %vm1871, %v6288, %v5733
      %v6321 = vsel %vm1871, %v6289, %v5735
      %v6322 = vsel %vm1871, %v6290, %v5737
      %v6323 = vsel %vm1871, %v6291, %v5739
      %v6324 = vsel %vm1871, %v6292, %v5741
      %v6325 = vsel %vm1871, %v6293, %v5743
      %v6326 = vsel %vm1871, %v6294, %v5745
      %v6327 = vsel %vm1871, %v6295, %v5747
      %v6328 = vsel %vm1871, %v6296, %v5749
      %v6329 = vsel %vm1871, %v6297, %v5751
      %v6330 = vsel %vm1871, %v6298, %v5753
      %v6331 = vsel %vm1871, %v6299, %v5755
      %v6332 = vsel %vm1904, %v6300, %v5821
      %v6333 = vsel %vm1904, %v6301, %v5823
      %v6334 = vsel %vm1904, %v6302, %v5825
      %v6335 = vsel %vm1904, %v6303, %v5827
      %v6336 = vsel %vm1904, %v6304, %v5829
      %v6337 = vsel %vm1904, %v6305, %v5831
      %v6338 = vsel %vm1904, %v6306, %v5833
      %v6339 = vsel %vm1904, %v6307, %v5835
      %v6340 = vsel %vm1904, %v6308, %v5837
      %v6341 = vsel %vm1904, %v6309, %v5839
      %v6342 = vsel %vm1904, %v6310, %v5841
      %v6343 = vsel %vm1904, %v6311, %v5843
      %v6344 = vsel %vm1904, %v6312, %v5845
      %v6345 = vsel %vm1904, %v6313, %v5847
      %v6346 = vsel %vm1904, %v6314, %v5849
      %v6347 = vsel %vm1904, %v6315, %v5851
      %v6348 = vsel %vm1904, %v6316, %v5853
      %v6349 = vsel %vm1904, %v6317, %v5855
      %v6350 = vsel %vm1904, %v6318, %v5857
      %v6351 = vsel %vm1904, %v6319, %v5859
      %v6352 = vsel %vm1904, %v6320, %v5861
      %v6353 = vsel %vm1904, %v6321, %v5863
      %v6354 = vsel %vm1904, %v6322, %v5865
      %v6355 = vsel %vm1904, %v6323, %v5867
      %v6356 = vsel %vm1904, %v6324, %v5869
      %v6357 = vsel %vm1904, %v6325, %v5871
      %v6358 = vsel %vm1904, %v6326, %v5873
      %v6359 = vsel %vm1904, %v6327, %v5875
      %v6360 = vsel %vm1904, %v6328, %v5877
      %v6361 = vsel %vm1904, %v6329, %v5879
      %v6362 = vsel %vm1904, %v6330, %v5881
      %v6363 = vsel %vm1904, %v6331, %v5883
      %v6364 = vsel %vm1937, %v6332, %v5949
      %v6365 = vsel %vm1937, %v6333, %v5951
      %v6366 = vsel %vm1937, %v6334, %v5953
      %v6367 = vsel %vm1937, %v6335, %v5955
      %v6368 = vsel %vm1937, %v6336, %v5957
      %v6369 = vsel %vm1937, %v6337, %v5959
      %v6370 = vsel %vm1937, %v6338, %v5961
      %v6371 = vsel %vm1937, %v6339, %v5963
      %v6372 = vsel %vm1937, %v6340, %v5965
      %v6373 = vsel %vm1937, %v6341, %v5967
      %v6374 = vsel %vm1937, %v6342, %v5969
      %v6375 = vsel %vm1937, %v6343, %v5971
      %v6376 = vsel %vm1937, %v6344, %v5973
      %v6377 = vsel %vm1937, %v6345, %v5975
      %v6378 = vsel %vm1937, %v6346, %v5977
      %v6379 = vsel %vm1937, %v6347, %v5979
      %v6380 = vsel %vm1937, %v6348, %v5981
      %v6381 = vsel %vm1937, %v6349, %v5983
      %v6382 = vsel %vm1937, %v6350, %v5985
      %v6383 = vsel %vm1937, %v6351, %v5987
      %v6384 = vsel %vm1937, %v6352, %v5989
      %v6385 = vsel %vm1937, %v6353, %v5991
      %v6386 = vsel %vm1937, %v6354, %v5993
      %v6387 = vsel %vm1937, %v6355, %v5995
      %v6388 = vsel %vm1937, %v6356, %v5997
      %v6389 = vsel %vm1937, %v6357, %v5999
      %v6390 = vsel %vm1937, %v6358, %v6001
      %v6391 = vsel %vm1937, %v6359, %v6003
      %v6392 = vsel %vm1937, %v6360, %v6005
      %v6393 = vsel %vm1937, %v6361, %v6007
      %v6394 = vsel %vm1937, %v6362, %v6009
      %v6395 = vsel %vm1937, %v6363, %v6011
      %v6396 = vsel %vm1970, %v6364, %v6077
      %v6397 = vsel %vm1970, %v6365, %v6079
      %v6398 = vsel %vm1970, %v6366, %v6081
      %v6399 = vsel %vm1970, %v6367, %v6083
      %v6400 = vsel %vm1970, %v6368, %v6085
      %v6401 = vsel %vm1970, %v6369, %v6087
      %v6402 = vsel %vm1970, %v6370, %v6089
      %v6403 = vsel %vm1970, %v6371, %v6091
      %v6404 = vsel %vm1970, %v6372, %v6093
      %v6405 = vsel %vm1970, %v6373, %v6095
      %v6406 = vsel %vm1970, %v6374, %v6097
      %v6407 = vsel %vm1970, %v6375, %v6099
      %v6408 = vsel %vm1970, %v6376, %v6101
      %v6409 = vsel %vm1970, %v6377, %v6103
      %v6410 = vsel %vm1970, %v6378, %v6105
      %v6411 = vsel %vm1970, %v6379, %v6107
      %v6412 = vsel %vm1970, %v6380, %v6109
      %v6413 = vsel %vm1970, %v6381, %v6111
      %v6414 = vsel %vm1970, %v6382, %v6113
      %v6415 = vsel %vm1970, %v6383, %v6115
      %v6416 = vsel %vm1970, %v6384, %v6117
      %v6417 = vsel %vm1970, %v6385, %v6119
      %v6418 = vsel %vm1970, %v6386, %v6121
      %v6419 = vsel %vm1970, %v6387, %v6123
      %v6420 = vsel %vm1970, %v6388, %v6125
      %v6421 = vsel %vm1970, %v6389, %v6127
      %v6422 = vsel %vm1970, %v6390, %v6129
      %v6423 = vsel %vm1970, %v6391, %v6131
      %v6424 = vsel %vm1970, %v6392, %v6133
      %v6425 = vsel %vm1970, %v6393, %v6135
      %v6426 = vsel %vm1970, %v6394, %v6137
      %v6427 = vsel %vm1970, %v6395, %v6139
      %v6428 = vsel %vm2003, %v6396, 0.0
      %v6429 = vsel %vm2003, %v6397, 0.0
      %v6430 = vsel %vm2003, %v6398, 0.0
      %v6431 = vsel %vm2003, %v6399, 0.0
      %v6432 = vsel %vm2003, %v6400, 0.0
      %v6433 = vsel %vm2003, %v6401, 0.0
      %v6434 = vsel %vm2003, %v6402, 0.0
      %v6435 = vsel %vm2003, %v6403, 0.0
      %v6436 = vsel %vm2003, %v6404, 0.0
      %v6437 = vsel %vm2003, %v6405, 0.0
      %v6438 = vsel %vm2003, %v6406, 0.0
      %v6439 = vsel %vm2003, %v6407, 0.0
      %v6440 = vsel %vm2003, %v6408, 0.0
      %v6441 = vsel %vm2003, %v6409, 0.0
      %v6442 = vsel %vm2003, %v6410, 0.0
      %v6443 = vsel %vm2003, %v6411, 0.0
      %v6444 = vsel %vm2003, %v6412, 0.0
      %v6445 = vsel %vm2003, %v6413, 0.0
      %v6446 = vsel %vm2003, %v6414, 0.0
      %v6447 = vsel %vm2003, %v6415, 0.0
      %v6448 = vsel %vm2003, %v6416, 0.0
      %v6449 = vsel %vm2003, %v6417, 0.0
      %v6450 = vsel %vm2003, %v6418, 0.0
      %v6451 = vsel %vm2003, %v6419, 0.0
      %v6452 = vsel %vm2003, %v6420, 0.0
      %v6453 = vsel %vm2003, %v6421, 0.0
      %v6454 = vsel %vm2003, %v6422, 0.0
      %v6455 = vsel %vm2003, %v6423, 0.0
      %v6456 = vsel %vm2003, %v6424, 0.0
      %v6457 = vsel %vm2003, %v6425, 0.0
      %v6458 = vsel %vm2003, %v6426, 0.0
      %v6459 = vsel %vm2003, %v6427, 0.0
      %v6460 = vpack.c.bf16 %v6428, %v6428
      %v6461 = vpack.c.bf16 %v6429, %v6429
      %v6462 = vpack.c.bf16 %v6430, %v6430
      %v6463 = vpack.c.bf16 %v6431, %v6431
      %v6464 = vpack.c.bf16 %v6432, %v6432
      %v6465 = vpack.c.bf16 %v6433, %v6433
      %v6466 = vpack.c.bf16 %v6434, %v6434
      %v6467 = vpack.c.bf16 %v6435, %v6435
      %v6468 = vpack.c.bf16 %v6436, %v6436
      %v6469 = vpack.c.bf16 %v6437, %v6437
      %v6470 = vpack.c.bf16 %v6438, %v6438
      %v6471 = vpack.c.bf16 %v6439, %v6439
      %v6472 = vpack.c.bf16 %v6440, %v6440
      %v6473 = vpack.c.bf16 %v6441, %v6441
      %v6474 = vpack.c.bf16 %v6442, %v6442
      %v6475 = vpack.c.bf16 %v6443, %v6443
      %v6476 = vpack.c.bf16 %v6444, %v6444
      %v6477 = vpack.c.bf16 %v6445, %v6445
      %v6478 = vpack.c.bf16 %v6446, %v6446
      %v6479 = vpack.c.bf16 %v6447, %v6447
      %v6480 = vpack.c.bf16 %v6448, %v6448
      %v6481 = vpack.c.bf16 %v6449, %v6449
      %v6482 = vpack.c.bf16 %v6450, %v6450
      %v6483 = vpack.c.bf16 %v6451, %v6451
      %v6484 = vpack.c.bf16 %v6452, %v6452
      %v6485 = vpack.c.bf16 %v6453, %v6453
      %v6486 = vpack.c.bf16 %v6454, %v6454
      %v6487 = vpack.c.bf16 %v6455, %v6455
      %v6488 = vpack.c.bf16 %v6456, %v6456
      %v6489 = vpack.c.bf16 %v6457, %v6457
      %v6490 = vpack.c.bf16 %v6458, %v6458
      %v6491 = vpack.c.bf16 %v6459, %v6459
      %v6492 = vld [vmem:[%s7] sm:$0xf]
      %v6493 = vld [vmem:[%s7 + $0x4] sm:$0xf]
      %v6494 = vld [vmem:[%s7 + $0x8] sm:$0xf]
      %v6495 = vld [vmem:[%s7 + $0xc] sm:$0xf]
      %v6496 = vld [vmem:[%s7 + $0x10] sm:$0xf]
      %v6497 = vld [vmem:[%s7 + $0x14] sm:$0xf]
      %v6498 = vld [vmem:[%s7 + $0x18] sm:$0xf]
      %v6499 = vld [vmem:[%s7 + $0x1c] sm:$0xf]
      %v6500 = vld [vmem:[%s7 + $0x20] sm:$0xf]
      %v6501 = vld [vmem:[%s7 + $0x24] sm:$0xf]
      %v6502 = vld [vmem:[%s7 + $0x28] sm:$0xf]
      %v6503 = vld [vmem:[%s7 + $0x2c] sm:$0xf]
      %v6504 = vld [vmem:[%s7 + $0x30] sm:$0xf]
      %v6505 = vld [vmem:[%s7 + $0x34] sm:$0xf]
      %v6506 = vld [vmem:[%s7 + $0x38] sm:$0xf]
      %v6507 = vld [vmem:[%s7 + $0x3c] sm:$0xf]
      %v6540 = vunpack.c.l.b16 %v6460
      %v6541 = vunpack.c.l.b16 %v6461
      %v6542 = vunpack.c.l.b16 %v6462
      %v6543 = vunpack.c.l.b16 %v6463
      %v6544 = vunpack.c.l.b16 %v6464
      %v6545 = vunpack.c.l.b16 %v6465
      %v6546 = vunpack.c.l.b16 %v6466
      %v6547 = vunpack.c.l.b16 %v6467
      %v6548 = vunpack.c.l.b16 %v6468
      %v6549 = vunpack.c.l.b16 %v6469
      %v6550 = vunpack.c.l.b16 %v6470
      %v6551 = vunpack.c.l.b16 %v6471
      %v6552 = vunpack.c.l.b16 %v6472
      %v6553 = vunpack.c.l.b16 %v6473
      %v6554 = vunpack.c.l.b16 %v6474
      %v6555 = vunpack.c.l.b16 %v6475
      %v6556 = vunpack.c.l.b16 %v6476
      %v6557 = vunpack.c.l.b16 %v6477
      %v6558 = vunpack.c.l.b16 %v6478
      %v6559 = vunpack.c.l.b16 %v6479
      %v6560 = vunpack.c.l.b16 %v6480
      %v6561 = vunpack.c.l.b16 %v6481
      %v6562 = vunpack.c.l.b16 %v6482
      %v6563 = vunpack.c.l.b16 %v6483
      %v6564 = vunpack.c.l.b16 %v6484
      %v6565 = vunpack.c.l.b16 %v6485
      %v6566 = vunpack.c.l.b16 %v6486
      %v6567 = vunpack.c.l.b16 %v6487
      %v6568 = vunpack.c.l.b16 %v6488
      %v6569 = vunpack.c.l.b16 %v6489
      %v6570 = vunpack.c.l.b16 %v6490
      %v6571 = vunpack.c.l.b16 %v6491
      %v6572 = vpack.c.b16 %v6541, %v6540
      %v6573 = vpack.c.b16 %v6543, %v6542
      %v6574 = vpack.c.b16 %v6545, %v6544
      %v6575 = vpack.c.b16 %v6547, %v6546
      %v6576 = vpack.c.b16 %v6549, %v6548
      %v6577 = vpack.c.b16 %v6551, %v6550
      %v6578 = vpack.c.b16 %v6553, %v6552
      %v6579 = vpack.c.b16 %v6555, %v6554
      %v6580 = vpack.c.b16 %v6557, %v6556
      %v6581 = vpack.c.b16 %v6559, %v6558
      %v6582 = vpack.c.b16 %v6561, %v6560
      %v6583 = vpack.c.b16 %v6563, %v6562
      %v6584 = vpack.c.b16 %v6565, %v6564
      %v6585 = vpack.c.b16 %v6567, %v6566
      %v6586 = vpack.c.b16 %v6569, %v6568
      %v6587 = vpack.c.b16 %v6571, %v6570
      %v6620 = vunpack.c.l.b16 %v6492
      %v6621 = vunpack.c.l.b16 %v6493
      %v6622 = vunpack.c.l.b16 %v6494
      %v6623 = vunpack.c.l.b16 %v6495
      %v6624 = vunpack.c.l.b16 %v6496
      %v6625 = vunpack.c.l.b16 %v6497
      %v6626 = vunpack.c.l.b16 %v6498
      %v6627 = vunpack.c.l.b16 %v6499
      %v6628 = vunpack.c.l.b16 %v6500
      %v6629 = vunpack.c.l.b16 %v6501
      %v6630 = vunpack.c.l.b16 %v6502
      %v6631 = vunpack.c.l.b16 %v6503
      %v6632 = vunpack.c.l.b16 %v6504
      %v6633 = vunpack.c.l.b16 %v6505
      %v6634 = vunpack.c.l.b16 %v6506
      %v6635 = vunpack.c.l.b16 %v6507
      %v6636 = vpack.c.b16 %v6621, %v6620
      %v6637 = vpack.c.b16 %v6623, %v6622
      %v6638 = vpack.c.b16 %v6625, %v6624
      %v6639 = vpack.c.b16 %v6627, %v6626
      %v6640 = vpack.c.b16 %v6629, %v6628
      %v6641 = vpack.c.b16 %v6631, %v6630
      %v6642 = vpack.c.b16 %v6633, %v6632
      %v6643 = vpack.c.b16 %v6635, %v6634
      %6652 = vmatpush.bf16.msra.mxu0 %v6643
      %6653 = vmatpush.bf16.msra.mxu0 %v6642
      %6654 = vmatpush.bf16.msra.mxu0 %v6641
      %6655 = vmatpush.bf16.msra.mxu0 %v6640
      %6656 = vmatpush.bf16.msra.mxu0 %v6639
      %6657 = vmatpush.bf16.msra.mxu0 %v6638
      %6658 = vmatpush.bf16.msra.mxu0 %v6637
      %6659 = vmatpush.bf16.msra.mxu0 %v6636
      %6660 = vmatmul.bf16.gmra.mxu0 %v6572
      %v6661 = vpop.f32.mrf.mxu0
      %v6662 = vadd.f32 0.0, %v6661
      %v6663 = vpop.f32.mrf.mxu0
      %v6664 = vadd.f32 0.0, %v6663
      %6665 = vmatmul.bf16.gmra.mxu0 %v6573
      %v6666 = vpop.f32.mrf.mxu0
      %v6667 = vadd.f32 0.0, %v6666
      %v6668 = vpop.f32.mrf.mxu0
      %v6669 = vadd.f32 0.0, %v6668
      %6670 = vmatmul.bf16.gmra.mxu0 %v6574
      %v6671 = vpop.f32.mrf.mxu0
      %v6672 = vadd.f32 0.0, %v6671
      %v6673 = vpop.f32.mrf.mxu0
      %v6674 = vadd.f32 0.0, %v6673
      %6675 = vmatmul.bf16.gmra.mxu0 %v6575
      %v6676 = vpop.f32.mrf.mxu0
      %v6677 = vadd.f32 0.0, %v6676
      %v6678 = vpop.f32.mrf.mxu0
      %v6679 = vadd.f32 0.0, %v6678
      %6680 = vmatmul.bf16.gmra.mxu0 %v6576
      %v6681 = vpop.f32.mrf.mxu0
      %v6682 = vadd.f32 0.0, %v6681
      %v6683 = vpop.f32.mrf.mxu0
      %v6684 = vadd.f32 0.0, %v6683
      %6685 = vmatmul.bf16.gmra.mxu0 %v6577
      %v6686 = vpop.f32.mrf.mxu0
      %v6687 = vadd.f32 0.0, %v6686
      %v6688 = vpop.f32.mrf.mxu0
      %v6689 = vadd.f32 0.0, %v6688
      %6690 = vmatmul.bf16.gmra.mxu0 %v6578
      %v6691 = vpop.f32.mrf.mxu0
      %v6692 = vadd.f32 0.0, %v6691
      %v6693 = vpop.f32.mrf.mxu0
      %v6694 = vadd.f32 0.0, %v6693
      %6695 = vmatmul.bf16.gmra.mxu0 %v6579
      %v6696 = vpop.f32.mrf.mxu0
      %v6697 = vadd.f32 0.0, %v6696
      %v6698 = vpop.f32.mrf.mxu0
      %v6699 = vadd.f32 0.0, %v6698
      %6700 = vmatmul.bf16.gmra.mxu0 %v6580
      %v6701 = vpop.f32.mrf.mxu0
      %v6702 = vadd.f32 0.0, %v6701
      %v6703 = vpop.f32.mrf.mxu0
      %v6704 = vadd.f32 0.0, %v6703
      %6705 = vmatmul.bf16.gmra.mxu0 %v6581
      %v6706 = vpop.f32.mrf.mxu0
      %v6707 = vadd.f32 0.0, %v6706
      %v6708 = vpop.f32.mrf.mxu0
      %v6709 = vadd.f32 0.0, %v6708
      %6710 = vmatmul.bf16.gmra.mxu0 %v6582
      %v6711 = vpop.f32.mrf.mxu0
      %v6712 = vadd.f32 0.0, %v6711
      %v6713 = vpop.f32.mrf.mxu0
      %v6714 = vadd.f32 0.0, %v6713
      %6715 = vmatmul.bf16.gmra.mxu0 %v6583
      %v6716 = vpop.f32.mrf.mxu0
      %v6717 = vadd.f32 0.0, %v6716
      %v6718 = vpop.f32.mrf.mxu0
      %v6719 = vadd.f32 0.0, %v6718
      %6720 = vmatmul.bf16.gmra.mxu0 %v6584
      %v6721 = vpop.f32.mrf.mxu0
      %v6722 = vadd.f32 0.0, %v6721
      %v6723 = vpop.f32.mrf.mxu0
      %v6724 = vadd.f32 0.0, %v6723
      %6725 = vmatmul.bf16.gmra.mxu0 %v6585
      %v6726 = vpop.f32.mrf.mxu0
      %v6727 = vadd.f32 0.0, %v6726
      %v6728 = vpop.f32.mrf.mxu0
      %v6729 = vadd.f32 0.0, %v6728
      %6730 = vmatmul.bf16.gmra.mxu0 %v6586
      %v6731 = vpop.f32.mrf.mxu0
      %v6732 = vadd.f32 0.0, %v6731
      %v6733 = vpop.f32.mrf.mxu0
      %v6734 = vadd.f32 0.0, %v6733
      %6735 = vmatmul.bf16.gmra.mxu0 %v6587
      %v6736 = vpop.f32.mrf.mxu0
      %v6737 = vadd.f32 0.0, %v6736
      %v6738 = vpop.f32.mrf.mxu0
      %v6739 = vadd.f32 0.0, %v6738
      %6740 = vdwg.mxu0
      %v6741 = vadd.f32 %v2646, %v6662
      %v6742 = vadd.f32 %v2647, %v6664
      %v6743 = vadd.f32 %v2648, %v6667
      %v6744 = vadd.f32 %v2649, %v6669
      %v6745 = vadd.f32 %v2650, %v6672
      %v6746 = vadd.f32 %v2651, %v6674
      %v6747 = vadd.f32 %v2652, %v6677
      %v6748 = vadd.f32 %v2653, %v6679
      %v6749 = vadd.f32 %v2654, %v6682
      %v6750 = vadd.f32 %v2655, %v6684
      %v6751 = vadd.f32 %v2656, %v6687
      %v6752 = vadd.f32 %v2657, %v6689
      %v6753 = vadd.f32 %v2658, %v6692
      %v6754 = vadd.f32 %v2659, %v6694
      %v6755 = vadd.f32 %v2660, %v6697
      %v6756 = vadd.f32 %v2661, %v6699
      %v6757 = vadd.f32 %v2662, %v6702
      %v6758 = vadd.f32 %v2663, %v6704
      %v6759 = vadd.f32 %v2664, %v6707
      %v6760 = vadd.f32 %v2665, %v6709
      %v6761 = vadd.f32 %v2666, %v6712
      %v6762 = vadd.f32 %v2667, %v6714
      %v6763 = vadd.f32 %v2668, %v6717
      %v6764 = vadd.f32 %v2669, %v6719
      %v6765 = vadd.f32 %v2670, %v6722
      %v6766 = vadd.f32 %v2671, %v6724
      %v6767 = vadd.f32 %v2672, %v6727
      %v6768 = vadd.f32 %v2673, %v6729
      %v6769 = vadd.f32 %v2674, %v6732
      %v6770 = vadd.f32 %v2675, %v6734
      %v6771 = vadd.f32 %v2676, %v6737
      %v6772 = vadd.f32 %v2677, %v6739
      %6773 = vst.msk [vmem:[%s305] sm:$0xff] %vm1772, %v6741
      %6774 = vst.msk [vmem:[%s305 + $0x8] sm:$0xff] %vm1772, %v6742
      %6775 = vst.msk [vmem:[%s305 + $0x10] sm:$0xff] %vm1772, %v6743
      %6776 = vst.msk [vmem:[%s305 + $0x18] sm:$0xff] %vm1772, %v6744
      %6777 = vst.msk [vmem:[%s305 + $0x20] sm:$0xff] %vm1772, %v6745
      %6778 = vst.msk [vmem:[%s305 + $0x28] sm:$0xff] %vm1772, %v6746
      %6779 = vst.msk [vmem:[%s305 + $0x30] sm:$0xff] %vm1772, %v6747
      %6780 = vst.msk [vmem:[%s305 + $0x38] sm:$0xff] %vm1772, %v6748
      %6781 = vst.msk [vmem:[%s305 + $0x40] sm:$0xff] %vm1772, %v6749
      %6782 = vst.msk [vmem:[%s305 + $0x48] sm:$0xff] %vm1772, %v6750
      %6783 = vst.msk [vmem:[%s305 + $0x50] sm:$0xff] %vm1772, %v6751
      %6784 = vst.msk [vmem:[%s305 + $0x58] sm:$0xff] %vm1772, %v6752
      %6785 = vst.msk [vmem:[%s305 + $0x60] sm:$0xff] %vm1772, %v6753
      %6786 = vst.msk [vmem:[%s305 + $0x68] sm:$0xff] %vm1772, %v6754
      %6787 = vst.msk [vmem:[%s305 + $0x70] sm:$0xff] %vm1772, %v6755
      %6788 = vst.msk [vmem:[%s305 + $0x78] sm:$0xff] %vm1772, %v6756
      %6789 = vst.msk [vmem:[%s305 + $0x80] sm:$0xff] %vm1772, %v6757
      %6790 = vst.msk [vmem:[%s305 + $0x88] sm:$0xff] %vm1772, %v6758
      %6791 = vst.msk [vmem:[%s305 + $0x90] sm:$0xff] %vm1772, %v6759
      %6792 = vst.msk [vmem:[%s305 + $0x98] sm:$0xff] %vm1772, %v6760
      %6793 = vst.msk [vmem:[%s305 + $0xa0] sm:$0xff] %vm1772, %v6761
      %6794 = vst.msk [vmem:[%s305 + $0xa8] sm:$0xff] %vm1772, %v6762
      %6795 = vst.msk [vmem:[%s305 + $0xb0] sm:$0xff] %vm1772, %v6763
      %6796 = vst.msk [vmem:[%s305 + $0xb8] sm:$0xff] %vm1772, %v6764
      %6797 = vst.msk [vmem:[%s305 + $0xc0] sm:$0xff] %vm1772, %v6765
      %6798 = vst.msk [vmem:[%s305 + $0xc8] sm:$0xff] %vm1772, %v6766
      %6799 = vst.msk [vmem:[%s305 + $0xd0] sm:$0xff] %vm1772, %v6767
      %6800 = vst.msk [vmem:[%s305 + $0xd8] sm:$0xff] %vm1772, %v6768
      %6801 = vst.msk [vmem:[%s305 + $0xe0] sm:$0xff] %vm1772, %v6769
      %6802 = vst.msk [vmem:[%s305 + $0xe8] sm:$0xff] %vm1772, %v6770
      %6803 = vst.msk [vmem:[%s305 + $0xf0] sm:$0xff] %vm1772, %v6771
      %6804 = vst.msk [vmem:[%s305 + $0xf8] sm:$0xff] %vm1772, %v6772
      %p6805 = scmp.lt.s32.totalorder %s19, 1
      %s6806 = scalar_select %p6805, %s19, 1
      %s6807 = smul.addr %s6806, 32
      %s6808 = smul.addr %s6807, 8
      %s6809 = scalar_lea.vmem %s8, %s6808
      // Predicated region
      $region53: #{_lambda_.1} parent=51 // pred_check
        %p6810 = pneg %p210
      $region54: #{_lambda_.1} parent=51 // pred_check_branch
        %6812 = sbr.rel (%p6810) target = $region56
      $region55: #{_lambda_.1} parent=51 // pred_region
        _
      $region56: #{_lambda_.1} parent=51 // pred_fallthru
        _
    $region52: #{_lambda_.1} parent=5 // pred_fallthru
      _
    %p6813 = scmp.le.s32.totalorder 2, %s14
    // Predicated region
    $region57: #{_lambda_.1} parent=5 // pred_check
      %p6814 = pneg %p6813
    $region58: #{_lambda_.1} parent=5 // pred_check_branch
      %6816 = sbr.rel (%p6814) target = $region60
    $region59: #{_lambda_.1} parent=5 // pred_region
      %s6817 = ssub.s32 %s14, 2
      // Predicated region
      $region61: #{_lambda_.1} parent=59 // pred_check
        %p6818 = pneg %p216
      $region62: #{_lambda_.1} parent=59 // pred_check_branch
        %6820 = sbr.rel (%p6818) target = $region64
      $region63: #{_lambda_.1} parent=59 // pred_region
        %p6821 = scmp.lt.s32.totalorder %s20, 1
        %s6822 = scalar_select %p6821, %s20, 1
        %s6823 = smul.addr %s6822, 32
        %s6824 = smul.addr %s6823, 8
        %s6825 = scalar_lea.vmem %s8, %s6824
      $region64: #{_lambda_.1} parent=59 // pred_fallthru
        _
    $region60: #{_lambda_.1} parent=5 // pred_fallthru
      _
  $region6: #{_lambda_.1} parent=0 // loop_footer
    %s18 = sadd.s32 1, %s14
  $region7: #{_lambda_.1} parent=0 // loop_footer_branch
    %13 = sbr.rel target = $region3
  $region8: #{_lambda_.1} parent=0 // loop_exit
    _

</llo_original>
